<compile_context>
chip_gen: v7x
topology: tpu7x:2x2x1
jax: 0.10.0
libtpu: 0.0.40
codegen_flags: <defaults>
</compile_context>

<pallas_src>
import functools

import jax
import jax.numpy as jnp
from jax.experimental import pallas as pl
from jax.experimental.pallas import tpu as pltpu

CONFIG = {
    'epochs': 5, 'batch_size': 32, 'activation': 'Mish', 'filter_per_layer': 64,
    'filter_length': 3, 'padding': 0, 'batch_normalization': 'yes',
    'filter_organisation': 'same', 'dense_size': 1024, 'drop': 0, 'stride': 1,
    'optimizer': 'sgd', 'learning_rate': 0.001,
}

L_TILE = 512      # spatial tile (flat rows) for the conv accumulation
TK_DENSE = 2048   # K tile for the fc1 contraction (bf16 weights -> 4 MB/buffer)


def _round_up(a, m):
    return ((a + m - 1) // m) * m


def _mish(x):
    # mish(x) = x * tanh(softplus(x)) = x * (e2x + 2*ex) / (e2x + 2*ex + 2)
    # -> 1 EUP exp + 1 approx reciprocal instead of exp + log1p + tanh.
    ex = jnp.exp(jnp.minimum(x, 20.0))   # ratio saturates to 1.0 above ~20
    num = ex * ex + 2.0 * ex
    return x * num * pl.reciprocal(num + 2.0, approx=True)


# ----------------------------------------------------------------------------
# Conv + BN(eval) + Mish + MaxPool block kernel (one image per grid step)
# ----------------------------------------------------------------------------
def conv_bn_mish_pool_kernel(x_ref, w_ref, scale_ref, shift_ref, o_ref, y_ref, *,
                             row_stride, ksize, pool_k, l_out, l_tile, n_tiles, cin):
    # TODO(synk): flat-spatial pooling trick assumes pool stride == 1 (config stride=1)
    cout = w_ref.shape[-1]
    scale = scale_ref[...]                 # (1, cout) f32
    shift = shift_ref[...]
    max_off = (ksize - 1) * (row_stride + 1)
    slab = l_tile + max_off
    big_k = (ksize * ksize * cin) >= 128   # im2col worth it (layers 2..5)

    # ---- pass 1: conv + BN + Mish, tiled over conv output rows ----
    @pl.loop(0, n_tiles)
    def _(t):
        r0 = pl.multiple_of(t * l_tile, 16)
        xs = x_ref[pl.ds(r0, slab), :]     # (slab, cin) bf16, aligned slab load
        if big_k:
            cols = []
            for dy in range(ksize):
                for dx in range(ksize):
                    off = dy * row_stride + dx
                    cols.append(xs[off:off + l_tile, :])
            patch = jnp.concatenate(cols, axis=-1)          # (l_tile, k*k*cin)
            acc = jnp.dot(patch, w_ref[...],
                          preferred_element_type=jnp.float32)
        else:
            w_all = w_ref[...]
            acc = jnp.zeros((l_tile, cout), jnp.float32)
            for dy in range(ksize):
                for dx in range(ksize):
                    off = dy * row_stride + dx
                    idx = dy * ksize + dx
                    acc += jnp.dot(xs[off:off + l_tile, :],
                                   w_all[idx * cin:(idx + 1) * cin, :],
                                   preferred_element_type=jnp.float32)
        yv = _mish(acc * scale + shift)                     # f32 epilogue
        y_ref[pl.ds(r0, l_tile), :] = yv.astype(y_ref.dtype)

    # ---- pass 2: separable max-pool (kernel=pool_k, stride=1) ----
    y = y_ref[...]                                          # (l_conv_pad, cout) bf16
    l_rm = l_out + (pool_k - 1) * row_stride
    rm = y[0:l_rm, :]
    for dx in range(1, pool_k):
        rm = jnp.maximum(rm, y[dx:dx + l_rm, :])            # max over dx shifts
    out = rm[0:l_out, :]
    for dy in range(1, pool_k):
        off = dy * row_stride
        out = jnp.maximum(out, rm[off:off + l_out, :])      # max over dy shifts
    o_ref[...] = out.astype(o_ref.dtype)


def conv_block(x_flat, w2d, scale, shift, *, row_stride, h_out, w_out, ksize, pool_k):
    n, l_orig, cin = x_flat.shape
    kkcin, cout = w2d.shape
    l_out = (h_out - 1) * row_stride + w_out
    l_conv = l_out + (pool_k - 1) * (row_stride + 1)
    l_tile = min(L_TILE, _round_up(l_conv, 16))
    l_conv_pad = _round_up(l_conv, l_tile)
    n_tiles = l_conv_pad // l_tile
    l_in_pad = l_conv_pad + (ksize - 1) * (row_stride + 1)
    if l_in_pad > l_orig:
        x_flat = jnp.pad(x_flat, ((0, 0), (0, l_in_pad - l_orig), (0, 0)))

    kern = functools.partial(conv_bn_mish_pool_kernel, row_stride=row_stride,
                             ksize=ksize, pool_k=pool_k, l_out=l_out,
                             l_tile=l_tile, n_tiles=n_tiles, cin=cin)
    return pl.pallas_call(
        kern,
        out_shape=jax.ShapeDtypeStruct((n, l_out, cout), jnp.bfloat16),
        grid_spec=pltpu.PrefetchScalarGridSpec(
            num_scalar_prefetch=0,
            grid=(n,),
            in_specs=[
                pl.BlockSpec((None, l_in_pad, cin), lambda i: (i, 0, 0)),
                pl.BlockSpec((kkcin, cout), lambda i: (0, 0)),
                pl.BlockSpec((1, cout), lambda i: (0, 0)),
                pl.BlockSpec((1, cout), lambda i: (0, 0)),
            ],
            out_specs=pl.BlockSpec((None, l_out, cout), lambda i: (i, 0, 0)),
            scratch_shapes=[pltpu.VMEM((l_conv_pad, cout), jnp.bfloat16)],
        ),
        compiler_params=pltpu.CompilerParams(
            dimension_semantics=("parallel",),
            vmem_limit_bytes=40 << 20,          # leaves headroom on v7x (64 MiB/TC)
        ),
    )(x_flat, w2d, scale, shift)


# ----------------------------------------------------------------------------
# Dense head kernel: fc1 (K-tiled, d split across 2 parallel blocks) + Mish + fc2
# ----------------------------------------------------------------------------
def dense_head_kernel(x_ref, w1_ref, b1_ref, w2_ref, o_ref, acc_ref):
    k = pl.program_id(1)

    @pl.when(k == 0)
    def _():
        acc_ref[...] = jnp.zeros_like(acc_ref)

    acc_ref[...] += jnp.dot(x_ref[...], w1_ref[...],
                            preferred_element_type=jnp.float32)

    @pl.when(k == pl.num_programs(1) - 1)
    def _():
        h = _mish(acc_ref[...] + b1_ref[...])               # f32
        o_ref[...] = jnp.dot(h, w2_ref[...],
                             preferred_element_type=jnp.float32)


def dense_head(x, w1t, b1, w2t, *, tk):
    n, fp = x.shape
    d = w1t.shape[1]
    c = w2t.shape[1]
    dh = d // 2
    nk = fp // tk
    return pl.pallas_call(
        dense_head_kernel,
        out_shape=jax.ShapeDtypeStruct((2, n, c), jnp.float32),
        grid_spec=pltpu.PrefetchScalarGridSpec(
            num_scalar_prefetch=0,
            grid=(2, nk),
            in_specs=[
                pl.BlockSpec((n, tk), lambda p, k: (0, k)),
                pl.BlockSpec((tk, dh), lambda p, k: (k, p)),
                pl.BlockSpec((1, dh), lambda p, k: (0, p)),
                pl.BlockSpec((dh, c), lambda p, k: (p, 0)),
            ],
            out_specs=pl.BlockSpec((None, n, c), lambda p, k: (p, 0, 0)),
            scratch_shapes=[pltpu.VMEM((n, dh), jnp.float32)],
        ),
        compiler_params=pltpu.CompilerParams(
            dimension_semantics=("parallel", "arbitrary"),
            vmem_limit_bytes=40 << 20,
        ),
    )(x, w1t, b1, w2t)


# ----------------------------------------------------------------------------
# Parameter setup (deterministic, matches module __init__ shapes for CONFIG)
# ----------------------------------------------------------------------------
def update_depth(k, org):
    if org == 'double':
        return 2 * k
    elif org == 'half' and k > 1:
        return k // 2
    return k


def init_params(key, config, in_hw):
    k = config['filter_length']
    nf = config['filter_per_layer']
    org = config['filter_organisation']
    eps = 1e-5

    chans = []
    last, cur = 3, nf
    for _ in range(5):
        chans.append((last, cur))
        last = cur
        cur = update_depth(cur, org)

    blocks = []
    h = in_hw
    keys = jax.random.split(key, 5 * 6 + 4)
    ki = 0
    for (cin, cout) in chans:
        fan_in = cin * k * k
        w_oihw = jax.random.normal(keys[ki], (cout, cin, k, k), jnp.float32) / jnp.sqrt(fan_in); ki += 1
        conv_b = 0.05 * jax.random.normal(keys[ki], (cout,), jnp.float32); ki += 1
        gamma = 1.0 + 0.1 * jax.random.normal(keys[ki], (cout,), jnp.float32); ki += 1
        beta = 0.1 * jax.random.normal(keys[ki], (cout,), jnp.float32); ki += 1
        rmean = 0.1 * jax.random.normal(keys[ki], (cout,), jnp.float32); ki += 1
        rvar = 0.5 + 0.5 * jnp.abs(jax.random.normal(keys[ki], (cout,), jnp.float32)); ki += 1
        # fold BN (eval mode) + conv bias into f32 scale/shift
        scale = gamma / jnp.sqrt(rvar + eps)
        shift = beta + (conv_b - rmean) * scale
        # OIHW -> HWIO -> (k*k*cin, cout): matches the (dy, dx, cin) im2col order
        w2d = jnp.transpose(w_oihw, (2, 3, 1, 0)).reshape(k * k * cin, cout)
        blocks.append((w2d.astype(jnp.bfloat16),
                       scale.reshape(1, cout), shift.reshape(1, cout)))
        h = h - k + 1                                    # conv (pad=0, stride=1)
        h = (h - k) // config['stride'] + 1              # maxpool (k, stride)

    c_final = chans[-1][1]
    feat = c_final * h * h
    d = config['dense_size']
    w1 = jax.random.normal(keys[ki], (d, feat), jnp.float32) / jnp.sqrt(feat); ki += 1
    b1 = 0.05 * jax.random.normal(keys[ki], (d,), jnp.float32); ki += 1
    w2 = jax.random.normal(keys[ki], (10, d), jnp.float32) / jnp.sqrt(d); ki += 1
    b2 = 0.05 * jax.random.normal(keys[ki], (10,), jnp.float32); ki += 1

    tk = min(TK_DENSE, _round_up(feat, 128))
    fp = _round_up(feat, tk)
    w1t = jnp.pad(w1.T, ((0, fp - feat), (0, 0))).astype(jnp.bfloat16)  # pad once at init
    return {
        'blocks': blocks,
        'w1t': w1t, 'b1': b1.reshape(1, d),
        'w2t': w2.T, 'b2': b2.reshape(1, 10),
        'tk_dense': tk,
    }


# ----------------------------------------------------------------------------
# Forward pass
# ----------------------------------------------------------------------------
def forward(params, x_nchw, config):
    n = x_nchw.shape[0]
    k = config['filter_length']
    pk = k  # MaxPool2d kernel_size = filter_length

    x = jnp.transpose(x_nchw, (0, 2, 3, 1)).astype(jnp.bfloat16)   # NCHW -> NHWC bf16
    hh, ww = x.shape[1], x.shape[2]
    for (w2d, scale, shift) in params['blocks']:
        hv, wv = hh - k - pk + 2, ww - k - pk + 2
        y = conv_block(x.reshape(n, hh * ww, -1), w2d, scale, shift,
                       row_stride=ww, h_out=hv, w_out=wv, ksize=k, pool_k=pk)
        # repack to dense (H, W): drop wrap columns so waste does not compound
        l_out = y.shape[1]
        y = jnp.pad(y, ((0, 0), (0, hv * ww - l_out), (0, 0)))
        x = y.reshape(n, hv, ww, -1)[:, :, :wv, :]
        hh, ww = hv, wv

    # PyTorch flattens in (C, H, W) order
    feat = jnp.transpose(x, (0, 3, 1, 2)).reshape(n, -1)
    fp = params['w1t'].shape[0]
    feat = jnp.pad(feat, ((0, 0), (0, fp - feat.shape[1])))

    # fc1 + Mish + dropout(p=0 => identity) + fc2 (partials summed over the d-split)
    part = dense_head(feat, params['w1t'], params['b1'], params['w2t'],
                      tk=params['tk_dense'])
    return part.sum(axis=0) + params['b2']


if __name__ == "__main__":
    # Small demo: batch=2, 3x32x32 input (instead of the hardcoded 112x112);
    # fc1 in_features is derived from the actual spatial size.
    N, H = 2, 32
    key = jax.random.PRNGKey(0)
    kx, kp = jax.random.split(key)
    x = jax.random.normal(kx, (N, 3, H, H), jnp.float32)
    params = init_params(kp, CONFIG, H)

    out = forward(params, x, CONFIG)
    out = jax.block_until_ready(out)
    assert out.shape == (N, 10)
    assert bool(jnp.all(jnp.isfinite(out)))
    print("KERNEL_OK")
</pallas_src>

<mosaic_0001>
module attributes {stable_mosaic.version = 11 : i64} {
  func.func @conv_bn_mish_pool_kernel(%arg0: i32, %arg1: memref<1x1090x3xbf16, #tpu.memory_space<vmem>>, %arg2: memref<27x64xbf16, #tpu.memory_space<vmem>>, %arg3: memref<1x64xf32, #tpu.memory_space<vmem>>, %arg4: memref<1x64xf32, #tpu.memory_space<vmem>>, %arg5: memref<1x892x64xbf16, #tpu.memory_space<vmem>>, %arg6: memref<1024x64xbf16, #tpu.memory_space<vmem>>) attributes {dimension_semantics = [#tpu.dimension_semantics<parallel>], iteration_bounds = array<i64: 2>, scalar_prefetch = 0 : i64, scratch_operands = 1 : i64, tpu.core_type = #tpu.core_type<tc>, window_params = [{transform_indices = @transform_0, window_bounds = array<i64: 1, 1090, 3>}, {pipeline_mode = #tpu.pipeline_mode<synchronous>, transform_indices = @transform_1, window_bounds = array<i64: 27, 64>}, {pipeline_mode = #tpu.pipeline_mode<synchronous>, transform_indices = @transform_2, window_bounds = array<i64: 1, 64>}, {pipeline_mode = #tpu.pipeline_mode<synchronous>, transform_indices = @transform_3, window_bounds = array<i64: 1, 64>}, {transform_indices = @transform_4, window_bounds = array<i64: 1, 892, 64>}]} {
    %c0 = arith.constant 0 : index
    %c0_0 = arith.constant 0 : index
    %0 = vector.load %arg3[%c0, %c0_0] : memref<1x64xf32, #tpu.memory_space<vmem>>, vector<1x64xf32>
    %c0_1 = arith.constant 0 : index
    %c0_2 = arith.constant 0 : index
    %1 = vector.load %arg4[%c0_1, %c0_2] : memref<1x64xf32, #tpu.memory_space<vmem>>, vector<1x64xf32>
    %c0_i32 = arith.constant 0 : i32
    %c2_i32 = arith.constant 2 : i32
    %2 = arith.addi %c0_i32, %c2_i32 : i32
    %c1_i32 = arith.constant 1 : i32
    scf.for %arg7 = %c0_i32 to %2 step %c1_i32  : i32 {
      %c1_i32_9 = arith.constant 1 : i32
      %17 = arith.muli %arg7, %c1_i32_9 : i32
      %c0_i32_10 = arith.constant 0 : i32
      %18 = arith.addi %c0_i32_10, %17 : i32
      %c512_i32 = arith.constant 512 : i32
      %19 = arith.muli %18, %c512_i32 : i32
      %20 = tpu.assume_multiple %19, 16 : i32
      %c0_11 = arith.constant 0 : index
      %21 = arith.index_cast %20 : i32 to index
      %c0_12 = arith.constant 0 : index
      %22 = vector.load %arg1[%c0_11, %21, %c0_12] : memref<1x1090x3xbf16, #tpu.memory_space<vmem>>, vector<1x578x3xbf16>
      %23 = vector.shape_cast %22 : vector<1x578x3xbf16> to vector<578x3xbf16>
      %c0_13 = arith.constant 0 : index
      %c0_14 = arith.constant 0 : index
      %24 = vector.load %arg2[%c0_13, %c0_14] : memref<27x64xbf16, #tpu.memory_space<vmem>>, vector<27x64xbf16>
      %cst = arith.constant 0.000000e+00 : f32
      %25 = vector.broadcast %cst : f32 to vector<512x64xf32>
      %26 = vector.extract_strided_slice %23 {offsets = [0, 0], sizes = [512, 3], strides = [1, 1]} : vector<578x3xbf16> to vector<512x3xbf16>
      %27 = vector.extract_strided_slice %24 {offsets = [0, 0], sizes = [3, 64], strides = [1, 1]} : vector<27x64xbf16> to vector<3x64xbf16>
      %cst_15 = arith.constant dense<0.000000e+00> : vector<512x64xf32>
      %28 = tpu.matmul %26, %27, %cst_15 {dimension_numbers = #tpu.dot_dimension_numbers<[1], [0], [0], [1], [0, 0, 1, 1], [], []>} : vector<512x3xbf16>, vector<3x64xbf16>, vector<512x64xf32> -> vector<512x64xf32>
      %29 = arith.addf %25, %28 : vector<512x64xf32>
      %30 = vector.extract_strided_slice %23 {offsets = [1, 0], sizes = [512, 3], strides = [1, 1]} : vector<578x3xbf16> to vector<512x3xbf16>
      %31 = vector.extract_strided_slice %24 {offsets = [3, 0], sizes = [3, 64], strides = [1, 1]} : vector<27x64xbf16> to vector<3x64xbf16>
      %cst_16 = arith.constant dense<0.000000e+00> : vector<512x64xf32>
      %32 = tpu.matmul %30, %31, %cst_16 {dimension_numbers = #tpu.dot_dimension_numbers<[1], [0], [0], [1], [0, 0, 1, 1], [], []>} : vector<512x3xbf16>, vector<3x64xbf16>, vector<512x64xf32> -> vector<512x64xf32>
      %33 = arith.addf %29, %32 : vector<512x64xf32>
      %34 = vector.extract_strided_slice %23 {offsets = [2, 0], sizes = [512, 3], strides = [1, 1]} : vector<578x3xbf16> to vector<512x3xbf16>
      %35 = vector.extract_strided_slice %24 {offsets = [6, 0], sizes = [3, 64], strides = [1, 1]} : vector<27x64xbf16> to vector<3x64xbf16>
      %cst_17 = arith.constant dense<0.000000e+00> : vector<512x64xf32>
      %36 = tpu.matmul %34, %35, %cst_17 {dimension_numbers = #tpu.dot_dimension_numbers<[1], [0], [0], [1], [0, 0, 1, 1], [], []>} : vector<512x3xbf16>, vector<3x64xbf16>, vector<512x64xf32> -> vector<512x64xf32>
      %37 = arith.addf %33, %36 : vector<512x64xf32>
      %38 = vector.extract_strided_slice %23 {offsets = [32, 0], sizes = [512, 3], strides = [1, 1]} : vector<578x3xbf16> to vector<512x3xbf16>
      %39 = vector.extract_strided_slice %24 {offsets = [9, 0], sizes = [3, 64], strides = [1, 1]} : vector<27x64xbf16> to vector<3x64xbf16>
      %cst_18 = arith.constant dense<0.000000e+00> : vector<512x64xf32>
      %40 = tpu.matmul %38, %39, %cst_18 {dimension_numbers = #tpu.dot_dimension_numbers<[1], [0], [0], [1], [0, 0, 1, 1], [], []>} : vector<512x3xbf16>, vector<3x64xbf16>, vector<512x64xf32> -> vector<512x64xf32>
      %41 = arith.addf %37, %40 : vector<512x64xf32>
      %42 = vector.extract_strided_slice %23 {offsets = [33, 0], sizes = [512, 3], strides = [1, 1]} : vector<578x3xbf16> to vector<512x3xbf16>
      %43 = vector.extract_strided_slice %24 {offsets = [12, 0], sizes = [3, 64], strides = [1, 1]} : vector<27x64xbf16> to vector<3x64xbf16>
      %cst_19 = arith.constant dense<0.000000e+00> : vector<512x64xf32>
      %44 = tpu.matmul %42, %43, %cst_19 {dimension_numbers = #tpu.dot_dimension_numbers<[1], [0], [0], [1], [0, 0, 1, 1], [], []>} : vector<512x3xbf16>, vector<3x64xbf16>, vector<512x64xf32> -> vector<512x64xf32>
      %45 = arith.addf %41, %44 : vector<512x64xf32>
      %46 = vector.extract_strided_slice %23 {offsets = [34, 0], sizes = [512, 3], strides = [1, 1]} : vector<578x3xbf16> to vector<512x3xbf16>
      %47 = vector.extract_strided_slice %24 {offsets = [15, 0], sizes = [3, 64], strides = [1, 1]} : vector<27x64xbf16> to vector<3x64xbf16>
      %cst_20 = arith.constant dense<0.000000e+00> : vector<512x64xf32>
      %48 = tpu.matmul %46, %47, %cst_20 {dimension_numbers = #tpu.dot_dimension_numbers<[1], [0], [0], [1], [0, 0, 1, 1], [], []>} : vector<512x3xbf16>, vector<3x64xbf16>, vector<512x64xf32> -> vector<512x64xf32>
      %49 = arith.addf %45, %48 : vector<512x64xf32>
      %50 = vector.extract_strided_slice %23 {offsets = [64, 0], sizes = [512, 3], strides = [1, 1]} : vector<578x3xbf16> to vector<512x3xbf16>
      %51 = vector.extract_strided_slice %24 {offsets = [18, 0], sizes = [3, 64], strides = [1, 1]} : vector<27x64xbf16> to vector<3x64xbf16>
      %cst_21 = arith.constant dense<0.000000e+00> : vector<512x64xf32>
      %52 = tpu.matmul %50, %51, %cst_21 {dimension_numbers = #tpu.dot_dimension_numbers<[1], [0], [0], [1], [0, 0, 1, 1], [], []>} : vector<512x3xbf16>, vector<3x64xbf16>, vector<512x64xf32> -> vector<512x64xf32>
      %53 = arith.addf %49, %52 : vector<512x64xf32>
      %54 = vector.extract_strided_slice %23 {offsets = [65, 0], sizes = [512, 3], strides = [1, 1]} : vector<578x3xbf16> to vector<512x3xbf16>
      %55 = vector.extract_strided_slice %24 {offsets = [21, 0], sizes = [3, 64], strides = [1, 1]} : vector<27x64xbf16> to vector<3x64xbf16>
      %cst_22 = arith.constant dense<0.000000e+00> : vector<512x64xf32>
      %56 = tpu.matmul %54, %55, %cst_22 {dimension_numbers = #tpu.dot_dimension_numbers<[1], [0], [0], [1], [0, 0, 1, 1], [], []>} : vector<512x3xbf16>, vector<3x64xbf16>, vector<512x64xf32> -> vector<512x64xf32>
      %57 = arith.addf %53, %56 : vector<512x64xf32>
      %58 = vector.extract_strided_slice %23 {offsets = [66, 0], sizes = [512, 3], strides = [1, 1]} : vector<578x3xbf16> to vector<512x3xbf16>
      %59 = vector.extract_strided_slice %24 {offsets = [24, 0], sizes = [3, 64], strides = [1, 1]} : vector<27x64xbf16> to vector<3x64xbf16>
      %cst_23 = arith.constant dense<0.000000e+00> : vector<512x64xf32>
      %60 = tpu.matmul %58, %59, %cst_23 {dimension_numbers = #tpu.dot_dimension_numbers<[1], [0], [0], [1], [0, 0, 1, 1], [], []>} : vector<512x3xbf16>, vector<3x64xbf16>, vector<512x64xf32> -> vector<512x64xf32>
      %61 = arith.addf %57, %60 : vector<512x64xf32>
      %62 = vector.broadcast %0 : vector<1x64xf32> to vector<512x64xf32>
      %63 = arith.mulf %61, %62 : vector<512x64xf32>
      %64 = vector.broadcast %1 : vector<1x64xf32> to vector<512x64xf32>
      %65 = arith.addf %63, %64 : vector<512x64xf32>
      %cst_24 = arith.constant 2.000000e+01 : f32
      %66 = vector.broadcast %cst_24 : f32 to vector<512x64xf32>
      %67 = arith.minimumf %65, %66 : vector<512x64xf32>
      %68 = math.exp %67 : vector<512x64xf32>
      %69 = arith.mulf %68, %68 : vector<512x64xf32>
      %cst_25 = arith.constant 2.000000e+00 : f32
      %70 = vector.broadcast %cst_25 : f32 to vector<512x64xf32>
      %71 = arith.mulf %70, %68 : vector<512x64xf32>
      %72 = arith.addf %69, %71 : vector<512x64xf32>
      %73 = arith.mulf %65, %72 : vector<512x64xf32>
      %cst_26 = arith.constant 2.000000e+00 : f32
      %74 = vector.broadcast %cst_26 : f32 to vector<512x64xf32>
      %75 = arith.addf %72, %74 : vector<512x64xf32>
      %76 = tpu.reciprocal %75 {approx = true} : vector<512x64xf32> -> vector<512x64xf32>
      %77 = arith.mulf %73, %76 : vector<512x64xf32>
      %78 = arith.truncf %77 : vector<512x64xf32> to vector<512x64xbf16>
      %79 = arith.index_cast %20 : i32 to index
      %c0_27 = arith.constant 0 : index
      %80 = vector.load %arg6[%79, %c0_27] : memref<1024x64xbf16, #tpu.memory_space<vmem>>, vector<512x64xbf16>
      tpu.vector_store %arg6[%79, %c0_27], %78 {strides = array<i32>} : memref<1024x64xbf16, #tpu.memory_space<vmem>>, vector<512x64xbf16>,
    }
    %c2_i32_3 = arith.constant 2 : i32
    %c0_4 = arith.constant 0 : index
    %c0_5 = arith.constant 0 : index
    %3 = vector.load %arg6[%c0_4, %c0_5] : memref<1024x64xbf16, #tpu.memory_space<vmem>>, vector<1024x64xbf16>
    %4 = vector.extract_strided_slice %3 {offsets = [0, 0], sizes = [956, 64], strides = [1, 1]} : vector<1024x64xbf16> to vector<956x64xbf16>
    %5 = vector.extract_strided_slice %3 {offsets = [1, 0], sizes = [956, 64], strides = [1, 1]} : vector<1024x64xbf16> to vector<956x64xbf16>
    %6 = arith.maximumf %4, %5 : vector<956x64xbf16>
    %7 = vector.extract_strided_slice %3 {offsets = [2, 0], sizes = [956, 64], strides = [1, 1]} : vector<1024x64xbf16> to vector<956x64xbf16>
    %8 = arith.maximumf %6, %7 : vector<956x64xbf16>
    %9 = vector.extract_strided_slice %8 {offsets = [0, 0], sizes = [892, 64], strides = [1, 1]} : vector<956x64xbf16> to vector<892x64xbf16>
    %10 = vector.extract_strided_slice %8 {offsets = [32, 0], sizes = [892, 64], strides = [1, 1]} : vector<956x64xbf16> to vector<892x64xbf16>
    %11 = arith.maximumf %9, %10 : vector<892x64xbf16>
    %12 = vector.extract_strided_slice %8 {offsets = [64, 0], sizes = [892, 64], strides = [1, 1]} : vector<956x64xbf16> to vector<892x64xbf16>
    %13 = arith.maximumf %11, %12 : vector<892x64xbf16>
    %c0_6 = arith.constant 0 : index
    %c0_7 = arith.constant 0 : index
    %c0_8 = arith.constant 0 : index
    %14 = vector.load %arg5[%c0_6, %c0_7, %c0_8] : memref<1x892x64xbf16, #tpu.memory_space<vmem>>, vector<1x892x64xbf16>
    %15 = vector.shape_cast %14 : vector<1x892x64xbf16> to vector<892x64xbf16>
    %16 = vector.shape_cast %13 : vector<892x64xbf16> to vector<1x892x64xbf16>
    tpu.vector_store %arg5[%c0_6, %c0_7, %c0_8], %16 {strides = array<i32>} : memref<1x892x64xbf16, #tpu.memory_space<vmem>>, vector<1x892x64xbf16>,
    return
  }
  func.func @transform_0(%arg0: i32) -> (i32, i32, i32) {
    %c0_i32 = arith.constant 0 : i32
    %c0_i32_0 = arith.constant 0 : i32
    %c0_i32_1 = arith.constant 0 : i32
    return %arg0, %c0_i32, %c0_i32_0 : i32, i32, i32
  }
  func.func @transform_1(%arg0: i32) -> (i32, i32) {
    %c0_i32 = arith.constant 0 : i32
    %c0_i32_0 = arith.constant 0 : i32
    %c0_i32_1 = arith.constant 0 : i32
    return %c0_i32, %c0_i32_0 : i32, i32
  }
  func.func @transform_2(%arg0: i32) -> (i32, i32) {
    %c0_i32 = arith.constant 0 : i32
    %c0_i32_0 = arith.constant 0 : i32
    %c0_i32_1 = arith.constant 0 : i32
    return %c0_i32, %c0_i32_0 : i32, i32
  }
  func.func @transform_3(%arg0: i32) -> (i32, i32) {
    %c0_i32 = arith.constant 0 : i32
    %c0_i32_0 = arith.constant 0 : i32
    %c0_i32_1 = arith.constant 0 : i32
    return %c0_i32, %c0_i32_0 : i32, i32
  }
  func.func @transform_4(%arg0: i32) -> (i32, i32, i32) {
    %c0_i32 = arith.constant 0 : i32
    %c0_i32_0 = arith.constant 0 : i32
    %c0_i32_1 = arith.constant 0 : i32
    return %arg0, %c0_i32, %c0_i32_0 : i32, i32, i32
  }
}

</mosaic_0001>

<llo_original>
// kernel: tpu_custom_call.1
$region0: #{tpu_custom_call.1}
  #allocation0 [shape = 'u32[]', space=smem, size = 0x4, offset = 0x4, fixed_abs, tag = 'smem constant byte address 0x4 - core index']
  #allocation1 [shape = 'u32[144,128]{1,0:T(1,128)}', space=vmem, size = 0x12000, scoped, tag = 'internal scratch']
  #allocation2 [shape = 'bf16[1024,64]{1,0:T(16,128)(2,1)}', space=vmem, size = 0x40000, scoped, tag = 'scratch operand']
  %s0 = inlined_call_operand.vmem [shape: bf16[2,1090,3], index: 0, kind: input, shape index: {}]
  %s1 = inlined_call_operand.vmem [shape: bf16[27,64], index: 1, kind: input, shape index: {}]
  %s2 = inlined_call_operand.vmem [shape: f32[1,64], index: 2, kind: input, shape index: {}]
  %s3 = inlined_call_operand.vmem [shape: f32[1,64], index: 3, kind: input, shape index: {}]
  %s4 = inlined_call_operand.vmem [shape: bf16[2,892,64], index: 4, kind: output, shape index: {}]
  %s5 = sld [smem:[#allocation0]]
  $region56: #{tpu_custom_call.1} parent=0
    _
  %s7 = ssub.s32 1, %s5
  %s8 = scalar_select 0, %s7, %s5
  loop: start=0, step=1, limit=4
  $region2: #{tpu_custom_call.1} parent=0 // loop_pre_header
    _
  $region3: #{tpu_custom_call.1} parent=0 // loop_header
    %s10 = sphi 0, %s14
    %p11 = scmp.ge.s32.totalorder %s10, 4
    %s20 = sphi 0, %s22
    %s23 = sphi 0, %s20
    %s24 = sphi 0, %s23
    %s40 = sphi 0, %s24
    %s44 = sphi 0, %s44
    %s46 = sphi 0, %s44
    %s47 = sphi 0, %s46
    %s61 = sphi 0, %s47
    %s65 = sphi 0, %s65
    %s67 = sphi 0, %s65
    %s68 = sphi 0, %s67
    %s82 = sphi 0, %s68
    %s86 = sphi 0, %s86
    %s88 = sphi 0, %s86
    %s89 = sphi 0, %s88
    %s103 = sphi 0, %s89
    %s109 = sphi 0, %s111
    %s112 = sphi 0, %s109
    %s113 = sphi 0, %s112
    %s129 = sphi 0, %s113
  $region4: #{tpu_custom_call.1} parent=0 // loop_header_branch
    %13 = sbr.rel (%p11) target = $region8
  $region5: #{tpu_custom_call.1} parent=0 // loop_body
    %s15 = ssub.s32 %s10, 1
    %s16 = ssub.s32 %s10, 2
    %s17 = sadd.s32 %s10, 1
    %s18 = ssub.s32 %s10, %s17
    %p19 = scmp.eq.s32.totalorder %s18, 0
    %s21 = sadd.s32 %s20, 1
    %s22 = scalar_select %p19, %s20, %s21
    %p25 = pneg %p19
    %p26 = scmp.eq.s32.totalorder %s10, 1
    %p27 = por %p25, %p26
    %p28 = scmp.ne.s32.totalorder %s20, %s23
    %p29 = scmp.eq.s32.totalorder %s10, 0
    %p30 = por %p28, %p29
    %p31 = scmp.ne.s32.totalorder %s20, %s23
    %p32 = scmp.eq.s32.totalorder %s15, 1
    %p33 = por %p31, %p32
    %p34 = scmp.ne.s32.totalorder %s23, %s24
    %p35 = scmp.eq.s32.totalorder %s15, 0
    %p36 = por %p34, %p35
    %p37 = scmp.ne.s32.totalorder %s23, %s24
    %p38 = scmp.eq.s32.totalorder %s16, 1
    %p39 = por %p37, %p38
    %p41 = scmp.ne.s32.totalorder %s24, %s40
    %p42 = scmp.eq.s32.totalorder %s16, 0
    %p43 = por %p41, %p42
    %s45 = sadd.s32 %s44, 1
    %p48 = scmp.eq.s32.totalorder %s10, 1
    %p49 = scmp.ne.s32.totalorder %s44, %s46
    %p50 = scmp.eq.s32.totalorder %s10, 0
    %p51 = por %p49, %p50
    %p52 = scmp.ne.s32.totalorder %s44, %s46
    %p53 = scmp.eq.s32.totalorder %s15, 1
    %p54 = por %p52, %p53
    %p55 = scmp.ne.s32.totalorder %s46, %s47
    %p56 = scmp.eq.s32.totalorder %s15, 0
    %p57 = por %p55, %p56
    %p58 = scmp.ne.s32.totalorder %s46, %s47
    %p59 = scmp.eq.s32.totalorder %s16, 1
    %p60 = por %p58, %p59
    %p62 = scmp.ne.s32.totalorder %s47, %s61
    %p63 = scmp.eq.s32.totalorder %s16, 0
    %p64 = por %p62, %p63
    %s66 = sadd.s32 %s65, 1
    %p69 = scmp.eq.s32.totalorder %s10, 1
    %p70 = scmp.ne.s32.totalorder %s65, %s67
    %p71 = scmp.eq.s32.totalorder %s10, 0
    %p72 = por %p70, %p71
    %p73 = scmp.ne.s32.totalorder %s65, %s67
    %p74 = scmp.eq.s32.totalorder %s15, 1
    %p75 = por %p73, %p74
    %p76 = scmp.ne.s32.totalorder %s67, %s68
    %p77 = scmp.eq.s32.totalorder %s15, 0
    %p78 = por %p76, %p77
    %p79 = scmp.ne.s32.totalorder %s67, %s68
    %p80 = scmp.eq.s32.totalorder %s16, 1
    %p81 = por %p79, %p80
    %p83 = scmp.ne.s32.totalorder %s68, %s82
    %p84 = scmp.eq.s32.totalorder %s16, 0
    %p85 = por %p83, %p84
    %s87 = sadd.s32 %s86, 1
    %p90 = scmp.eq.s32.totalorder %s10, 1
    %p91 = scmp.ne.s32.totalorder %s86, %s88
    %p92 = scmp.eq.s32.totalorder %s10, 0
    %p93 = por %p91, %p92
    %p94 = scmp.ne.s32.totalorder %s86, %s88
    %p95 = scmp.eq.s32.totalorder %s15, 1
    %p96 = por %p94, %p95
    %p97 = scmp.ne.s32.totalorder %s88, %s89
    %p98 = scmp.eq.s32.totalorder %s15, 0
    %p99 = por %p97, %p98
    %p100 = scmp.ne.s32.totalorder %s88, %s89
    %p101 = scmp.eq.s32.totalorder %s16, 1
    %p102 = por %p100, %p101
    %p104 = scmp.ne.s32.totalorder %s89, %s103
    %p105 = scmp.eq.s32.totalorder %s16, 0
    %p106 = por %p104, %p105
    %s107 = ssub.s32 %s10, %s17
    %p108 = scmp.eq.s32.totalorder %s107, 0
    %s110 = sadd.s32 %s109, 1
    %s111 = scalar_select %p108, %s109, %s110
    %p114 = pneg %p108
    %p115 = scmp.eq.s32.totalorder %s10, 1
    %p116 = por %p114, %p115
    %p117 = scmp.ne.s32.totalorder %s109, %s112
    %p118 = scmp.eq.s32.totalorder %s10, 0
    %p119 = por %p117, %p118
    %p120 = scmp.ne.s32.totalorder %s109, %s112
    %p121 = scmp.eq.s32.totalorder %s15, 1
    %p122 = por %p120, %p121
    %p123 = scmp.ne.s32.totalorder %s112, %s113
    %p124 = scmp.eq.s32.totalorder %s15, 0
    %p125 = por %p123, %p124
    %p126 = scmp.ne.s32.totalorder %s112, %s113
    %p127 = scmp.eq.s32.totalorder %s16, 1
    %p128 = por %p126, %p127
    %p130 = scmp.ne.s32.totalorder %s113, %s129
    %p131 = scmp.eq.s32.totalorder %s16, 0
    %p132 = por %p130, %p131
    %p133 = scmp.le.s32.totalorder 1, %s10
    %p134 = scmp.lt.s32.totalorder %s10, 3
    %p135 = pnand %p133, %p134
    %p136 = pneg %p135
    // Predicated region
    $region9: #{tpu_custom_call.1} parent=5 // pred_check
      _
    $region10: #{tpu_custom_call.1} parent=5 // pred_check_branch
      %138 = sbr.rel (%p135) target = $region12
    $region11: #{tpu_custom_call.1} parent=5 // pred_region
      %s139 = ssub.s32 %s10, 1
      // Predicated region
      $region13: #{tpu_custom_call.1} parent=11 // pred_check
        %p140 = pneg %p57
      $region14: #{tpu_custom_call.1} parent=11 // pred_check_branch
        %142 = sbr.rel (%p140) target = $region16
      $region15: #{tpu_custom_call.1} parent=11 // pred_region
        _
      $region16: #{tpu_custom_call.1} parent=11 // pred_fallthru
        _
      // Predicated region
      $region17: #{tpu_custom_call.1} parent=11 // pred_check
        %p143 = pneg %p78
      $region18: #{tpu_custom_call.1} parent=11 // pred_check_branch
        %145 = sbr.rel (%p143) target = $region20
      $region19: #{tpu_custom_call.1} parent=11 // pred_region
        _
      $region20: #{tpu_custom_call.1} parent=11 // pred_fallthru
        _
      // Predicated region
      $region21: #{tpu_custom_call.1} parent=11 // pred_check
        %p146 = pneg %p99
      $region22: #{tpu_custom_call.1} parent=11 // pred_check_branch
        %148 = sbr.rel (%p146) target = $region24
      $region23: #{tpu_custom_call.1} parent=11 // pred_region
        _
      $region24: #{tpu_custom_call.1} parent=11 // pred_fallthru
        _
    $region12: #{tpu_custom_call.1} parent=5 // pred_fallthru
      _
    %p149 = scmp.lt.s32.totalorder %s10, 2
    // Predicated region
    $region25: #{tpu_custom_call.1} parent=5 // pred_check
      %p150 = pneg %p149
    $region26: #{tpu_custom_call.1} parent=5 // pred_check_branch
      %152 = sbr.rel (%p150) target = $region28
    $region27: #{tpu_custom_call.1} parent=5 // pred_region
      // Predicated region
      $region29: #{tpu_custom_call.1} parent=27 // pred_check
        %p153 = pneg %p30
      $region30: #{tpu_custom_call.1} parent=27 // pred_check_branch
        %155 = sbr.rel (%p153) target = $region32
      $region31: #{tpu_custom_call.1} parent=27 // pred_region
        %p156 = scmp.lt.s32.totalorder %s10, 1
        %s157 = scalar_select %p156, %s10, 1
        %s158 = smul.addr %s157, 137
        %s159 = smul.addr %s158, 4
        %s160 = scalar_lea.vmem %s0, %s159
      $region32: #{tpu_custom_call.1} parent=27 // pred_fallthru
        _
    $region28: #{tpu_custom_call.1} parent=5 // pred_fallthru
      _
    %p161 = scmp.le.s32.totalorder 1, %s10
    %p162 = scmp.lt.s32.totalorder %s10, 3
    %p163 = pnand %p161, %p162
    %p164 = pneg %p163
    // Predicated region
    $region33: #{tpu_custom_call.1} parent=5 // pred_check
      _
    $region34: #{tpu_custom_call.1} parent=5 // pred_check_branch
      %166 = sbr.rel (%p163) target = $region36
    $region35: #{tpu_custom_call.1} parent=5 // pred_region
      %s167 = ssub.s32 %s10, 1
      %p168 = scmp.lt.s32.totalorder %s15, 1
      %s169 = scalar_select %p168, %s15, 1
      %s170 = smul.addr %s169, 137
      %s171 = smul.addr %s170, 4
      %s172 = scalar_lea.vmem %s0, %s171
      %p173 = pneg %p36
      %p174 = pneg %p33
      %p175 = pneg %p57
      %p176 = pneg %p54
      %p177 = pneg %p78
      %p178 = pneg %p75
      %p179 = pneg %p99
      %p180 = pneg %p96
      %p181 = pneg %p125
      %p182 = pneg %p122
      %p183 = scmp.lt.s32.totalorder %s15, 1
      %s184 = scalar_select %p183, %s15, 1
      %s185 = smul.addr %s184, 112
      %s186 = smul.addr %s185, 4
      %s187 = scalar_lea.vmem %s4, %s186
      %p188 = scmp.lt.s32.totalorder %s15, 1
      %s189 = scalar_select %p188, %s15, 1
      %s190 = smul.addr %s189, 137
      %s191 = smul.addr %s190, 4
      %s192 = scalar_lea.vmem %s0, %s191
      %p193 = scmp.lt.s32.totalorder %s15, 1
      %s194 = scalar_select %p193, %s15, 1
      %s195 = smul.addr %s194, 112
      %s196 = smul.addr %s195, 4
      %s197 = scalar_lea.vmem %s4, %s196
      %v199 = vld [vmem:[%s2] sm:$0x1]
      %v200 = vld [vmem:[%s3] sm:$0x1]
      loop: start=0, step=1, limit=2
      $region37: #{tpu_custom_call.1} parent=35 // loop_pre_header
        _
      $region38: #{tpu_custom_call.1} parent=35 // loop_header
        %s202 = sphi 0, %s206
        %p203 = scmp.ge.s32.totalorder %s202, 2
      $region39: #{tpu_custom_call.1} parent=35 // loop_header_branch
        %205 = sbr.rel (%p203) target = $region43
      $region40: #{tpu_custom_call.1} parent=35 // loop_body
        %s207 = smul.u32 %s202, 512
        %s208 = sshra.s32 %s207, 3
        %s209 = sand.u32 %s207, 7
        %s210 = smul.addr %s208, 4
        %s211 = scalar_lea.vmem %s192, %s210
        %v212 = vld [vmem:[%s211] sm:$0xf]
        %v213 = vld [vmem:[%s211 + $0x4] sm:$0xf]
        %v214 = vld [vmem:[%s211 + $0x8] sm:$0xf]
        %v215 = vld [vmem:[%s211 + $0xc] sm:$0xf]
        %v216 = vld [vmem:[%s211 + $0x10] sm:$0xf]
        %v217 = vld [vmem:[%s211 + $0x14] sm:$0xf]
        %v218 = vld [vmem:[%s211 + $0x18] sm:$0xf]
        %v219 = vld [vmem:[%s211 + $0x1c] sm:$0xf]
        %v220 = vld [vmem:[%s211 + $0x20] sm:$0xf]
        %v221 = vld [vmem:[%s211 + $0x24] sm:$0xf]
        %v222 = vld [vmem:[%s211 + $0x28] sm:$0xf]
        %v223 = vld [vmem:[%s211 + $0x2c] sm:$0xf]
        %v224 = vld [vmem:[%s211 + $0x30] sm:$0xf]
        %v225 = vld [vmem:[%s211 + $0x34] sm:$0xf]
        %v226 = vld [vmem:[%s211 + $0x38] sm:$0xf]
        %v227 = vld [vmem:[%s211 + $0x3c] sm:$0xf]
        %v228 = vld [vmem:[%s211 + $0x40] sm:$0xf]
        %v229 = vld [vmem:[%s211 + $0x44] sm:$0xf]
        %v230 = vld [vmem:[%s211 + $0x48] sm:$0xf]
        %v231 = vld [vmem:[%s211 + $0x4c] sm:$0xf]
        %v232 = vld [vmem:[%s211 + $0x50] sm:$0xf]
        %v233 = vld [vmem:[%s211 + $0x54] sm:$0xf]
        %v234 = vld [vmem:[%s211 + $0x58] sm:$0xf]
        %v235 = vld [vmem:[%s211 + $0x5c] sm:$0xf]
        %v236 = vld [vmem:[%s211 + $0x60] sm:$0xf]
        %v237 = vld [vmem:[%s211 + $0x64] sm:$0xf]
        %v238 = vld [vmem:[%s211 + $0x68] sm:$0xf]
        %v239 = vld [vmem:[%s211 + $0x6c] sm:$0xf]
        %v240 = vld [vmem:[%s211 + $0x70] sm:$0xf]
        %v241 = vld [vmem:[%s211 + $0x74] sm:$0xf]
        %v242 = vld [vmem:[%s211 + $0x78] sm:$0xf]
        %v243 = vld [vmem:[%s211 + $0x7c] sm:$0xf]
        %v244 = vld [vmem:[%s211 + $0x80] sm:$0xf]
        %v245 = vld [vmem:[%s211 + $0x84] sm:$0xf]
        %v246 = vld [vmem:[%s211 + $0x88] sm:$0xf]
        %v247 = vld [vmem:[%s211 + $0x8c] sm:$0xf]
        %v248 = vld [vmem:[%s211 + $0x90] sm:$0xf]
        %v249 = vld [vmem:[%s211 + $0x94] sm:$0xf]
        %v250 = vld [vmem:[%s211 + $0x98] sm:$0xf]
        %v251 = vld [vmem:[%s211 + $0x9c] sm:$0xf]
        %v252 = vld [vmem:[%s211 + $0xa0] sm:$0xf]
        %v253 = vld [vmem:[%s211 + $0xa4] sm:$0xf]
        %v254 = vld [vmem:[%s211 + $0xa8] sm:$0xf]
        %v255 = vld [vmem:[%s211 + $0xac] sm:$0xf]
        %v256 = vld [vmem:[%s211 + $0xb0] sm:$0xf]
        %v257 = vld [vmem:[%s211 + $0xb4] sm:$0xf]
        %v258 = vld [vmem:[%s211 + $0xb8] sm:$0xf]
        %v259 = vld [vmem:[%s211 + $0xbc] sm:$0xf]
        %v260 = vld [vmem:[%s211 + $0xc0] sm:$0xf]
        %v261 = vld [vmem:[%s211 + $0xc4] sm:$0xf]
        %v262 = vld [vmem:[%s211 + $0xc8] sm:$0xf]
        %v263 = vld [vmem:[%s211 + $0xcc] sm:$0xf]
        %v264 = vld [vmem:[%s211 + $0xd0] sm:$0xf]
        %v265 = vld [vmem:[%s211 + $0xd4] sm:$0xf]
        %v266 = vld [vmem:[%s211 + $0xd8] sm:$0xf]
        %v267 = vld [vmem:[%s211 + $0xdc] sm:$0xf]
        %v268 = vld [vmem:[%s211 + $0xe0] sm:$0xf]
        %v269 = vld [vmem:[%s211 + $0xe4] sm:$0xf]
        %v270 = vld [vmem:[%s211 + $0xe8] sm:$0xf]
        %v271 = vld [vmem:[%s211 + $0xec] sm:$0xf]
        %v272 = vld [vmem:[%s211 + $0xf0] sm:$0xf]
        %v273 = vld [vmem:[%s211 + $0xf4] sm:$0xf]
        %v274 = vld [vmem:[%s211 + $0xf8] sm:$0xf]
        %v275 = vld [vmem:[%s211 + $0xfc] sm:$0xf]
        %v276 = vld [vmem:[%s211 + $0x100] sm:$0xf]
        %v277 = vld [vmem:[%s211 + $0x104] sm:$0xf]
        %v278 = vld [vmem:[%s211 + $0x108] sm:$0xf]
        %v279 = vld [vmem:[%s211 + $0x10c] sm:$0xf]
        %v280 = vld [vmem:[%s211 + $0x110] sm:$0xf]
        %v281 = vld [vmem:[%s211 + $0x114] sm:$0xf]
        %v282 = vld [vmem:[%s211 + $0x118] sm:$0xf]
        %v283 = vld [vmem:[%s211 + $0x11c] sm:$0xf]
        %v284 = vld [vmem:[%s211 + $0x120] sm:$0x1]
        %v285 = vld [vmem:[%s1] sm:$0xf]
        %v286 = vld [vmem:[%s1 + $0x4] sm:$0xf]
        %v287 = vld [vmem:[%s1 + $0x8] sm:$0xf]
        %v288 = vld [vmem:[%s1 + $0xc] sm:$0x3]
        %v354 = vunpack.c.l.b16 %v212
        %v355 = vunpack.c.l.b16 %v213
        %v356 = vunpack.c.l.b16 %v214
        %v357 = vunpack.c.l.b16 %v215
        %v358 = vunpack.c.l.b16 %v216
        %v359 = vunpack.c.l.b16 %v217
        %v360 = vunpack.c.l.b16 %v218
        %v361 = vunpack.c.l.b16 %v219
        %v362 = vunpack.c.l.b16 %v220
        %v363 = vunpack.c.l.b16 %v221
        %v364 = vunpack.c.l.b16 %v222
        %v365 = vunpack.c.l.b16 %v223
        %v366 = vunpack.c.l.b16 %v224
        %v367 = vunpack.c.l.b16 %v225
        %v368 = vunpack.c.l.b16 %v226
        %v369 = vunpack.c.l.b16 %v227
        %v370 = vunpack.c.l.b16 %v228
        %v371 = vunpack.c.l.b16 %v229
        %v372 = vunpack.c.l.b16 %v230
        %v373 = vunpack.c.l.b16 %v231
        %v374 = vunpack.c.l.b16 %v232
        %v375 = vunpack.c.l.b16 %v233
        %v376 = vunpack.c.l.b16 %v234
        %v377 = vunpack.c.l.b16 %v235
        %v378 = vunpack.c.l.b16 %v236
        %v379 = vunpack.c.l.b16 %v237
        %v380 = vunpack.c.l.b16 %v238
        %v381 = vunpack.c.l.b16 %v239
        %v382 = vunpack.c.l.b16 %v240
        %v383 = vunpack.c.l.b16 %v241
        %v384 = vunpack.c.l.b16 %v242
        %v385 = vunpack.c.l.b16 %v243
        %v386 = vunpack.c.l.b16 %v244
        %v387 = vunpack.c.l.b16 %v245
        %v388 = vunpack.c.l.b16 %v246
        %v389 = vunpack.c.l.b16 %v247
        %v390 = vunpack.c.l.b16 %v248
        %v391 = vunpack.c.l.b16 %v249
        %v392 = vunpack.c.l.b16 %v250
        %v393 = vunpack.c.l.b16 %v251
        %v394 = vunpack.c.l.b16 %v252
        %v395 = vunpack.c.l.b16 %v253
        %v396 = vunpack.c.l.b16 %v254
        %v397 = vunpack.c.l.b16 %v255
        %v398 = vunpack.c.l.b16 %v256
        %v399 = vunpack.c.l.b16 %v257
        %v400 = vunpack.c.l.b16 %v258
        %v401 = vunpack.c.l.b16 %v259
        %v402 = vunpack.c.l.b16 %v260
        %v403 = vunpack.c.l.b16 %v261
        %v404 = vunpack.c.l.b16 %v262
        %v405 = vunpack.c.l.b16 %v263
        %v406 = vunpack.c.l.b16 %v264
        %v407 = vunpack.c.l.b16 %v265
        %v408 = vunpack.c.l.b16 %v266
        %v409 = vunpack.c.l.b16 %v267
        %v410 = vunpack.c.l.b16 %v268
        %v411 = vunpack.c.l.b16 %v269
        %v412 = vunpack.c.l.b16 %v270
        %v413 = vunpack.c.l.b16 %v271
        %v414 = vunpack.c.l.b16 %v272
        %v415 = vunpack.c.l.b16 %v273
        %v416 = vunpack.c.l.b16 %v274
        %v417 = vunpack.c.l.b16 %v275
        %v418 = vunpack.c.l.b16 %v276
        %v419 = vpack.c.b16 %v355, %v354
        %v420 = vpack.c.b16 %v357, %v356
        %v421 = vpack.c.b16 %v359, %v358
        %v422 = vpack.c.b16 %v361, %v360
        %v423 = vpack.c.b16 %v363, %v362
        %v424 = vpack.c.b16 %v365, %v364
        %v425 = vpack.c.b16 %v367, %v366
        %v426 = vpack.c.b16 %v369, %v368
        %v427 = vpack.c.b16 %v371, %v370
        %v428 = vpack.c.b16 %v373, %v372
        %v429 = vpack.c.b16 %v375, %v374
        %v430 = vpack.c.b16 %v377, %v376
        %v431 = vpack.c.b16 %v379, %v378
        %v432 = vpack.c.b16 %v381, %v380
        %v433 = vpack.c.b16 %v383, %v382
        %v434 = vpack.c.b16 %v385, %v384
        %v435 = vpack.c.b16 %v387, %v386
        %v436 = vpack.c.b16 %v389, %v388
        %v437 = vpack.c.b16 %v391, %v390
        %v438 = vpack.c.b16 %v393, %v392
        %v439 = vpack.c.b16 %v395, %v394
        %v440 = vpack.c.b16 %v397, %v396
        %v441 = vpack.c.b16 %v399, %v398
        %v442 = vpack.c.b16 %v401, %v400
        %v443 = vpack.c.b16 %v403, %v402
        %v444 = vpack.c.b16 %v405, %v404
        %v445 = vpack.c.b16 %v407, %v406
        %v446 = vpack.c.b16 %v409, %v408
        %v447 = vpack.c.b16 %v411, %v410
        %v448 = vpack.c.b16 %v413, %v412
        %v449 = vpack.c.b16 %v415, %v414
        %v450 = vpack.c.b16 %v417, %v416
        %v451 = vpack.c.b16 %v418, %v418
        %vm452 = vsmask.f32 7424
        %v454 = vshrl.u32 %v419, 16
        %v456 = vshll.u32 %v419, 16
        %v458 = vrot.slane %v456, 1
        %v459 = vor.u32 %v454, %v458
        %v461 = vshll.u32 %v420, 16
        %v463 = vrot.slane %v461, 1
        %v464 = vsel %vm452, %v459, %v463
        %v465 = vshrl.u32 %v420, 16
        %v467 = vor.u32 %v465, %v463
        %v469 = vshll.u32 %v421, 16
        %v471 = vrot.slane %v469, 1
        %v472 = vsel %vm452, %v467, %v471
        %v473 = vshrl.u32 %v421, 16
        %v475 = vor.u32 %v473, %v471
        %v477 = vshll.u32 %v422, 16
        %v479 = vrot.slane %v477, 1
        %v480 = vsel %vm452, %v475, %v479
        %v481 = vshrl.u32 %v422, 16
        %v483 = vor.u32 %v481, %v479
        %v485 = vshll.u32 %v423, 16
        %v487 = vrot.slane %v485, 1
        %v488 = vsel %vm452, %v483, %v487
        %v489 = vshrl.u32 %v423, 16
        %v491 = vor.u32 %v489, %v487
        %v493 = vshll.u32 %v424, 16
        %v495 = vrot.slane %v493, 1
        %v496 = vsel %vm452, %v491, %v495
        %v497 = vshrl.u32 %v424, 16
        %v499 = vor.u32 %v497, %v495
        %v501 = vshll.u32 %v425, 16
        %v503 = vrot.slane %v501, 1
        %v504 = vsel %vm452, %v499, %v503
        %v505 = vshrl.u32 %v425, 16
        %v507 = vor.u32 %v505, %v503
        %v509 = vshll.u32 %v426, 16
        %v511 = vrot.slane %v509, 1
        %v512 = vsel %vm452, %v507, %v511
        %v513 = vshrl.u32 %v426, 16
        %v515 = vor.u32 %v513, %v511
        %v517 = vshll.u32 %v427, 16
        %v519 = vrot.slane %v517, 1
        %v520 = vsel %vm452, %v515, %v519
        %v521 = vshrl.u32 %v427, 16
        %v523 = vor.u32 %v521, %v519
        %v525 = vshll.u32 %v428, 16
        %v527 = vrot.slane %v525, 1
        %v528 = vsel %vm452, %v523, %v527
        %v529 = vshrl.u32 %v428, 16
        %v531 = vor.u32 %v529, %v527
        %v533 = vshll.u32 %v429, 16
        %v535 = vrot.slane %v533, 1
        %v536 = vsel %vm452, %v531, %v535
        %v537 = vshrl.u32 %v429, 16
        %v539 = vor.u32 %v537, %v535
        %v541 = vshll.u32 %v430, 16
        %v543 = vrot.slane %v541, 1
        %v544 = vsel %vm452, %v539, %v543
        %v545 = vshrl.u32 %v430, 16
        %v547 = vor.u32 %v545, %v543
        %v549 = vshll.u32 %v431, 16
        %v551 = vrot.slane %v549, 1
        %v552 = vsel %vm452, %v547, %v551
        %v553 = vshrl.u32 %v431, 16
        %v555 = vor.u32 %v553, %v551
        %v557 = vshll.u32 %v432, 16
        %v559 = vrot.slane %v557, 1
        %v560 = vsel %vm452, %v555, %v559
        %v561 = vshrl.u32 %v432, 16
        %v563 = vor.u32 %v561, %v559
        %v565 = vshll.u32 %v433, 16
        %v567 = vrot.slane %v565, 1
        %v568 = vsel %vm452, %v563, %v567
        %v569 = vshrl.u32 %v433, 16
        %v571 = vor.u32 %v569, %v567
        %v573 = vshll.u32 %v434, 16
        %v575 = vrot.slane %v573, 1
        %v576 = vsel %vm452, %v571, %v575
        %v577 = vshrl.u32 %v434, 16
        %v579 = vor.u32 %v577, %v575
        %v581 = vshll.u32 %v435, 16
        %v583 = vrot.slane %v581, 1
        %v584 = vsel %vm452, %v579, %v583
        %v585 = vshrl.u32 %v435, 16
        %v587 = vor.u32 %v585, %v583
        %v589 = vshll.u32 %v436, 16
        %v591 = vrot.slane %v589, 1
        %v592 = vsel %vm452, %v587, %v591
        %v593 = vshrl.u32 %v436, 16
        %v595 = vor.u32 %v593, %v591
        %v597 = vshll.u32 %v437, 16
        %v599 = vrot.slane %v597, 1
        %v600 = vsel %vm452, %v595, %v599
        %v601 = vshrl.u32 %v437, 16
        %v603 = vor.u32 %v601, %v599
        %v605 = vshll.u32 %v438, 16
        %v607 = vrot.slane %v605, 1
        %v608 = vsel %vm452, %v603, %v607
        %v609 = vshrl.u32 %v438, 16
        %v611 = vor.u32 %v609, %v607
        %v613 = vshll.u32 %v439, 16
        %v615 = vrot.slane %v613, 1
        %v616 = vsel %vm452, %v611, %v615
        %v617 = vshrl.u32 %v439, 16
        %v619 = vor.u32 %v617, %v615
        %v621 = vshll.u32 %v440, 16
        %v623 = vrot.slane %v621, 1
        %v624 = vsel %vm452, %v619, %v623
        %v625 = vshrl.u32 %v440, 16
        %v627 = vor.u32 %v625, %v623
        %v629 = vshll.u32 %v441, 16
        %v631 = vrot.slane %v629, 1
        %v632 = vsel %vm452, %v627, %v631
        %v633 = vshrl.u32 %v441, 16
        %v635 = vor.u32 %v633, %v631
        %v637 = vshll.u32 %v442, 16
        %v639 = vrot.slane %v637, 1
        %v640 = vsel %vm452, %v635, %v639
        %v641 = vshrl.u32 %v442, 16
        %v643 = vor.u32 %v641, %v639
        %v645 = vshll.u32 %v443, 16
        %v647 = vrot.slane %v645, 1
        %v648 = vsel %vm452, %v643, %v647
        %v649 = vshrl.u32 %v443, 16
        %v651 = vor.u32 %v649, %v647
        %v653 = vshll.u32 %v444, 16
        %v655 = vrot.slane %v653, 1
        %v656 = vsel %vm452, %v651, %v655
        %v657 = vshrl.u32 %v444, 16
        %v659 = vor.u32 %v657, %v655
        %v661 = vshll.u32 %v445, 16
        %v663 = vrot.slane %v661, 1
        %v664 = vsel %vm452, %v659, %v663
        %v665 = vshrl.u32 %v445, 16
        %v667 = vor.u32 %v665, %v663
        %v669 = vshll.u32 %v446, 16
        %v671 = vrot.slane %v669, 1
        %v672 = vsel %vm452, %v667, %v671
        %v673 = vshrl.u32 %v446, 16
        %v675 = vor.u32 %v673, %v671
        %v677 = vshll.u32 %v447, 16
        %v679 = vrot.slane %v677, 1
        %v680 = vsel %vm452, %v675, %v679
        %v681 = vshrl.u32 %v447, 16
        %v683 = vor.u32 %v681, %v679
        %v685 = vshll.u32 %v448, 16
        %v687 = vrot.slane %v685, 1
        %v688 = vsel %vm452, %v683, %v687
        %v689 = vshrl.u32 %v448, 16
        %v691 = vor.u32 %v689, %v687
        %v693 = vshll.u32 %v449, 16
        %v695 = vrot.slane %v693, 1
        %v696 = vsel %vm452, %v691, %v695
        %v697 = vshrl.u32 %v449, 16
        %v699 = vor.u32 %v697, %v695
        %v701 = vshll.u32 %v450, 16
        %v703 = vrot.slane %v701, 1
        %v704 = vsel %vm452, %v699, %v703
        %v705 = vshrl.u32 %v450, 16
        %v707 = vor.u32 %v705, %v703
        %v709 = vshll.u32 %v451, 16
        %v711 = vrot.slane %v709, 1
        %v712 = vsel %vm452, %v707, %v711
        %v714 = vunpack.c.l.b16 %v285
        %v715 = vpack.c.b16 %v714, %v714
        %v717 = vshrl.u32 %v715, 16
        %v719 = vrot.slane %v717, 1
        %v720 = vshll.u32 %v715, 16
        %v722 = vrot.slane %v720, 2
        %v723 = vor.u32 %v719, %v722
        %vm724 = vcmask 23552
        %v726 = vsel %vm724, %v464, 0
        %v729 = vsel %vm724, %v472, 0
        %v732 = vsel %vm724, %v480, 0
        %v735 = vsel %vm724, %v488, 0
        %v738 = vsel %vm724, %v496, 0
        %v741 = vsel %vm724, %v504, 0
        %v744 = vsel %vm724, %v512, 0
        %v747 = vsel %vm724, %v520, 0
        %v750 = vsel %vm724, %v528, 0
        %v753 = vsel %vm724, %v536, 0
        %v756 = vsel %vm724, %v544, 0
        %v759 = vsel %vm724, %v552, 0
        %v762 = vsel %vm724, %v560, 0
        %v765 = vsel %vm724, %v568, 0
        %v768 = vsel %vm724, %v576, 0
        %v771 = vsel %vm724, %v584, 0
        %v774 = vsel %vm724, %v592, 0
        %v777 = vsel %vm724, %v600, 0
        %v780 = vsel %vm724, %v608, 0
        %v783 = vsel %vm724, %v616, 0
        %v786 = vsel %vm724, %v624, 0
        %v789 = vsel %vm724, %v632, 0
        %v792 = vsel %vm724, %v640, 0
        %v795 = vsel %vm724, %v648, 0
        %v798 = vsel %vm724, %v656, 0
        %v801 = vsel %vm724, %v664, 0
        %v804 = vsel %vm724, %v672, 0
        %v807 = vsel %vm724, %v680, 0
        %v810 = vsel %vm724, %v688, 0
        %v813 = vsel %vm724, %v696, 0
        %v816 = vsel %vm724, %v704, 0
        %v819 = vsel %vm724, %v712, 0
        %vm821 = vcmask 1040384
        %vm822 = vcmask 1041408
        %v823 = vsel %vm821, 4294967295, 65535
        %v824 = vsel %vm822, %v823, 0
        %v826 = vand.u32 %v723, %v824
        %828 = vmatprep.subr.bf16.mxu0 0
        %829 = vmatpush1.bf16.msra.mxu0 %v826
        %830 = vmatprep.subr.bf16.mxu0 0
        %831 = vmatpush1.bf16.msra.mxu0 0
        %832 = vmatprep.subr.bf16.mxu0 0
        %833 = vmatpush1.bf16.msra.mxu0 0
        %834 = vmatprep.subr.bf16.mxu0 0
        %835 = vmatpush1.bf16.msra.mxu0 0
        %836 = vmatprep.subr.bf16.mxu0 0
        %837 = vmatpush1.bf16.msra.mxu0 0
        %838 = vmatprep.subr.bf16.mxu0 0
        %839 = vmatpush1.bf16.msra.mxu0 0
        %840 = vmatprep.subr.bf16.mxu0 0
        %841 = vmatpush1.bf16.msra.mxu0 0
        %842 = vmatprep.subr.bf16.mxu0 0
        %843 = vmatpush1.bf16.msra.mxu0 0
        %844 = vmatprep.subr.bf16.mxu0 0
        %845 = vmatpush1.bf16.msra.mxu0 0
        %846 = vmatprep.subr.bf16.mxu0 0
        %847 = vmatpush1.bf16.msra.mxu0 0
        %848 = vmatprep.subr.bf16.mxu0 0
        %849 = vmatpush1.bf16.msra.mxu0 0
        %850 = vmatprep.subr.bf16.mxu0 0
        %851 = vmatpush1.bf16.msra.mxu0 0
        %852 = vmatprep.subr.bf16.mxu0 0
        %853 = vmatpush1.bf16.msra.mxu0 0
        %854 = vmatprep.subr.bf16.mxu0 0
        %855 = vmatpush1.bf16.msra.mxu0 0
        %856 = vmatprep.subr.bf16.mxu0 0
        %857 = vmatpush1.bf16.msra.mxu0 0
        %858 = vmatprep.subr.bf16.mxu0 0
        %859 = vmatpush1.bf16.msra.mxu0 0
        %860 = vmatprep.mubr.bf16.mxu0 0
        %861 = vmatmul.mubr.bf16.gmra.mrb[0].mxu0 %v726
        %v862 = vpop.f32.mrb[0].mxu0
        %v863 = vadd.f32 0.0, %v862
        %v864 = vpop.f32.mrb[0].mxu0
        %v865 = vpop.f32.mrb[0].mxu0
        %v866 = vadd.f32 0.0, %v865
        %v867 = vpop.f32.mrb[0].mxu0
        %868 = vmatprep.mubr.bf16.mxu0 0
        %869 = vmatmul.mubr.bf16.gmra.mrb[0].mxu0 %v729
        %v870 = vpop.f32.mrb[0].mxu0
        %v871 = vadd.f32 0.0, %v870
        %v872 = vpop.f32.mrb[0].mxu0
        %v873 = vpop.f32.mrb[0].mxu0
        %v874 = vadd.f32 0.0, %v873
        %v875 = vpop.f32.mrb[0].mxu0
        %876 = vmatprep.mubr.bf16.mxu0 0
        %877 = vmatmul.mubr.bf16.gmra.mrb[0].mxu0 %v732
        %v878 = vpop.f32.mrb[0].mxu0
        %v879 = vadd.f32 0.0, %v878
        %v880 = vpop.f32.mrb[0].mxu0
        %v881 = vpop.f32.mrb[0].mxu0
        %v882 = vadd.f32 0.0, %v881
        %v883 = vpop.f32.mrb[0].mxu0
        %884 = vmatprep.mubr.bf16.mxu0 0
        %885 = vmatmul.mubr.bf16.gmra.mrb[0].mxu0 %v735
        %v886 = vpop.f32.mrb[0].mxu0
        %v887 = vadd.f32 0.0, %v886
        %v888 = vpop.f32.mrb[0].mxu0
        %v889 = vpop.f32.mrb[0].mxu0
        %v890 = vadd.f32 0.0, %v889
        %v891 = vpop.f32.mrb[0].mxu0
        %892 = vmatprep.mubr.bf16.mxu0 0
        %893 = vmatmul.mubr.bf16.gmra.mrb[0].mxu0 %v738
        %v894 = vpop.f32.mrb[0].mxu0
        %v895 = vadd.f32 0.0, %v894
        %v896 = vpop.f32.mrb[0].mxu0
        %v897 = vpop.f32.mrb[0].mxu0
        %v898 = vadd.f32 0.0, %v897
        %v899 = vpop.f32.mrb[0].mxu0
        %900 = vmatprep.mubr.bf16.mxu0 0
        %901 = vmatmul.mubr.bf16.gmra.mrb[0].mxu0 %v741
        %v902 = vpop.f32.mrb[0].mxu0
        %v903 = vadd.f32 0.0, %v902
        %v904 = vpop.f32.mrb[0].mxu0
        %v905 = vpop.f32.mrb[0].mxu0
        %v906 = vadd.f32 0.0, %v905
        %v907 = vpop.f32.mrb[0].mxu0
        %908 = vmatprep.mubr.bf16.mxu0 0
        %909 = vmatmul.mubr.bf16.gmra.mrb[0].mxu0 %v744
        %v910 = vpop.f32.mrb[0].mxu0
        %v911 = vadd.f32 0.0, %v910
        %v912 = vpop.f32.mrb[0].mxu0
        %v913 = vpop.f32.mrb[0].mxu0
        %v914 = vadd.f32 0.0, %v913
        %v915 = vpop.f32.mrb[0].mxu0
        %916 = vmatprep.mubr.bf16.mxu0 0
        %917 = vmatmul.mubr.bf16.gmra.mrb[0].mxu0 %v747
        %v918 = vpop.f32.mrb[0].mxu0
        %v919 = vadd.f32 0.0, %v918
        %v920 = vpop.f32.mrb[0].mxu0
        %v921 = vpop.f32.mrb[0].mxu0
        %v922 = vadd.f32 0.0, %v921
        %v923 = vpop.f32.mrb[0].mxu0
        %924 = vmatprep.mubr.bf16.mxu0 0
        %925 = vmatmul.mubr.bf16.gmra.mrb[0].mxu0 %v750
        %v926 = vpop.f32.mrb[0].mxu0
        %v927 = vadd.f32 0.0, %v926
        %v928 = vpop.f32.mrb[0].mxu0
        %v929 = vpop.f32.mrb[0].mxu0
        %v930 = vadd.f32 0.0, %v929
        %v931 = vpop.f32.mrb[0].mxu0
        %932 = vmatprep.mubr.bf16.mxu0 0
        %933 = vmatmul.mubr.bf16.gmra.mrb[0].mxu0 %v753
        %v934 = vpop.f32.mrb[0].mxu0
        %v935 = vadd.f32 0.0, %v934
        %v936 = vpop.f32.mrb[0].mxu0
        %v937 = vpop.f32.mrb[0].mxu0
        %v938 = vadd.f32 0.0, %v937
        %v939 = vpop.f32.mrb[0].mxu0
        %940 = vmatprep.mubr.bf16.mxu0 0
        %941 = vmatmul.mubr.bf16.gmra.mrb[0].mxu0 %v756
        %v942 = vpop.f32.mrb[0].mxu0
        %v943 = vadd.f32 0.0, %v942
        %v944 = vpop.f32.mrb[0].mxu0
        %v945 = vpop.f32.mrb[0].mxu0
        %v946 = vadd.f32 0.0, %v945
        %v947 = vpop.f32.mrb[0].mxu0
        %948 = vmatprep.mubr.bf16.mxu0 0
        %949 = vmatmul.mubr.bf16.gmra.mrb[0].mxu0 %v759
        %v950 = vpop.f32.mrb[0].mxu0
        %v951 = vadd.f32 0.0, %v950
        %v952 = vpop.f32.mrb[0].mxu0
        %v953 = vpop.f32.mrb[0].mxu0
        %v954 = vadd.f32 0.0, %v953
        %v955 = vpop.f32.mrb[0].mxu0
        %956 = vmatprep.mubr.bf16.mxu0 0
        %957 = vmatmul.mubr.bf16.gmra.mrb[0].mxu0 %v762
        %v958 = vpop.f32.mrb[0].mxu0
        %v959 = vadd.f32 0.0, %v958
        %v960 = vpop.f32.mrb[0].mxu0
        %v961 = vpop.f32.mrb[0].mxu0
        %v962 = vadd.f32 0.0, %v961
        %v963 = vpop.f32.mrb[0].mxu0
        %964 = vmatprep.mubr.bf16.mxu0 0
        %965 = vmatmul.mubr.bf16.gmra.mrb[0].mxu0 %v765
        %v966 = vpop.f32.mrb[0].mxu0
        %v967 = vadd.f32 0.0, %v966
        %v968 = vpop.f32.mrb[0].mxu0
        %v969 = vpop.f32.mrb[0].mxu0
        %v970 = vadd.f32 0.0, %v969
        %v971 = vpop.f32.mrb[0].mxu0
        %972 = vmatprep.mubr.bf16.mxu0 0
        %973 = vmatmul.mubr.bf16.gmra.mrb[0].mxu0 %v768
        %v974 = vpop.f32.mrb[0].mxu0
        %v975 = vadd.f32 0.0, %v974
        %v976 = vpop.f32.mrb[0].mxu0
        %v977 = vpop.f32.mrb[0].mxu0
        %v978 = vadd.f32 0.0, %v977
        %v979 = vpop.f32.mrb[0].mxu0
        %980 = vmatprep.mubr.bf16.mxu0 0
        %981 = vmatmul.mubr.bf16.gmra.mrb[0].mxu0 %v771
        %v982 = vpop.f32.mrb[0].mxu0
        %v983 = vadd.f32 0.0, %v982
        %v984 = vpop.f32.mrb[0].mxu0
        %v985 = vpop.f32.mrb[0].mxu0
        %v986 = vadd.f32 0.0, %v985
        %v987 = vpop.f32.mrb[0].mxu0
        %988 = vmatprep.mubr.bf16.mxu0 0
        %989 = vmatmul.mubr.bf16.gmra.mrb[0].mxu0 %v774
        %v990 = vpop.f32.mrb[0].mxu0
        %v991 = vadd.f32 0.0, %v990
        %v992 = vpop.f32.mrb[0].mxu0
        %v993 = vpop.f32.mrb[0].mxu0
        %v994 = vadd.f32 0.0, %v993
        %v995 = vpop.f32.mrb[0].mxu0
        %996 = vmatprep.mubr.bf16.mxu0 0
        %997 = vmatmul.mubr.bf16.gmra.mrb[0].mxu0 %v777
        %v998 = vpop.f32.mrb[0].mxu0
        %v999 = vadd.f32 0.0, %v998
        %v1000 = vpop.f32.mrb[0].mxu0
        %v1001 = vpop.f32.mrb[0].mxu0
        %v1002 = vadd.f32 0.0, %v1001
        %v1003 = vpop.f32.mrb[0].mxu0
        %1004 = vmatprep.mubr.bf16.mxu0 0
        %1005 = vmatmul.mubr.bf16.gmra.mrb[0].mxu0 %v780
        %v1006 = vpop.f32.mrb[0].mxu0
        %v1007 = vadd.f32 0.0, %v1006
        %v1008 = vpop.f32.mrb[0].mxu0
        %v1009 = vpop.f32.mrb[0].mxu0
        %v1010 = vadd.f32 0.0, %v1009
        %v1011 = vpop.f32.mrb[0].mxu0
        %1012 = vmatprep.mubr.bf16.mxu0 0
        %1013 = vmatmul.mubr.bf16.gmra.mrb[0].mxu0 %v783
        %v1014 = vpop.f32.mrb[0].mxu0
        %v1015 = vadd.f32 0.0, %v1014
        %v1016 = vpop.f32.mrb[0].mxu0
        %v1017 = vpop.f32.mrb[0].mxu0
        %v1018 = vadd.f32 0.0, %v1017
        %v1019 = vpop.f32.mrb[0].mxu0
        %1020 = vmatprep.mubr.bf16.mxu0 0
        %1021 = vmatmul.mubr.bf16.gmra.mrb[0].mxu0 %v786
        %v1022 = vpop.f32.mrb[0].mxu0
        %v1023 = vadd.f32 0.0, %v1022
        %v1024 = vpop.f32.mrb[0].mxu0
        %v1025 = vpop.f32.mrb[0].mxu0
        %v1026 = vadd.f32 0.0, %v1025
        %v1027 = vpop.f32.mrb[0].mxu0
        %1028 = vmatprep.mubr.bf16.mxu0 0
        %1029 = vmatmul.mubr.bf16.gmra.mrb[0].mxu0 %v789
        %v1030 = vpop.f32.mrb[0].mxu0
        %v1031 = vadd.f32 0.0, %v1030
        %v1032 = vpop.f32.mrb[0].mxu0
        %v1033 = vpop.f32.mrb[0].mxu0
        %v1034 = vadd.f32 0.0, %v1033
        %v1035 = vpop.f32.mrb[0].mxu0
        %1036 = vmatprep.mubr.bf16.mxu0 0
        %1037 = vmatmul.mubr.bf16.gmra.mrb[0].mxu0 %v792
        %v1038 = vpop.f32.mrb[0].mxu0
        %v1039 = vadd.f32 0.0, %v1038
        %v1040 = vpop.f32.mrb[0].mxu0
        %v1041 = vpop.f32.mrb[0].mxu0
        %v1042 = vadd.f32 0.0, %v1041
        %v1043 = vpop.f32.mrb[0].mxu0
        %1044 = vmatprep.mubr.bf16.mxu0 0
        %1045 = vmatmul.mubr.bf16.gmra.mrb[0].mxu0 %v795
        %v1046 = vpop.f32.mrb[0].mxu0
        %v1047 = vadd.f32 0.0, %v1046
        %v1048 = vpop.f32.mrb[0].mxu0
        %v1049 = vpop.f32.mrb[0].mxu0
        %v1050 = vadd.f32 0.0, %v1049
        %v1051 = vpop.f32.mrb[0].mxu0
        %1052 = vmatprep.mubr.bf16.mxu0 0
        %1053 = vmatmul.mubr.bf16.gmra.mrb[0].mxu0 %v798
        %v1054 = vpop.f32.mrb[0].mxu0
        %v1055 = vadd.f32 0.0, %v1054
        %v1056 = vpop.f32.mrb[0].mxu0
        %v1057 = vpop.f32.mrb[0].mxu0
        %v1058 = vadd.f32 0.0, %v1057
        %v1059 = vpop.f32.mrb[0].mxu0
        %1060 = vmatprep.mubr.bf16.mxu0 0
        %1061 = vmatmul.mubr.bf16.gmra.mrb[0].mxu0 %v801
        %v1062 = vpop.f32.mrb[0].mxu0
        %v1063 = vadd.f32 0.0, %v1062
        %v1064 = vpop.f32.mrb[0].mxu0
        %v1065 = vpop.f32.mrb[0].mxu0
        %v1066 = vadd.f32 0.0, %v1065
        %v1067 = vpop.f32.mrb[0].mxu0
        %1068 = vmatprep.mubr.bf16.mxu0 0
        %1069 = vmatmul.mubr.bf16.gmra.mrb[0].mxu0 %v804
        %v1070 = vpop.f32.mrb[0].mxu0
        %v1071 = vadd.f32 0.0, %v1070
        %v1072 = vpop.f32.mrb[0].mxu0
        %v1073 = vpop.f32.mrb[0].mxu0
        %v1074 = vadd.f32 0.0, %v1073
        %v1075 = vpop.f32.mrb[0].mxu0
        %1076 = vmatprep.mubr.bf16.mxu0 0
        %1077 = vmatmul.mubr.bf16.gmra.mrb[0].mxu0 %v807
        %v1078 = vpop.f32.mrb[0].mxu0
        %v1079 = vadd.f32 0.0, %v1078
        %v1080 = vpop.f32.mrb[0].mxu0
        %v1081 = vpop.f32.mrb[0].mxu0
        %v1082 = vadd.f32 0.0, %v1081
        %v1083 = vpop.f32.mrb[0].mxu0
        %1084 = vmatprep.mubr.bf16.mxu0 0
        %1085 = vmatmul.mubr.bf16.gmra.mrb[0].mxu0 %v810
        %v1086 = vpop.f32.mrb[0].mxu0
        %v1087 = vadd.f32 0.0, %v1086
        %v1088 = vpop.f32.mrb[0].mxu0
        %v1089 = vpop.f32.mrb[0].mxu0
        %v1090 = vadd.f32 0.0, %v1089
        %v1091 = vpop.f32.mrb[0].mxu0
        %1092 = vmatprep.mubr.bf16.mxu0 0
        %1093 = vmatmul.mubr.bf16.gmra.mrb[0].mxu0 %v813
        %v1094 = vpop.f32.mrb[0].mxu0
        %v1095 = vadd.f32 0.0, %v1094
        %v1096 = vpop.f32.mrb[0].mxu0
        %v1097 = vpop.f32.mrb[0].mxu0
        %v1098 = vadd.f32 0.0, %v1097
        %v1099 = vpop.f32.mrb[0].mxu0
        %1100 = vmatprep.mubr.bf16.mxu0 0
        %1101 = vmatmul.mubr.bf16.gmra.mrb[0].mxu0 %v816
        %v1102 = vpop.f32.mrb[0].mxu0
        %v1103 = vadd.f32 0.0, %v1102
        %v1104 = vpop.f32.mrb[0].mxu0
        %v1105 = vpop.f32.mrb[0].mxu0
        %v1106 = vadd.f32 0.0, %v1105
        %v1107 = vpop.f32.mrb[0].mxu0
        %1108 = vmatprep.mubr.bf16.mxu0 0
        %1109 = vmatmul.mubr.bf16.gmra.mrb[0].mxu0 %v819
        %v1110 = vpop.f32.mrb[0].mxu0
        %v1111 = vadd.f32 0.0, %v1110
        %v1112 = vpop.f32.mrb[0].mxu0
        %v1113 = vpop.f32.mrb[0].mxu0
        %v1114 = vadd.f32 0.0, %v1113
        %v1115 = vpop.f32.mrb[0].mxu0
        %1116 = vdwg.mxu0
        %v1117 = vsel %vm724, %v419, 0
        %v1119 = vsel %vm724, %v420, 0
        %v1121 = vsel %vm724, %v421, 0
        %v1123 = vsel %vm724, %v422, 0
        %v1125 = vsel %vm724, %v423, 0
        %v1127 = vsel %vm724, %v424, 0
        %v1129 = vsel %vm724, %v425, 0
        %v1131 = vsel %vm724, %v426, 0
        %v1133 = vsel %vm724, %v427, 0
        %v1135 = vsel %vm724, %v428, 0
        %v1137 = vsel %vm724, %v429, 0
        %v1139 = vsel %vm724, %v430, 0
        %v1141 = vsel %vm724, %v431, 0
        %v1143 = vsel %vm724, %v432, 0
        %v1145 = vsel %vm724, %v433, 0
        %v1147 = vsel %vm724, %v434, 0
        %v1149 = vsel %vm724, %v435, 0
        %v1151 = vsel %vm724, %v436, 0
        %v1153 = vsel %vm724, %v437, 0
        %v1155 = vsel %vm724, %v438, 0
        %v1157 = vsel %vm724, %v439, 0
        %v1159 = vsel %vm724, %v440, 0
        %v1161 = vsel %vm724, %v441, 0
        %v1163 = vsel %vm724, %v442, 0
        %v1165 = vsel %vm724, %v443, 0
        %v1167 = vsel %vm724, %v444, 0
        %v1169 = vsel %vm724, %v445, 0
        %v1171 = vsel %vm724, %v446, 0
        %v1173 = vsel %vm724, %v447, 0
        %v1175 = vsel %vm724, %v448, 0
        %v1177 = vsel %vm724, %v449, 0
        %v1179 = vsel %vm724, %v450, 0
        %v1182 = vand.u32 %v285, %v824
        %1184 = vmatprep.subr.bf16.mxu0 0
        %1185 = vmatpush1.bf16.msra.mxu0 %v1182
        %1186 = vmatprep.subr.bf16.mxu0 0
        %1187 = vmatpush1.bf16.msra.mxu0 0
        %1188 = vmatprep.subr.bf16.mxu0 0
        %1189 = vmatpush1.bf16.msra.mxu0 0
        %1190 = vmatprep.subr.bf16.mxu0 0
        %1191 = vmatpush1.bf16.msra.mxu0 0
        %1192 = vmatprep.subr.bf16.mxu0 0
        %1193 = vmatpush1.bf16.msra.mxu0 0
        %1194 = vmatprep.subr.bf16.mxu0 0
        %1195 = vmatpush1.bf16.msra.mxu0 0
        %1196 = vmatprep.subr.bf16.mxu0 0
        %1197 = vmatpush1.bf16.msra.mxu0 0
        %1198 = vmatprep.subr.bf16.mxu0 0
        %1199 = vmatpush1.bf16.msra.mxu0 0
        %1200 = vmatprep.subr.bf16.mxu0 0
        %1201 = vmatpush1.bf16.msra.mxu0 0
        %1202 = vmatprep.subr.bf16.mxu0 0
        %1203 = vmatpush1.bf16.msra.mxu0 0
        %1204 = vmatprep.subr.bf16.mxu0 0
        %1205 = vmatpush1.bf16.msra.mxu0 0
        %1206 = vmatprep.subr.bf16.mxu0 0
        %1207 = vmatpush1.bf16.msra.mxu0 0
        %1208 = vmatprep.subr.bf16.mxu0 0
        %1209 = vmatpush1.bf16.msra.mxu0 0
        %1210 = vmatprep.subr.bf16.mxu0 0
        %1211 = vmatpush1.bf16.msra.mxu0 0
        %1212 = vmatprep.subr.bf16.mxu0 0
        %1213 = vmatpush1.bf16.msra.mxu0 0
        %1214 = vmatprep.subr.bf16.mxu0 0
        %1215 = vmatpush1.bf16.msra.mxu0 0
        %1216 = vmatprep.mubr.bf16.mxu0 0
        %1217 = vmatmul.mubr.bf16.gmra.mrb[0].mxu0 %v1117
        %v1218 = vpop.f32.mrb[0].mxu0
        %v1219 = vadd.f32 %v863, %v1218
        %v1220 = vpop.f32.mrb[0].mxu0
        %v1221 = vpop.f32.mrb[0].mxu0
        %v1222 = vadd.f32 %v866, %v1221
        %v1223 = vpop.f32.mrb[0].mxu0
        %1224 = vmatprep.mubr.bf16.mxu0 0
        %1225 = vmatmul.mubr.bf16.gmra.mrb[0].mxu0 %v1119
        %v1226 = vpop.f32.mrb[0].mxu0
        %v1227 = vadd.f32 %v871, %v1226
        %v1228 = vpop.f32.mrb[0].mxu0
        %v1229 = vpop.f32.mrb[0].mxu0
        %v1230 = vadd.f32 %v874, %v1229
        %v1231 = vpop.f32.mrb[0].mxu0
        %1232 = vmatprep.mubr.bf16.mxu0 0
        %1233 = vmatmul.mubr.bf16.gmra.mrb[0].mxu0 %v1121
        %v1234 = vpop.f32.mrb[0].mxu0
        %v1235 = vadd.f32 %v879, %v1234
        %v1236 = vpop.f32.mrb[0].mxu0
        %v1237 = vpop.f32.mrb[0].mxu0
        %v1238 = vadd.f32 %v882, %v1237
        %v1239 = vpop.f32.mrb[0].mxu0
        %1240 = vmatprep.mubr.bf16.mxu0 0
        %1241 = vmatmul.mubr.bf16.gmra.mrb[0].mxu0 %v1123
        %v1242 = vpop.f32.mrb[0].mxu0
        %v1243 = vadd.f32 %v887, %v1242
        %v1244 = vpop.f32.mrb[0].mxu0
        %v1245 = vpop.f32.mrb[0].mxu0
        %v1246 = vadd.f32 %v890, %v1245
        %v1247 = vpop.f32.mrb[0].mxu0
        %1248 = vmatprep.mubr.bf16.mxu0 0
        %1249 = vmatmul.mubr.bf16.gmra.mrb[0].mxu0 %v1125
        %v1250 = vpop.f32.mrb[0].mxu0
        %v1251 = vadd.f32 %v895, %v1250
        %v1252 = vpop.f32.mrb[0].mxu0
        %v1253 = vpop.f32.mrb[0].mxu0
        %v1254 = vadd.f32 %v898, %v1253
        %v1255 = vpop.f32.mrb[0].mxu0
        %1256 = vmatprep.mubr.bf16.mxu0 0
        %1257 = vmatmul.mubr.bf16.gmra.mrb[0].mxu0 %v1127
        %v1258 = vpop.f32.mrb[0].mxu0
        %v1259 = vadd.f32 %v903, %v1258
        %v1260 = vpop.f32.mrb[0].mxu0
        %v1261 = vpop.f32.mrb[0].mxu0
        %v1262 = vadd.f32 %v906, %v1261
        %v1263 = vpop.f32.mrb[0].mxu0
        %1264 = vmatprep.mubr.bf16.mxu0 0
        %1265 = vmatmul.mubr.bf16.gmra.mrb[0].mxu0 %v1129
        %v1266 = vpop.f32.mrb[0].mxu0
        %v1267 = vadd.f32 %v911, %v1266
        %v1268 = vpop.f32.mrb[0].mxu0
        %v1269 = vpop.f32.mrb[0].mxu0
        %v1270 = vadd.f32 %v914, %v1269
        %v1271 = vpop.f32.mrb[0].mxu0
        %1272 = vmatprep.mubr.bf16.mxu0 0
        %1273 = vmatmul.mubr.bf16.gmra.mrb[0].mxu0 %v1131
        %v1274 = vpop.f32.mrb[0].mxu0
        %v1275 = vadd.f32 %v919, %v1274
        %v1276 = vpop.f32.mrb[0].mxu0
        %v1277 = vpop.f32.mrb[0].mxu0
        %v1278 = vadd.f32 %v922, %v1277
        %v1279 = vpop.f32.mrb[0].mxu0
        %1280 = vmatprep.mubr.bf16.mxu0 0
        %1281 = vmatmul.mubr.bf16.gmra.mrb[0].mxu0 %v1133
        %v1282 = vpop.f32.mrb[0].mxu0
        %v1283 = vadd.f32 %v927, %v1282
        %v1284 = vpop.f32.mrb[0].mxu0
        %v1285 = vpop.f32.mrb[0].mxu0
        %v1286 = vadd.f32 %v930, %v1285
        %v1287 = vpop.f32.mrb[0].mxu0
        %1288 = vmatprep.mubr.bf16.mxu0 0
        %1289 = vmatmul.mubr.bf16.gmra.mrb[0].mxu0 %v1135
        %v1290 = vpop.f32.mrb[0].mxu0
        %v1291 = vadd.f32 %v935, %v1290
        %v1292 = vpop.f32.mrb[0].mxu0
        %v1293 = vpop.f32.mrb[0].mxu0
        %v1294 = vadd.f32 %v938, %v1293
        %v1295 = vpop.f32.mrb[0].mxu0
        %1296 = vmatprep.mubr.bf16.mxu0 0
        %1297 = vmatmul.mubr.bf16.gmra.mrb[0].mxu0 %v1137
        %v1298 = vpop.f32.mrb[0].mxu0
        %v1299 = vadd.f32 %v943, %v1298
        %v1300 = vpop.f32.mrb[0].mxu0
        %v1301 = vpop.f32.mrb[0].mxu0
        %v1302 = vadd.f32 %v946, %v1301
        %v1303 = vpop.f32.mrb[0].mxu0
        %1304 = vmatprep.mubr.bf16.mxu0 0
        %1305 = vmatmul.mubr.bf16.gmra.mrb[0].mxu0 %v1139
        %v1306 = vpop.f32.mrb[0].mxu0
        %v1307 = vadd.f32 %v951, %v1306
        %v1308 = vpop.f32.mrb[0].mxu0
        %v1309 = vpop.f32.mrb[0].mxu0
        %v1310 = vadd.f32 %v954, %v1309
        %v1311 = vpop.f32.mrb[0].mxu0
        %1312 = vmatprep.mubr.bf16.mxu0 0
        %1313 = vmatmul.mubr.bf16.gmra.mrb[0].mxu0 %v1141
        %v1314 = vpop.f32.mrb[0].mxu0
        %v1315 = vadd.f32 %v959, %v1314
        %v1316 = vpop.f32.mrb[0].mxu0
        %v1317 = vpop.f32.mrb[0].mxu0
        %v1318 = vadd.f32 %v962, %v1317
        %v1319 = vpop.f32.mrb[0].mxu0
        %1320 = vmatprep.mubr.bf16.mxu0 0
        %1321 = vmatmul.mubr.bf16.gmra.mrb[0].mxu0 %v1143
        %v1322 = vpop.f32.mrb[0].mxu0
        %v1323 = vadd.f32 %v967, %v1322
        %v1324 = vpop.f32.mrb[0].mxu0
        %v1325 = vpop.f32.mrb[0].mxu0
        %v1326 = vadd.f32 %v970, %v1325
        %v1327 = vpop.f32.mrb[0].mxu0
        %1328 = vmatprep.mubr.bf16.mxu0 0
        %1329 = vmatmul.mubr.bf16.gmra.mrb[0].mxu0 %v1145
        %v1330 = vpop.f32.mrb[0].mxu0
        %v1331 = vadd.f32 %v975, %v1330
        %v1332 = vpop.f32.mrb[0].mxu0
        %v1333 = vpop.f32.mrb[0].mxu0
        %v1334 = vadd.f32 %v978, %v1333
        %v1335 = vpop.f32.mrb[0].mxu0
        %1336 = vmatprep.mubr.bf16.mxu0 0
        %1337 = vmatmul.mubr.bf16.gmra.mrb[0].mxu0 %v1147
        %v1338 = vpop.f32.mrb[0].mxu0
        %v1339 = vadd.f32 %v983, %v1338
        %v1340 = vpop.f32.mrb[0].mxu0
        %v1341 = vpop.f32.mrb[0].mxu0
        %v1342 = vadd.f32 %v986, %v1341
        %v1343 = vpop.f32.mrb[0].mxu0
        %1344 = vmatprep.mubr.bf16.mxu0 0
        %1345 = vmatmul.mubr.bf16.gmra.mrb[0].mxu0 %v1149
        %v1346 = vpop.f32.mrb[0].mxu0
        %v1347 = vadd.f32 %v991, %v1346
        %v1348 = vpop.f32.mrb[0].mxu0
        %v1349 = vpop.f32.mrb[0].mxu0
        %v1350 = vadd.f32 %v994, %v1349
        %v1351 = vpop.f32.mrb[0].mxu0
        %1352 = vmatprep.mubr.bf16.mxu0 0
        %1353 = vmatmul.mubr.bf16.gmra.mrb[0].mxu0 %v1151
        %v1354 = vpop.f32.mrb[0].mxu0
        %v1355 = vadd.f32 %v999, %v1354
        %v1356 = vpop.f32.mrb[0].mxu0
        %v1357 = vpop.f32.mrb[0].mxu0
        %v1358 = vadd.f32 %v1002, %v1357
        %v1359 = vpop.f32.mrb[0].mxu0
        %1360 = vmatprep.mubr.bf16.mxu0 0
        %1361 = vmatmul.mubr.bf16.gmra.mrb[0].mxu0 %v1153
        %v1362 = vpop.f32.mrb[0].mxu0
        %v1363 = vadd.f32 %v1007, %v1362
        %v1364 = vpop.f32.mrb[0].mxu0
        %v1365 = vpop.f32.mrb[0].mxu0
        %v1366 = vadd.f32 %v1010, %v1365
        %v1367 = vpop.f32.mrb[0].mxu0
        %1368 = vmatprep.mubr.bf16.mxu0 0
        %1369 = vmatmul.mubr.bf16.gmra.mrb[0].mxu0 %v1155
        %v1370 = vpop.f32.mrb[0].mxu0
        %v1371 = vadd.f32 %v1015, %v1370
        %v1372 = vpop.f32.mrb[0].mxu0
        %v1373 = vpop.f32.mrb[0].mxu0
        %v1374 = vadd.f32 %v1018, %v1373
        %v1375 = vpop.f32.mrb[0].mxu0
        %1376 = vmatprep.mubr.bf16.mxu0 0
        %1377 = vmatmul.mubr.bf16.gmra.mrb[0].mxu0 %v1157
        %v1378 = vpop.f32.mrb[0].mxu0
        %v1379 = vadd.f32 %v1023, %v1378
        %v1380 = vpop.f32.mrb[0].mxu0
        %v1381 = vpop.f32.mrb[0].mxu0
        %v1382 = vadd.f32 %v1026, %v1381
        %v1383 = vpop.f32.mrb[0].mxu0
        %1384 = vmatprep.mubr.bf16.mxu0 0
        %1385 = vmatmul.mubr.bf16.gmra.mrb[0].mxu0 %v1159
        %v1386 = vpop.f32.mrb[0].mxu0
        %v1387 = vadd.f32 %v1031, %v1386
        %v1388 = vpop.f32.mrb[0].mxu0
        %v1389 = vpop.f32.mrb[0].mxu0
        %v1390 = vadd.f32 %v1034, %v1389
        %v1391 = vpop.f32.mrb[0].mxu0
        %1392 = vmatprep.mubr.bf16.mxu0 0
        %1393 = vmatmul.mubr.bf16.gmra.mrb[0].mxu0 %v1161
        %v1394 = vpop.f32.mrb[0].mxu0
        %v1395 = vadd.f32 %v1039, %v1394
        %v1396 = vpop.f32.mrb[0].mxu0
        %v1397 = vpop.f32.mrb[0].mxu0
        %v1398 = vadd.f32 %v1042, %v1397
        %v1399 = vpop.f32.mrb[0].mxu0
        %1400 = vmatprep.mubr.bf16.mxu0 0
        %1401 = vmatmul.mubr.bf16.gmra.mrb[0].mxu0 %v1163
        %v1402 = vpop.f32.mrb[0].mxu0
        %v1403 = vadd.f32 %v1047, %v1402
        %v1404 = vpop.f32.mrb[0].mxu0
        %v1405 = vpop.f32.mrb[0].mxu0
        %v1406 = vadd.f32 %v1050, %v1405
        %v1407 = vpop.f32.mrb[0].mxu0
        %1408 = vmatprep.mubr.bf16.mxu0 0
        %1409 = vmatmul.mubr.bf16.gmra.mrb[0].mxu0 %v1165
        %v1410 = vpop.f32.mrb[0].mxu0
        %v1411 = vadd.f32 %v1055, %v1410
        %v1412 = vpop.f32.mrb[0].mxu0
        %v1413 = vpop.f32.mrb[0].mxu0
        %v1414 = vadd.f32 %v1058, %v1413
        %v1415 = vpop.f32.mrb[0].mxu0
        %1416 = vmatprep.mubr.bf16.mxu0 0
        %1417 = vmatmul.mubr.bf16.gmra.mrb[0].mxu0 %v1167
        %v1418 = vpop.f32.mrb[0].mxu0
        %v1419 = vadd.f32 %v1063, %v1418
        %v1420 = vpop.f32.mrb[0].mxu0
        %v1421 = vpop.f32.mrb[0].mxu0
        %v1422 = vadd.f32 %v1066, %v1421
        %v1423 = vpop.f32.mrb[0].mxu0
        %1424 = vmatprep.mubr.bf16.mxu0 0
        %1425 = vmatmul.mubr.bf16.gmra.mrb[0].mxu0 %v1169
        %v1426 = vpop.f32.mrb[0].mxu0
        %v1427 = vadd.f32 %v1071, %v1426
        %v1428 = vpop.f32.mrb[0].mxu0
        %v1429 = vpop.f32.mrb[0].mxu0
        %v1430 = vadd.f32 %v1074, %v1429
        %v1431 = vpop.f32.mrb[0].mxu0
        %1432 = vmatprep.mubr.bf16.mxu0 0
        %1433 = vmatmul.mubr.bf16.gmra.mrb[0].mxu0 %v1171
        %v1434 = vpop.f32.mrb[0].mxu0
        %v1435 = vadd.f32 %v1079, %v1434
        %v1436 = vpop.f32.mrb[0].mxu0
        %v1437 = vpop.f32.mrb[0].mxu0
        %v1438 = vadd.f32 %v1082, %v1437
        %v1439 = vpop.f32.mrb[0].mxu0
        %1440 = vmatprep.mubr.bf16.mxu0 0
        %1441 = vmatmul.mubr.bf16.gmra.mrb[0].mxu0 %v1173
        %v1442 = vpop.f32.mrb[0].mxu0
        %v1443 = vadd.f32 %v1087, %v1442
        %v1444 = vpop.f32.mrb[0].mxu0
        %v1445 = vpop.f32.mrb[0].mxu0
        %v1446 = vadd.f32 %v1090, %v1445
        %v1447 = vpop.f32.mrb[0].mxu0
        %1448 = vmatprep.mubr.bf16.mxu0 0
        %1449 = vmatmul.mubr.bf16.gmra.mrb[0].mxu0 %v1175
        %v1450 = vpop.f32.mrb[0].mxu0
        %v1451 = vadd.f32 %v1095, %v1450
        %v1452 = vpop.f32.mrb[0].mxu0
        %v1453 = vpop.f32.mrb[0].mxu0
        %v1454 = vadd.f32 %v1098, %v1453
        %v1455 = vpop.f32.mrb[0].mxu0
        %1456 = vmatprep.mubr.bf16.mxu0 0
        %1457 = vmatmul.mubr.bf16.gmra.mrb[0].mxu0 %v1177
        %v1458 = vpop.f32.mrb[0].mxu0
        %v1459 = vadd.f32 %v1103, %v1458
        %v1460 = vpop.f32.mrb[0].mxu0
        %v1461 = vpop.f32.mrb[0].mxu0
        %v1462 = vadd.f32 %v1106, %v1461
        %v1463 = vpop.f32.mrb[0].mxu0
        %1464 = vmatprep.mubr.bf16.mxu0 0
        %1465 = vmatmul.mubr.bf16.gmra.mrb[0].mxu0 %v1179
        %v1466 = vpop.f32.mrb[0].mxu0
        %v1467 = vadd.f32 %v1111, %v1466
        %v1468 = vpop.f32.mrb[0].mxu0
        %v1469 = vpop.f32.mrb[0].mxu0
        %v1470 = vadd.f32 %v1114, %v1469
        %v1471 = vpop.f32.mrb[0].mxu0
        %1472 = vdwg.mxu0
        %vm1473 = vcmask 1046528
        %v1474 = vrot.slane %v419, 1
        %v1475 = vrot.slane %v420, 1
        %v1476 = vsel %vm1473, %v1474, %v1475
        %v1477 = vrot.slane %v421, 1
        %v1478 = vsel %vm1473, %v1475, %v1477
        %v1479 = vrot.slane %v422, 1
        %v1480 = vsel %vm1473, %v1477, %v1479
        %v1481 = vrot.slane %v423, 1
        %v1482 = vsel %vm1473, %v1479, %v1481
        %v1483 = vrot.slane %v424, 1
        %v1484 = vsel %vm1473, %v1481, %v1483
        %v1485 = vrot.slane %v425, 1
        %v1486 = vsel %vm1473, %v1483, %v1485
        %v1487 = vrot.slane %v426, 1
        %v1488 = vsel %vm1473, %v1485, %v1487
        %v1489 = vrot.slane %v427, 1
        %v1490 = vsel %vm1473, %v1487, %v1489
        %v1491 = vrot.slane %v428, 1
        %v1492 = vsel %vm1473, %v1489, %v1491
        %v1493 = vrot.slane %v429, 1
        %v1494 = vsel %vm1473, %v1491, %v1493
        %v1495 = vrot.slane %v430, 1
        %v1496 = vsel %vm1473, %v1493, %v1495
        %v1497 = vrot.slane %v431, 1
        %v1498 = vsel %vm1473, %v1495, %v1497
        %v1499 = vrot.slane %v432, 1
        %v1500 = vsel %vm1473, %v1497, %v1499
        %v1501 = vrot.slane %v433, 1
        %v1502 = vsel %vm1473, %v1499, %v1501
        %v1503 = vrot.slane %v434, 1
        %v1504 = vsel %vm1473, %v1501, %v1503
        %v1505 = vrot.slane %v435, 1
        %v1506 = vsel %vm1473, %v1503, %v1505
        %v1507 = vrot.slane %v436, 1
        %v1508 = vsel %vm1473, %v1505, %v1507
        %v1509 = vrot.slane %v437, 1
        %v1510 = vsel %vm1473, %v1507, %v1509
        %v1511 = vrot.slane %v438, 1
        %v1512 = vsel %vm1473, %v1509, %v1511
        %v1513 = vrot.slane %v439, 1
        %v1514 = vsel %vm1473, %v1511, %v1513
        %v1515 = vrot.slane %v440, 1
        %v1516 = vsel %vm1473, %v1513, %v1515
        %v1517 = vrot.slane %v441, 1
        %v1518 = vsel %vm1473, %v1515, %v1517
        %v1519 = vrot.slane %v442, 1
        %v1520 = vsel %vm1473, %v1517, %v1519
        %v1521 = vrot.slane %v443, 1
        %v1522 = vsel %vm1473, %v1519, %v1521
        %v1523 = vrot.slane %v444, 1
        %v1524 = vsel %vm1473, %v1521, %v1523
        %v1525 = vrot.slane %v445, 1
        %v1526 = vsel %vm1473, %v1523, %v1525
        %v1527 = vrot.slane %v446, 1
        %v1528 = vsel %vm1473, %v1525, %v1527
        %v1529 = vrot.slane %v447, 1
        %v1530 = vsel %vm1473, %v1527, %v1529
        %v1531 = vrot.slane %v448, 1
        %v1532 = vsel %vm1473, %v1529, %v1531
        %v1533 = vrot.slane %v449, 1
        %v1534 = vsel %vm1473, %v1531, %v1533
        %v1535 = vrot.slane %v450, 1
        %v1536 = vsel %vm1473, %v1533, %v1535
        %v1537 = vrot.slane %v451, 1
        %v1538 = vsel %vm1473, %v1535, %v1537
        %v1540 = vunpack.c.l.b16 %v286
        %v1541 = vpack.c.b16 %v1540, %v714
        %v1542 = vrot.slane %v1541, 3
        %v1544 = vsel %vm724, %v1476, 0
        %v1547 = vsel %vm724, %v1478, 0
        %v1550 = vsel %vm724, %v1480, 0
        %v1553 = vsel %vm724, %v1482, 0
        %v1556 = vsel %vm724, %v1484, 0
        %v1559 = vsel %vm724, %v1486, 0
        %v1562 = vsel %vm724, %v1488, 0
        %v1565 = vsel %vm724, %v1490, 0
        %v1568 = vsel %vm724, %v1492, 0
        %v1571 = vsel %vm724, %v1494, 0
        %v1574 = vsel %vm724, %v1496, 0
        %v1577 = vsel %vm724, %v1498, 0
        %v1580 = vsel %vm724, %v1500, 0
        %v1583 = vsel %vm724, %v1502, 0
        %v1586 = vsel %vm724, %v1504, 0
        %v1589 = vsel %vm724, %v1506, 0
        %v1592 = vsel %vm724, %v1508, 0
        %v1595 = vsel %vm724, %v1510, 0
        %v1598 = vsel %vm724, %v1512, 0
        %v1601 = vsel %vm724, %v1514, 0
        %v1604 = vsel %vm724, %v1516, 0
        %v1607 = vsel %vm724, %v1518, 0
        %v1610 = vsel %vm724, %v1520, 0
        %v1613 = vsel %vm724, %v1522, 0
        %v1616 = vsel %vm724, %v1524, 0
        %v1619 = vsel %vm724, %v1526, 0
        %v1622 = vsel %vm724, %v1528, 0
        %v1625 = vsel %vm724, %v1530, 0
        %v1628 = vsel %vm724, %v1532, 0
        %v1631 = vsel %vm724, %v1534, 0
        %v1634 = vsel %vm724, %v1536, 0
        %v1637 = vsel %vm724, %v1538, 0
        %v1640 = vand.u32 %v1542, %v824
        %1642 = vmatprep.subr.bf16.mxu0 0
        %1643 = vmatpush1.bf16.msra.mxu0 %v1640
        %1644 = vmatprep.subr.bf16.mxu0 0
        %1645 = vmatpush1.bf16.msra.mxu0 0
        %1646 = vmatprep.subr.bf16.mxu0 0
        %1647 = vmatpush1.bf16.msra.mxu0 0
        %1648 = vmatprep.subr.bf16.mxu0 0
        %1649 = vmatpush1.bf16.msra.mxu0 0
        %1650 = vmatprep.subr.bf16.mxu0 0
        %1651 = vmatpush1.bf16.msra.mxu0 0
        %1652 = vmatprep.subr.bf16.mxu0 0
        %1653 = vmatpush1.bf16.msra.mxu0 0
        %1654 = vmatprep.subr.bf16.mxu0 0
        %1655 = vmatpush1.bf16.msra.mxu0 0
        %1656 = vmatprep.subr.bf16.mxu0 0
        %1657 = vmatpush1.bf16.msra.mxu0 0
        %1658 = vmatprep.subr.bf16.mxu0 0
        %1659 = vmatpush1.bf16.msra.mxu0 0
        %1660 = vmatprep.subr.bf16.mxu0 0
        %1661 = vmatpush1.bf16.msra.mxu0 0
        %1662 = vmatprep.subr.bf16.mxu0 0
        %1663 = vmatpush1.bf16.msra.mxu0 0
        %1664 = vmatprep.subr.bf16.mxu0 0
        %1665 = vmatpush1.bf16.msra.mxu0 0
        %1666 = vmatprep.subr.bf16.mxu0 0
        %1667 = vmatpush1.bf16.msra.mxu0 0
        %1668 = vmatprep.subr.bf16.mxu0 0
        %1669 = vmatpush1.bf16.msra.mxu0 0
        %1670 = vmatprep.subr.bf16.mxu0 0
        %1671 = vmatpush1.bf16.msra.mxu0 0
        %1672 = vmatprep.subr.bf16.mxu0 0
        %1673 = vmatpush1.bf16.msra.mxu0 0
        %1674 = vmatprep.mubr.bf16.mxu0 0
        %1675 = vmatmul.mubr.bf16.gmra.mrb[0].mxu0 %v1544
        %v1676 = vpop.f32.mrb[0].mxu0
        %v1677 = vadd.f32 0.0, %v1676
        %v1678 = vpop.f32.mrb[0].mxu0
        %v1679 = vpop.f32.mrb[0].mxu0
        %v1680 = vadd.f32 0.0, %v1679
        %v1681 = vpop.f32.mrb[0].mxu0
        %1682 = vmatprep.mubr.bf16.mxu0 0
        %1683 = vmatmul.mubr.bf16.gmra.mrb[0].mxu0 %v1547
        %v1684 = vpop.f32.mrb[0].mxu0
        %v1685 = vadd.f32 0.0, %v1684
        %v1686 = vpop.f32.mrb[0].mxu0
        %v1687 = vpop.f32.mrb[0].mxu0
        %v1688 = vadd.f32 0.0, %v1687
        %v1689 = vpop.f32.mrb[0].mxu0
        %1690 = vmatprep.mubr.bf16.mxu0 0
        %1691 = vmatmul.mubr.bf16.gmra.mrb[0].mxu0 %v1550
        %v1692 = vpop.f32.mrb[0].mxu0
        %v1693 = vadd.f32 0.0, %v1692
        %v1694 = vpop.f32.mrb[0].mxu0
        %v1695 = vpop.f32.mrb[0].mxu0
        %v1696 = vadd.f32 0.0, %v1695
        %v1697 = vpop.f32.mrb[0].mxu0
        %1698 = vmatprep.mubr.bf16.mxu0 0
        %1699 = vmatmul.mubr.bf16.gmra.mrb[0].mxu0 %v1553
        %v1700 = vpop.f32.mrb[0].mxu0
        %v1701 = vadd.f32 0.0, %v1700
        %v1702 = vpop.f32.mrb[0].mxu0
        %v1703 = vpop.f32.mrb[0].mxu0
        %v1704 = vadd.f32 0.0, %v1703
        %v1705 = vpop.f32.mrb[0].mxu0
        %1706 = vmatprep.mubr.bf16.mxu0 0
        %1707 = vmatmul.mubr.bf16.gmra.mrb[0].mxu0 %v1556
        %v1708 = vpop.f32.mrb[0].mxu0
        %v1709 = vadd.f32 0.0, %v1708
        %v1710 = vpop.f32.mrb[0].mxu0
        %v1711 = vpop.f32.mrb[0].mxu0
        %v1712 = vadd.f32 0.0, %v1711
        %v1713 = vpop.f32.mrb[0].mxu0
        %1714 = vmatprep.mubr.bf16.mxu0 0
        %1715 = vmatmul.mubr.bf16.gmra.mrb[0].mxu0 %v1559
        %v1716 = vpop.f32.mrb[0].mxu0
        %v1717 = vadd.f32 0.0, %v1716
        %v1718 = vpop.f32.mrb[0].mxu0
        %v1719 = vpop.f32.mrb[0].mxu0
        %v1720 = vadd.f32 0.0, %v1719
        %v1721 = vpop.f32.mrb[0].mxu0
        %1722 = vmatprep.mubr.bf16.mxu0 0
        %1723 = vmatmul.mubr.bf16.gmra.mrb[0].mxu0 %v1562
        %v1724 = vpop.f32.mrb[0].mxu0
        %v1725 = vadd.f32 0.0, %v1724
        %v1726 = vpop.f32.mrb[0].mxu0
        %v1727 = vpop.f32.mrb[0].mxu0
        %v1728 = vadd.f32 0.0, %v1727
        %v1729 = vpop.f32.mrb[0].mxu0
        %1730 = vmatprep.mubr.bf16.mxu0 0
        %1731 = vmatmul.mubr.bf16.gmra.mrb[0].mxu0 %v1565
        %v1732 = vpop.f32.mrb[0].mxu0
        %v1733 = vadd.f32 0.0, %v1732
        %v1734 = vpop.f32.mrb[0].mxu0
        %v1735 = vpop.f32.mrb[0].mxu0
        %v1736 = vadd.f32 0.0, %v1735
        %v1737 = vpop.f32.mrb[0].mxu0
        %1738 = vmatprep.mubr.bf16.mxu0 0
        %1739 = vmatmul.mubr.bf16.gmra.mrb[0].mxu0 %v1568
        %v1740 = vpop.f32.mrb[0].mxu0
        %v1741 = vadd.f32 0.0, %v1740
        %v1742 = vpop.f32.mrb[0].mxu0
        %v1743 = vpop.f32.mrb[0].mxu0
        %v1744 = vadd.f32 0.0, %v1743
        %v1745 = vpop.f32.mrb[0].mxu0
        %1746 = vmatprep.mubr.bf16.mxu0 0
        %1747 = vmatmul.mubr.bf16.gmra.mrb[0].mxu0 %v1571
        %v1748 = vpop.f32.mrb[0].mxu0
        %v1749 = vadd.f32 0.0, %v1748
        %v1750 = vpop.f32.mrb[0].mxu0
        %v1751 = vpop.f32.mrb[0].mxu0
        %v1752 = vadd.f32 0.0, %v1751
        %v1753 = vpop.f32.mrb[0].mxu0
        %1754 = vmatprep.mubr.bf16.mxu0 0
        %1755 = vmatmul.mubr.bf16.gmra.mrb[0].mxu0 %v1574
        %v1756 = vpop.f32.mrb[0].mxu0
        %v1757 = vadd.f32 0.0, %v1756
        %v1758 = vpop.f32.mrb[0].mxu0
        %v1759 = vpop.f32.mrb[0].mxu0
        %v1760 = vadd.f32 0.0, %v1759
        %v1761 = vpop.f32.mrb[0].mxu0
        %1762 = vmatprep.mubr.bf16.mxu0 0
        %1763 = vmatmul.mubr.bf16.gmra.mrb[0].mxu0 %v1577
        %v1764 = vpop.f32.mrb[0].mxu0
        %v1765 = vadd.f32 0.0, %v1764
        %v1766 = vpop.f32.mrb[0].mxu0
        %v1767 = vpop.f32.mrb[0].mxu0
        %v1768 = vadd.f32 0.0, %v1767
        %v1769 = vpop.f32.mrb[0].mxu0
        %1770 = vmatprep.mubr.bf16.mxu0 0
        %1771 = vmatmul.mubr.bf16.gmra.mrb[0].mxu0 %v1580
        %v1772 = vpop.f32.mrb[0].mxu0
        %v1773 = vadd.f32 0.0, %v1772
        %v1774 = vpop.f32.mrb[0].mxu0
        %v1775 = vpop.f32.mrb[0].mxu0
        %v1776 = vadd.f32 0.0, %v1775
        %v1777 = vpop.f32.mrb[0].mxu0
        %1778 = vmatprep.mubr.bf16.mxu0 0
        %1779 = vmatmul.mubr.bf16.gmra.mrb[0].mxu0 %v1583
        %v1780 = vpop.f32.mrb[0].mxu0
        %v1781 = vadd.f32 0.0, %v1780
        %v1782 = vpop.f32.mrb[0].mxu0
        %v1783 = vpop.f32.mrb[0].mxu0
        %v1784 = vadd.f32 0.0, %v1783
        %v1785 = vpop.f32.mrb[0].mxu0
        %1786 = vmatprep.mubr.bf16.mxu0 0
        %1787 = vmatmul.mubr.bf16.gmra.mrb[0].mxu0 %v1586
        %v1788 = vpop.f32.mrb[0].mxu0
        %v1789 = vadd.f32 0.0, %v1788
        %v1790 = vpop.f32.mrb[0].mxu0
        %v1791 = vpop.f32.mrb[0].mxu0
        %v1792 = vadd.f32 0.0, %v1791
        %v1793 = vpop.f32.mrb[0].mxu0
        %1794 = vmatprep.mubr.bf16.mxu0 0
        %1795 = vmatmul.mubr.bf16.gmra.mrb[0].mxu0 %v1589
        %v1796 = vpop.f32.mrb[0].mxu0
        %v1797 = vadd.f32 0.0, %v1796
        %v1798 = vpop.f32.mrb[0].mxu0
        %v1799 = vpop.f32.mrb[0].mxu0
        %v1800 = vadd.f32 0.0, %v1799
        %v1801 = vpop.f32.mrb[0].mxu0
        %1802 = vmatprep.mubr.bf16.mxu0 0
        %1803 = vmatmul.mubr.bf16.gmra.mrb[0].mxu0 %v1592
        %v1804 = vpop.f32.mrb[0].mxu0
        %v1805 = vadd.f32 0.0, %v1804
        %v1806 = vpop.f32.mrb[0].mxu0
        %v1807 = vpop.f32.mrb[0].mxu0
        %v1808 = vadd.f32 0.0, %v1807
        %v1809 = vpop.f32.mrb[0].mxu0
        %1810 = vmatprep.mubr.bf16.mxu0 0
        %1811 = vmatmul.mubr.bf16.gmra.mrb[0].mxu0 %v1595
        %v1812 = vpop.f32.mrb[0].mxu0
        %v1813 = vadd.f32 0.0, %v1812
        %v1814 = vpop.f32.mrb[0].mxu0
        %v1815 = vpop.f32.mrb[0].mxu0
        %v1816 = vadd.f32 0.0, %v1815
        %v1817 = vpop.f32.mrb[0].mxu0
        %1818 = vmatprep.mubr.bf16.mxu0 0
        %1819 = vmatmul.mubr.bf16.gmra.mrb[0].mxu0 %v1598
        %v1820 = vpop.f32.mrb[0].mxu0
        %v1821 = vadd.f32 0.0, %v1820
        %v1822 = vpop.f32.mrb[0].mxu0
        %v1823 = vpop.f32.mrb[0].mxu0
        %v1824 = vadd.f32 0.0, %v1823
        %v1825 = vpop.f32.mrb[0].mxu0
        %1826 = vmatprep.mubr.bf16.mxu0 0
        %1827 = vmatmul.mubr.bf16.gmra.mrb[0].mxu0 %v1601
        %v1828 = vpop.f32.mrb[0].mxu0
        %v1829 = vadd.f32 0.0, %v1828
        %v1830 = vpop.f32.mrb[0].mxu0
        %v1831 = vpop.f32.mrb[0].mxu0
        %v1832 = vadd.f32 0.0, %v1831
        %v1833 = vpop.f32.mrb[0].mxu0
        %1834 = vmatprep.mubr.bf16.mxu0 0
        %1835 = vmatmul.mubr.bf16.gmra.mrb[0].mxu0 %v1604
        %v1836 = vpop.f32.mrb[0].mxu0
        %v1837 = vadd.f32 0.0, %v1836
        %v1838 = vpop.f32.mrb[0].mxu0
        %v1839 = vpop.f32.mrb[0].mxu0
        %v1840 = vadd.f32 0.0, %v1839
        %v1841 = vpop.f32.mrb[0].mxu0
        %1842 = vmatprep.mubr.bf16.mxu0 0
        %1843 = vmatmul.mubr.bf16.gmra.mrb[0].mxu0 %v1607
        %v1844 = vpop.f32.mrb[0].mxu0
        %v1845 = vadd.f32 0.0, %v1844
        %v1846 = vpop.f32.mrb[0].mxu0
        %v1847 = vpop.f32.mrb[0].mxu0
        %v1848 = vadd.f32 0.0, %v1847
        %v1849 = vpop.f32.mrb[0].mxu0
        %1850 = vmatprep.mubr.bf16.mxu0 0
        %1851 = vmatmul.mubr.bf16.gmra.mrb[0].mxu0 %v1610
        %v1852 = vpop.f32.mrb[0].mxu0
        %v1853 = vadd.f32 0.0, %v1852
        %v1854 = vpop.f32.mrb[0].mxu0
        %v1855 = vpop.f32.mrb[0].mxu0
        %v1856 = vadd.f32 0.0, %v1855
        %v1857 = vpop.f32.mrb[0].mxu0
        %1858 = vmatprep.mubr.bf16.mxu0 0
        %1859 = vmatmul.mubr.bf16.gmra.mrb[0].mxu0 %v1613
        %v1860 = vpop.f32.mrb[0].mxu0
        %v1861 = vadd.f32 0.0, %v1860
        %v1862 = vpop.f32.mrb[0].mxu0
        %v1863 = vpop.f32.mrb[0].mxu0
        %v1864 = vadd.f32 0.0, %v1863
        %v1865 = vpop.f32.mrb[0].mxu0
        %1866 = vmatprep.mubr.bf16.mxu0 0
        %1867 = vmatmul.mubr.bf16.gmra.mrb[0].mxu0 %v1616
        %v1868 = vpop.f32.mrb[0].mxu0
        %v1869 = vadd.f32 0.0, %v1868
        %v1870 = vpop.f32.mrb[0].mxu0
        %v1871 = vpop.f32.mrb[0].mxu0
        %v1872 = vadd.f32 0.0, %v1871
        %v1873 = vpop.f32.mrb[0].mxu0
        %1874 = vmatprep.mubr.bf16.mxu0 0
        %1875 = vmatmul.mubr.bf16.gmra.mrb[0].mxu0 %v1619
        %v1876 = vpop.f32.mrb[0].mxu0
        %v1877 = vadd.f32 0.0, %v1876
        %v1878 = vpop.f32.mrb[0].mxu0
        %v1879 = vpop.f32.mrb[0].mxu0
        %v1880 = vadd.f32 0.0, %v1879
        %v1881 = vpop.f32.mrb[0].mxu0
        %1882 = vmatprep.mubr.bf16.mxu0 0
        %1883 = vmatmul.mubr.bf16.gmra.mrb[0].mxu0 %v1622
        %v1884 = vpop.f32.mrb[0].mxu0
        %v1885 = vadd.f32 0.0, %v1884
        %v1886 = vpop.f32.mrb[0].mxu0
        %v1887 = vpop.f32.mrb[0].mxu0
        %v1888 = vadd.f32 0.0, %v1887
        %v1889 = vpop.f32.mrb[0].mxu0
        %1890 = vmatprep.mubr.bf16.mxu0 0
        %1891 = vmatmul.mubr.bf16.gmra.mrb[0].mxu0 %v1625
        %v1892 = vpop.f32.mrb[0].mxu0
        %v1893 = vadd.f32 0.0, %v1892
        %v1894 = vpop.f32.mrb[0].mxu0
        %v1895 = vpop.f32.mrb[0].mxu0
        %v1896 = vadd.f32 0.0, %v1895
        %v1897 = vpop.f32.mrb[0].mxu0
        %1898 = vmatprep.mubr.bf16.mxu0 0
        %1899 = vmatmul.mubr.bf16.gmra.mrb[0].mxu0 %v1628
        %v1900 = vpop.f32.mrb[0].mxu0
        %v1901 = vadd.f32 0.0, %v1900
        %v1902 = vpop.f32.mrb[0].mxu0
        %v1903 = vpop.f32.mrb[0].mxu0
        %v1904 = vadd.f32 0.0, %v1903
        %v1905 = vpop.f32.mrb[0].mxu0
        %1906 = vmatprep.mubr.bf16.mxu0 0
        %1907 = vmatmul.mubr.bf16.gmra.mrb[0].mxu0 %v1631
        %v1908 = vpop.f32.mrb[0].mxu0
        %v1909 = vadd.f32 0.0, %v1908
        %v1910 = vpop.f32.mrb[0].mxu0
        %v1911 = vpop.f32.mrb[0].mxu0
        %v1912 = vadd.f32 0.0, %v1911
        %v1913 = vpop.f32.mrb[0].mxu0
        %1914 = vmatprep.mubr.bf16.mxu0 0
        %1915 = vmatmul.mubr.bf16.gmra.mrb[0].mxu0 %v1634
        %v1916 = vpop.f32.mrb[0].mxu0
        %v1917 = vadd.f32 0.0, %v1916
        %v1918 = vpop.f32.mrb[0].mxu0
        %v1919 = vpop.f32.mrb[0].mxu0
        %v1920 = vadd.f32 0.0, %v1919
        %v1921 = vpop.f32.mrb[0].mxu0
        %1922 = vmatprep.mubr.bf16.mxu0 0
        %1923 = vmatmul.mubr.bf16.gmra.mrb[0].mxu0 %v1637
        %v1924 = vpop.f32.mrb[0].mxu0
        %v1925 = vadd.f32 0.0, %v1924
        %v1926 = vpop.f32.mrb[0].mxu0
        %v1927 = vpop.f32.mrb[0].mxu0
        %v1928 = vadd.f32 0.0, %v1927
        %v1929 = vpop.f32.mrb[0].mxu0
        %1930 = vdwg.mxu0
        %v1931 = vadd.f32 %v1219, %v1677
        %v1932 = vadd.f32 %v1222, %v1680
        %v1933 = vadd.f32 %v1227, %v1685
        %v1934 = vadd.f32 %v1230, %v1688
        %v1935 = vadd.f32 %v1235, %v1693
        %v1936 = vadd.f32 %v1238, %v1696
        %v1937 = vadd.f32 %v1243, %v1701
        %v1938 = vadd.f32 %v1246, %v1704
        %v1939 = vadd.f32 %v1251, %v1709
        %v1940 = vadd.f32 %v1254, %v1712
        %v1941 = vadd.f32 %v1259, %v1717
        %v1942 = vadd.f32 %v1262, %v1720
        %v1943 = vadd.f32 %v1267, %v1725
        %v1944 = vadd.f32 %v1270, %v1728
        %v1945 = vadd.f32 %v1275, %v1733
        %v1946 = vadd.f32 %v1278, %v1736
        %v1947 = vadd.f32 %v1283, %v1741
        %v1948 = vadd.f32 %v1286, %v1744
        %v1949 = vadd.f32 %v1291, %v1749
        %v1950 = vadd.f32 %v1294, %v1752
        %v1951 = vadd.f32 %v1299, %v1757
        %v1952 = vadd.f32 %v1302, %v1760
        %v1953 = vadd.f32 %v1307, %v1765
        %v1954 = vadd.f32 %v1310, %v1768
        %v1955 = vadd.f32 %v1315, %v1773
        %v1956 = vadd.f32 %v1318, %v1776
        %v1957 = vadd.f32 %v1323, %v1781
        %v1958 = vadd.f32 %v1326, %v1784
        %v1959 = vadd.f32 %v1331, %v1789
        %v1960 = vadd.f32 %v1334, %v1792
        %v1961 = vadd.f32 %v1339, %v1797
        %v1962 = vadd.f32 %v1342, %v1800
        %v1963 = vadd.f32 %v1347, %v1805
        %v1964 = vadd.f32 %v1350, %v1808
        %v1965 = vadd.f32 %v1355, %v1813
        %v1966 = vadd.f32 %v1358, %v1816
        %v1967 = vadd.f32 %v1363, %v1821
        %v1968 = vadd.f32 %v1366, %v1824
        %v1969 = vadd.f32 %v1371, %v1829
        %v1970 = vadd.f32 %v1374, %v1832
        %v1971 = vadd.f32 %v1379, %v1837
        %v1972 = vadd.f32 %v1382, %v1840
        %v1973 = vadd.f32 %v1387, %v1845
        %v1974 = vadd.f32 %v1390, %v1848
        %v1975 = vadd.f32 %v1395, %v1853
        %v1976 = vadd.f32 %v1398, %v1856
        %v1977 = vadd.f32 %v1403, %v1861
        %v1978 = vadd.f32 %v1406, %v1864
        %v1979 = vadd.f32 %v1411, %v1869
        %v1980 = vadd.f32 %v1414, %v1872
        %v1981 = vadd.f32 %v1419, %v1877
        %v1982 = vadd.f32 %v1422, %v1880
        %v1983 = vadd.f32 %v1427, %v1885
        %v1984 = vadd.f32 %v1430, %v1888
        %v1985 = vadd.f32 %v1435, %v1893
        %v1986 = vadd.f32 %v1438, %v1896
        %v1987 = vadd.f32 %v1443, %v1901
        %v1988 = vadd.f32 %v1446, %v1904
        %v1989 = vadd.f32 %v1451, %v1909
        %v1990 = vadd.f32 %v1454, %v1912
        %v1991 = vadd.f32 %v1459, %v1917
        %v1992 = vadd.f32 %v1462, %v1920
        %v1993 = vadd.f32 %v1467, %v1925
        %v1994 = vadd.f32 %v1470, %v1928
        %v1998 = vunpack.c.l.b16 %v277
        %v1999 = vunpack.c.l.b16 %v278
        %v2000 = vunpack.c.l.b16 %v279
        %v2001 = vpack.c.b16 %v1998, %v418
        %v2002 = vpack.c.b16 %v2000, %v1999
        %v2003 = vpack.c.b16 %v1540, %v1540
        %v2005 = vshrl.u32 %v2003, 16
        %v2007 = vshll.u32 %v2003, 16
        %v2009 = vrot.slane %v2007, 1
        %v2010 = vor.u32 %v2005, %v2009
        %v2012 = vsel %vm724, %v2001, 0
        %v2015 = vsel %vm724, %v2002, 0
        %v2018 = vand.u32 %v2010, %v824
        %2020 = vmatprep.subr.bf16.mxu0 0
        %2021 = vmatpush1.bf16.msra.mxu0 %v2018
        %2022 = vmatprep.subr.bf16.mxu0 0
        %2023 = vmatpush1.bf16.msra.mxu0 0
        %2024 = vmatprep.subr.bf16.mxu0 0
        %2025 = vmatpush1.bf16.msra.mxu0 0
        %2026 = vmatprep.subr.bf16.mxu0 0
        %2027 = vmatpush1.bf16.msra.mxu0 0
        %2028 = vmatprep.subr.bf16.mxu0 0
        %2029 = vmatpush1.bf16.msra.mxu0 0
        %2030 = vmatprep.subr.bf16.mxu0 0
        %2031 = vmatpush1.bf16.msra.mxu0 0
        %2032 = vmatprep.subr.bf16.mxu0 0
        %2033 = vmatpush1.bf16.msra.mxu0 0
        %2034 = vmatprep.subr.bf16.mxu0 0
        %2035 = vmatpush1.bf16.msra.mxu0 0
        %2036 = vmatprep.subr.bf16.mxu0 0
        %2037 = vmatpush1.bf16.msra.mxu0 0
        %2038 = vmatprep.subr.bf16.mxu0 0
        %2039 = vmatpush1.bf16.msra.mxu0 0
        %2040 = vmatprep.subr.bf16.mxu0 0
        %2041 = vmatpush1.bf16.msra.mxu0 0
        %2042 = vmatprep.subr.bf16.mxu0 0
        %2043 = vmatpush1.bf16.msra.mxu0 0
        %2044 = vmatprep.subr.bf16.mxu0 0
        %2045 = vmatpush1.bf16.msra.mxu0 0
        %2046 = vmatprep.subr.bf16.mxu0 0
        %2047 = vmatpush1.bf16.msra.mxu0 0
        %2048 = vmatprep.subr.bf16.mxu0 0
        %2049 = vmatpush1.bf16.msra.mxu0 0
        %2050 = vmatprep.subr.bf16.mxu0 0
        %2051 = vmatpush1.bf16.msra.mxu0 0
        %2052 = vmatprep.mubr.bf16.mxu0 0
        %2053 = vmatmul.mubr.bf16.gmra.mrb[0].mxu0 %v1121
        %v2054 = vpop.f32.mrb[0].mxu0
        %v2055 = vadd.f32 0.0, %v2054
        %v2056 = vpop.f32.mrb[0].mxu0
        %v2057 = vpop.f32.mrb[0].mxu0
        %v2058 = vadd.f32 0.0, %v2057
        %v2059 = vpop.f32.mrb[0].mxu0
        %2060 = vmatprep.mubr.bf16.mxu0 0
        %2061 = vmatmul.mubr.bf16.gmra.mrb[0].mxu0 %v1123
        %v2062 = vpop.f32.mrb[0].mxu0
        %v2063 = vadd.f32 0.0, %v2062
        %v2064 = vpop.f32.mrb[0].mxu0
        %v2065 = vpop.f32.mrb[0].mxu0
        %v2066 = vadd.f32 0.0, %v2065
        %v2067 = vpop.f32.mrb[0].mxu0
        %2068 = vmatprep.mubr.bf16.mxu0 0
        %2069 = vmatmul.mubr.bf16.gmra.mrb[0].mxu0 %v1125
        %v2070 = vpop.f32.mrb[0].mxu0
        %v2071 = vadd.f32 0.0, %v2070
        %v2072 = vpop.f32.mrb[0].mxu0
        %v2073 = vpop.f32.mrb[0].mxu0
        %v2074 = vadd.f32 0.0, %v2073
        %v2075 = vpop.f32.mrb[0].mxu0
        %2076 = vmatprep.mubr.bf16.mxu0 0
        %2077 = vmatmul.mubr.bf16.gmra.mrb[0].mxu0 %v1127
        %v2078 = vpop.f32.mrb[0].mxu0
        %v2079 = vadd.f32 0.0, %v2078
        %v2080 = vpop.f32.mrb[0].mxu0
        %v2081 = vpop.f32.mrb[0].mxu0
        %v2082 = vadd.f32 0.0, %v2081
        %v2083 = vpop.f32.mrb[0].mxu0
        %2084 = vmatprep.mubr.bf16.mxu0 0
        %2085 = vmatmul.mubr.bf16.gmra.mrb[0].mxu0 %v1129
        %v2086 = vpop.f32.mrb[0].mxu0
        %v2087 = vadd.f32 0.0, %v2086
        %v2088 = vpop.f32.mrb[0].mxu0
        %v2089 = vpop.f32.mrb[0].mxu0
        %v2090 = vadd.f32 0.0, %v2089
        %v2091 = vpop.f32.mrb[0].mxu0
        %2092 = vmatprep.mubr.bf16.mxu0 0
        %2093 = vmatmul.mubr.bf16.gmra.mrb[0].mxu0 %v1131
        %v2094 = vpop.f32.mrb[0].mxu0
        %v2095 = vadd.f32 0.0, %v2094
        %v2096 = vpop.f32.mrb[0].mxu0
        %v2097 = vpop.f32.mrb[0].mxu0
        %v2098 = vadd.f32 0.0, %v2097
        %v2099 = vpop.f32.mrb[0].mxu0
        %2100 = vmatprep.mubr.bf16.mxu0 0
        %2101 = vmatmul.mubr.bf16.gmra.mrb[0].mxu0 %v1133
        %v2102 = vpop.f32.mrb[0].mxu0
        %v2103 = vadd.f32 0.0, %v2102
        %v2104 = vpop.f32.mrb[0].mxu0
        %v2105 = vpop.f32.mrb[0].mxu0
        %v2106 = vadd.f32 0.0, %v2105
        %v2107 = vpop.f32.mrb[0].mxu0
        %2108 = vmatprep.mubr.bf16.mxu0 0
        %2109 = vmatmul.mubr.bf16.gmra.mrb[0].mxu0 %v1135
        %v2110 = vpop.f32.mrb[0].mxu0
        %v2111 = vadd.f32 0.0, %v2110
        %v2112 = vpop.f32.mrb[0].mxu0
        %v2113 = vpop.f32.mrb[0].mxu0
        %v2114 = vadd.f32 0.0, %v2113
        %v2115 = vpop.f32.mrb[0].mxu0
        %2116 = vmatprep.mubr.bf16.mxu0 0
        %2117 = vmatmul.mubr.bf16.gmra.mrb[0].mxu0 %v1137
        %v2118 = vpop.f32.mrb[0].mxu0
        %v2119 = vadd.f32 0.0, %v2118
        %v2120 = vpop.f32.mrb[0].mxu0
        %v2121 = vpop.f32.mrb[0].mxu0
        %v2122 = vadd.f32 0.0, %v2121
        %v2123 = vpop.f32.mrb[0].mxu0
        %2124 = vmatprep.mubr.bf16.mxu0 0
        %2125 = vmatmul.mubr.bf16.gmra.mrb[0].mxu0 %v1139
        %v2126 = vpop.f32.mrb[0].mxu0
        %v2127 = vadd.f32 0.0, %v2126
        %v2128 = vpop.f32.mrb[0].mxu0
        %v2129 = vpop.f32.mrb[0].mxu0
        %v2130 = vadd.f32 0.0, %v2129
        %v2131 = vpop.f32.mrb[0].mxu0
        %2132 = vmatprep.mubr.bf16.mxu0 0
        %2133 = vmatmul.mubr.bf16.gmra.mrb[0].mxu0 %v1141
        %v2134 = vpop.f32.mrb[0].mxu0
        %v2135 = vadd.f32 0.0, %v2134
        %v2136 = vpop.f32.mrb[0].mxu0
        %v2137 = vpop.f32.mrb[0].mxu0
        %v2138 = vadd.f32 0.0, %v2137
        %v2139 = vpop.f32.mrb[0].mxu0
        %2140 = vmatprep.mubr.bf16.mxu0 0
        %2141 = vmatmul.mubr.bf16.gmra.mrb[0].mxu0 %v1143
        %v2142 = vpop.f32.mrb[0].mxu0
        %v2143 = vadd.f32 0.0, %v2142
        %v2144 = vpop.f32.mrb[0].mxu0
        %v2145 = vpop.f32.mrb[0].mxu0
        %v2146 = vadd.f32 0.0, %v2145
        %v2147 = vpop.f32.mrb[0].mxu0
        %2148 = vmatprep.mubr.bf16.mxu0 0
        %2149 = vmatmul.mubr.bf16.gmra.mrb[0].mxu0 %v1145
        %v2150 = vpop.f32.mrb[0].mxu0
        %v2151 = vadd.f32 0.0, %v2150
        %v2152 = vpop.f32.mrb[0].mxu0
        %v2153 = vpop.f32.mrb[0].mxu0
        %v2154 = vadd.f32 0.0, %v2153
        %v2155 = vpop.f32.mrb[0].mxu0
        %2156 = vmatprep.mubr.bf16.mxu0 0
        %2157 = vmatmul.mubr.bf16.gmra.mrb[0].mxu0 %v1147
        %v2158 = vpop.f32.mrb[0].mxu0
        %v2159 = vadd.f32 0.0, %v2158
        %v2160 = vpop.f32.mrb[0].mxu0
        %v2161 = vpop.f32.mrb[0].mxu0
        %v2162 = vadd.f32 0.0, %v2161
        %v2163 = vpop.f32.mrb[0].mxu0
        %2164 = vmatprep.mubr.bf16.mxu0 0
        %2165 = vmatmul.mubr.bf16.gmra.mrb[0].mxu0 %v1149
        %v2166 = vpop.f32.mrb[0].mxu0
        %v2167 = vadd.f32 0.0, %v2166
        %v2168 = vpop.f32.mrb[0].mxu0
        %v2169 = vpop.f32.mrb[0].mxu0
        %v2170 = vadd.f32 0.0, %v2169
        %v2171 = vpop.f32.mrb[0].mxu0
        %2172 = vmatprep.mubr.bf16.mxu0 0
        %2173 = vmatmul.mubr.bf16.gmra.mrb[0].mxu0 %v1151
        %v2174 = vpop.f32.mrb[0].mxu0
        %v2175 = vadd.f32 0.0, %v2174
        %v2176 = vpop.f32.mrb[0].mxu0
        %v2177 = vpop.f32.mrb[0].mxu0
        %v2178 = vadd.f32 0.0, %v2177
        %v2179 = vpop.f32.mrb[0].mxu0
        %2180 = vmatprep.mubr.bf16.mxu0 0
        %2181 = vmatmul.mubr.bf16.gmra.mrb[0].mxu0 %v1153
        %v2182 = vpop.f32.mrb[0].mxu0
        %v2183 = vadd.f32 0.0, %v2182
        %v2184 = vpop.f32.mrb[0].mxu0
        %v2185 = vpop.f32.mrb[0].mxu0
        %v2186 = vadd.f32 0.0, %v2185
        %v2187 = vpop.f32.mrb[0].mxu0
        %2188 = vmatprep.mubr.bf16.mxu0 0
        %2189 = vmatmul.mubr.bf16.gmra.mrb[0].mxu0 %v1155
        %v2190 = vpop.f32.mrb[0].mxu0
        %v2191 = vadd.f32 0.0, %v2190
        %v2192 = vpop.f32.mrb[0].mxu0
        %v2193 = vpop.f32.mrb[0].mxu0
        %v2194 = vadd.f32 0.0, %v2193
        %v2195 = vpop.f32.mrb[0].mxu0
        %2196 = vmatprep.mubr.bf16.mxu0 0
        %2197 = vmatmul.mubr.bf16.gmra.mrb[0].mxu0 %v1157
        %v2198 = vpop.f32.mrb[0].mxu0
        %v2199 = vadd.f32 0.0, %v2198
        %v2200 = vpop.f32.mrb[0].mxu0
        %v2201 = vpop.f32.mrb[0].mxu0
        %v2202 = vadd.f32 0.0, %v2201
        %v2203 = vpop.f32.mrb[0].mxu0
        %2204 = vmatprep.mubr.bf16.mxu0 0
        %2205 = vmatmul.mubr.bf16.gmra.mrb[0].mxu0 %v1159
        %v2206 = vpop.f32.mrb[0].mxu0
        %v2207 = vadd.f32 0.0, %v2206
        %v2208 = vpop.f32.mrb[0].mxu0
        %v2209 = vpop.f32.mrb[0].mxu0
        %v2210 = vadd.f32 0.0, %v2209
        %v2211 = vpop.f32.mrb[0].mxu0
        %2212 = vmatprep.mubr.bf16.mxu0 0
        %2213 = vmatmul.mubr.bf16.gmra.mrb[0].mxu0 %v1161
        %v2214 = vpop.f32.mrb[0].mxu0
        %v2215 = vadd.f32 0.0, %v2214
        %v2216 = vpop.f32.mrb[0].mxu0
        %v2217 = vpop.f32.mrb[0].mxu0
        %v2218 = vadd.f32 0.0, %v2217
        %v2219 = vpop.f32.mrb[0].mxu0
        %2220 = vmatprep.mubr.bf16.mxu0 0
        %2221 = vmatmul.mubr.bf16.gmra.mrb[0].mxu0 %v1163
        %v2222 = vpop.f32.mrb[0].mxu0
        %v2223 = vadd.f32 0.0, %v2222
        %v2224 = vpop.f32.mrb[0].mxu0
        %v2225 = vpop.f32.mrb[0].mxu0
        %v2226 = vadd.f32 0.0, %v2225
        %v2227 = vpop.f32.mrb[0].mxu0
        %2228 = vmatprep.mubr.bf16.mxu0 0
        %2229 = vmatmul.mubr.bf16.gmra.mrb[0].mxu0 %v1165
        %v2230 = vpop.f32.mrb[0].mxu0
        %v2231 = vadd.f32 0.0, %v2230
        %v2232 = vpop.f32.mrb[0].mxu0
        %v2233 = vpop.f32.mrb[0].mxu0
        %v2234 = vadd.f32 0.0, %v2233
        %v2235 = vpop.f32.mrb[0].mxu0
        %2236 = vmatprep.mubr.bf16.mxu0 0
        %2237 = vmatmul.mubr.bf16.gmra.mrb[0].mxu0 %v1167
        %v2238 = vpop.f32.mrb[0].mxu0
        %v2239 = vadd.f32 0.0, %v2238
        %v2240 = vpop.f32.mrb[0].mxu0
        %v2241 = vpop.f32.mrb[0].mxu0
        %v2242 = vadd.f32 0.0, %v2241
        %v2243 = vpop.f32.mrb[0].mxu0
        %2244 = vmatprep.mubr.bf16.mxu0 0
        %2245 = vmatmul.mubr.bf16.gmra.mrb[0].mxu0 %v1169
        %v2246 = vpop.f32.mrb[0].mxu0
        %v2247 = vadd.f32 0.0, %v2246
        %v2248 = vpop.f32.mrb[0].mxu0
        %v2249 = vpop.f32.mrb[0].mxu0
        %v2250 = vadd.f32 0.0, %v2249
        %v2251 = vpop.f32.mrb[0].mxu0
        %2252 = vmatprep.mubr.bf16.mxu0 0
        %2253 = vmatmul.mubr.bf16.gmra.mrb[0].mxu0 %v1171
        %v2254 = vpop.f32.mrb[0].mxu0
        %v2255 = vadd.f32 0.0, %v2254
        %v2256 = vpop.f32.mrb[0].mxu0
        %v2257 = vpop.f32.mrb[0].mxu0
        %v2258 = vadd.f32 0.0, %v2257
        %v2259 = vpop.f32.mrb[0].mxu0
        %2260 = vmatprep.mubr.bf16.mxu0 0
        %2261 = vmatmul.mubr.bf16.gmra.mrb[0].mxu0 %v1173
        %v2262 = vpop.f32.mrb[0].mxu0
        %v2263 = vadd.f32 0.0, %v2262
        %v2264 = vpop.f32.mrb[0].mxu0
        %v2265 = vpop.f32.mrb[0].mxu0
        %v2266 = vadd.f32 0.0, %v2265
        %v2267 = vpop.f32.mrb[0].mxu0
        %2268 = vmatprep.mubr.bf16.mxu0 0
        %2269 = vmatmul.mubr.bf16.gmra.mrb[0].mxu0 %v1175
        %v2270 = vpop.f32.mrb[0].mxu0
        %v2271 = vadd.f32 0.0, %v2270
        %v2272 = vpop.f32.mrb[0].mxu0
        %v2273 = vpop.f32.mrb[0].mxu0
        %v2274 = vadd.f32 0.0, %v2273
        %v2275 = vpop.f32.mrb[0].mxu0
        %2276 = vmatprep.mubr.bf16.mxu0 0
        %2277 = vmatmul.mubr.bf16.gmra.mrb[0].mxu0 %v1177
        %v2278 = vpop.f32.mrb[0].mxu0
        %v2279 = vadd.f32 0.0, %v2278
        %v2280 = vpop.f32.mrb[0].mxu0
        %v2281 = vpop.f32.mrb[0].mxu0
        %v2282 = vadd.f32 0.0, %v2281
        %v2283 = vpop.f32.mrb[0].mxu0
        %2284 = vmatprep.mubr.bf16.mxu0 0
        %2285 = vmatmul.mubr.bf16.gmra.mrb[0].mxu0 %v1179
        %v2286 = vpop.f32.mrb[0].mxu0
        %v2287 = vadd.f32 0.0, %v2286
        %v2288 = vpop.f32.mrb[0].mxu0
        %v2289 = vpop.f32.mrb[0].mxu0
        %v2290 = vadd.f32 0.0, %v2289
        %v2291 = vpop.f32.mrb[0].mxu0
        %2292 = vmatprep.mubr.bf16.mxu0 0
        %2293 = vmatmul.mubr.bf16.gmra.mrb[0].mxu0 %v2012
        %v2294 = vpop.f32.mrb[0].mxu0
        %v2295 = vadd.f32 0.0, %v2294
        %v2296 = vpop.f32.mrb[0].mxu0
        %v2297 = vpop.f32.mrb[0].mxu0
        %v2298 = vadd.f32 0.0, %v2297
        %v2299 = vpop.f32.mrb[0].mxu0
        %2300 = vmatprep.mubr.bf16.mxu0 0
        %2301 = vmatmul.mubr.bf16.gmra.mrb[0].mxu0 %v2015
        %v2302 = vpop.f32.mrb[0].mxu0
        %v2303 = vadd.f32 0.0, %v2302
        %v2304 = vpop.f32.mrb[0].mxu0
        %v2305 = vpop.f32.mrb[0].mxu0
        %v2306 = vadd.f32 0.0, %v2305
        %v2307 = vpop.f32.mrb[0].mxu0
        %2308 = vdwg.mxu0
        %v2309 = vadd.f32 %v1931, %v2055
        %v2310 = vadd.f32 %v1932, %v2058
        %v2311 = vadd.f32 %v1933, %v2063
        %v2312 = vadd.f32 %v1934, %v2066
        %v2313 = vadd.f32 %v1935, %v2071
        %v2314 = vadd.f32 %v1936, %v2074
        %v2315 = vadd.f32 %v1937, %v2079
        %v2316 = vadd.f32 %v1938, %v2082
        %v2317 = vadd.f32 %v1939, %v2087
        %v2318 = vadd.f32 %v1940, %v2090
        %v2319 = vadd.f32 %v1941, %v2095
        %v2320 = vadd.f32 %v1942, %v2098
        %v2321 = vadd.f32 %v1943, %v2103
        %v2322 = vadd.f32 %v1944, %v2106
        %v2323 = vadd.f32 %v1945, %v2111
        %v2324 = vadd.f32 %v1946, %v2114
        %v2325 = vadd.f32 %v1947, %v2119
        %v2326 = vadd.f32 %v1948, %v2122
        %v2327 = vadd.f32 %v1949, %v2127
        %v2328 = vadd.f32 %v1950, %v2130
        %v2329 = vadd.f32 %v1951, %v2135
        %v2330 = vadd.f32 %v1952, %v2138
        %v2331 = vadd.f32 %v1953, %v2143
        %v2332 = vadd.f32 %v1954, %v2146
        %v2333 = vadd.f32 %v1955, %v2151
        %v2334 = vadd.f32 %v1956, %v2154
        %v2335 = vadd.f32 %v1957, %v2159
        %v2336 = vadd.f32 %v1958, %v2162
        %v2337 = vadd.f32 %v1959, %v2167
        %v2338 = vadd.f32 %v1960, %v2170
        %v2339 = vadd.f32 %v1961, %v2175
        %v2340 = vadd.f32 %v1962, %v2178
        %v2341 = vadd.f32 %v1963, %v2183
        %v2342 = vadd.f32 %v1964, %v2186
        %v2343 = vadd.f32 %v1965, %v2191
        %v2344 = vadd.f32 %v1966, %v2194
        %v2345 = vadd.f32 %v1967, %v2199
        %v2346 = vadd.f32 %v1968, %v2202
        %v2347 = vadd.f32 %v1969, %v2207
        %v2348 = vadd.f32 %v1970, %v2210
        %v2349 = vadd.f32 %v1971, %v2215
        %v2350 = vadd.f32 %v1972, %v2218
        %v2351 = vadd.f32 %v1973, %v2223
        %v2352 = vadd.f32 %v1974, %v2226
        %v2353 = vadd.f32 %v1975, %v2231
        %v2354 = vadd.f32 %v1976, %v2234
        %v2355 = vadd.f32 %v1977, %v2239
        %v2356 = vadd.f32 %v1978, %v2242
        %v2357 = vadd.f32 %v1979, %v2247
        %v2358 = vadd.f32 %v1980, %v2250
        %v2359 = vadd.f32 %v1981, %v2255
        %v2360 = vadd.f32 %v1982, %v2258
        %v2361 = vadd.f32 %v1983, %v2263
        %v2362 = vadd.f32 %v1984, %v2266
        %v2363 = vadd.f32 %v1985, %v2271
        %v2364 = vadd.f32 %v1986, %v2274
        %v2365 = vadd.f32 %v1987, %v2279
        %v2366 = vadd.f32 %v1988, %v2282
        %v2367 = vadd.f32 %v1989, %v2287
        %v2368 = vadd.f32 %v1990, %v2290
        %v2369 = vadd.f32 %v1991, %v2295
        %v2370 = vadd.f32 %v1992, %v2298
        %v2371 = vadd.f32 %v1993, %v2303
        %v2372 = vadd.f32 %v1994, %v2306
        %v2374 = vunpack.c.l.b16 %v280
        %v2375 = vpack.c.b16 %v2374, %v2374
        %v2376 = vshll.u32 %v2001, 16
        %v2378 = vrot.slane %v2376, 1
        %v2379 = vsel %vm452, %v707, %v2378
        %v2380 = vshrl.u32 %v2001, 16
        %v2382 = vor.u32 %v2380, %v2378
        %v2383 = vshll.u32 %v2002, 16
        %v2385 = vrot.slane %v2383, 1
        %v2386 = vsel %vm452, %v2382, %v2385
        %v2387 = vshrl.u32 %v2002, 16
        %v2389 = vor.u32 %v2387, %v2385
        %v2391 = vshll.u32 %v2375, 16
        %v2393 = vrot.slane %v2391, 1
        %v2394 = vsel %vm452, %v2389, %v2393
        %v2395 = vrot.slane %v2003, 2
        %v2397 = vsel %vm724, %v2379, 0
        %v2400 = vsel %vm724, %v2386, 0
        %v2403 = vsel %vm724, %v2394, 0
        %v2406 = vand.u32 %v2395, %v824
        %2408 = vmatprep.subr.bf16.mxu0 0
        %2409 = vmatpush1.bf16.msra.mxu0 %v2406
        %2410 = vmatprep.subr.bf16.mxu0 0
        %2411 = vmatpush1.bf16.msra.mxu0 0
        %2412 = vmatprep.subr.bf16.mxu0 0
        %2413 = vmatpush1.bf16.msra.mxu0 0
        %2414 = vmatprep.subr.bf16.mxu0 0
        %2415 = vmatpush1.bf16.msra.mxu0 0
        %2416 = vmatprep.subr.bf16.mxu0 0
        %2417 = vmatpush1.bf16.msra.mxu0 0
        %2418 = vmatprep.subr.bf16.mxu0 0
        %2419 = vmatpush1.bf16.msra.mxu0 0
        %2420 = vmatprep.subr.bf16.mxu0 0
        %2421 = vmatpush1.bf16.msra.mxu0 0
        %2422 = vmatprep.subr.bf16.mxu0 0
        %2423 = vmatpush1.bf16.msra.mxu0 0
        %2424 = vmatprep.subr.bf16.mxu0 0
        %2425 = vmatpush1.bf16.msra.mxu0 0
        %2426 = vmatprep.subr.bf16.mxu0 0
        %2427 = vmatpush1.bf16.msra.mxu0 0
        %2428 = vmatprep.subr.bf16.mxu0 0
        %2429 = vmatpush1.bf16.msra.mxu0 0
        %2430 = vmatprep.subr.bf16.mxu0 0
        %2431 = vmatpush1.bf16.msra.mxu0 0
        %2432 = vmatprep.subr.bf16.mxu0 0
        %2433 = vmatpush1.bf16.msra.mxu0 0
        %2434 = vmatprep.subr.bf16.mxu0 0
        %2435 = vmatpush1.bf16.msra.mxu0 0
        %2436 = vmatprep.subr.bf16.mxu0 0
        %2437 = vmatpush1.bf16.msra.mxu0 0
        %2438 = vmatprep.subr.bf16.mxu0 0
        %2439 = vmatpush1.bf16.msra.mxu0 0
        %2440 = vmatprep.mubr.bf16.mxu0 0
        %2441 = vmatmul.mubr.bf16.gmra.mrb[0].mxu0 %v732
        %v2442 = vpop.f32.mrb[0].mxu0
        %v2443 = vadd.f32 0.0, %v2442
        %v2444 = vpop.f32.mrb[0].mxu0
        %v2445 = vpop.f32.mrb[0].mxu0
        %v2446 = vadd.f32 0.0, %v2445
        %v2447 = vpop.f32.mrb[0].mxu0
        %2448 = vmatprep.mubr.bf16.mxu0 0
        %2449 = vmatmul.mubr.bf16.gmra.mrb[0].mxu0 %v735
        %v2450 = vpop.f32.mrb[0].mxu0
        %v2451 = vadd.f32 0.0, %v2450
        %v2452 = vpop.f32.mrb[0].mxu0
        %v2453 = vpop.f32.mrb[0].mxu0
        %v2454 = vadd.f32 0.0, %v2453
        %v2455 = vpop.f32.mrb[0].mxu0
        %2456 = vmatprep.mubr.bf16.mxu0 0
        %2457 = vmatmul.mubr.bf16.gmra.mrb[0].mxu0 %v738
        %v2458 = vpop.f32.mrb[0].mxu0
        %v2459 = vadd.f32 0.0, %v2458
        %v2460 = vpop.f32.mrb[0].mxu0
        %v2461 = vpop.f32.mrb[0].mxu0
        %v2462 = vadd.f32 0.0, %v2461
        %v2463 = vpop.f32.mrb[0].mxu0
        %2464 = vmatprep.mubr.bf16.mxu0 0
        %2465 = vmatmul.mubr.bf16.gmra.mrb[0].mxu0 %v741
        %v2466 = vpop.f32.mrb[0].mxu0
        %v2467 = vadd.f32 0.0, %v2466
        %v2468 = vpop.f32.mrb[0].mxu0
        %v2469 = vpop.f32.mrb[0].mxu0
        %v2470 = vadd.f32 0.0, %v2469
        %v2471 = vpop.f32.mrb[0].mxu0
        %2472 = vmatprep.mubr.bf16.mxu0 0
        %2473 = vmatmul.mubr.bf16.gmra.mrb[0].mxu0 %v744
        %v2474 = vpop.f32.mrb[0].mxu0
        %v2475 = vadd.f32 0.0, %v2474
        %v2476 = vpop.f32.mrb[0].mxu0
        %v2477 = vpop.f32.mrb[0].mxu0
        %v2478 = vadd.f32 0.0, %v2477
        %v2479 = vpop.f32.mrb[0].mxu0
        %2480 = vmatprep.mubr.bf16.mxu0 0
        %2481 = vmatmul.mubr.bf16.gmra.mrb[0].mxu0 %v747
        %v2482 = vpop.f32.mrb[0].mxu0
        %v2483 = vadd.f32 0.0, %v2482
        %v2484 = vpop.f32.mrb[0].mxu0
        %v2485 = vpop.f32.mrb[0].mxu0
        %v2486 = vadd.f32 0.0, %v2485
        %v2487 = vpop.f32.mrb[0].mxu0
        %2488 = vmatprep.mubr.bf16.mxu0 0
        %2489 = vmatmul.mubr.bf16.gmra.mrb[0].mxu0 %v750
        %v2490 = vpop.f32.mrb[0].mxu0
        %v2491 = vadd.f32 0.0, %v2490
        %v2492 = vpop.f32.mrb[0].mxu0
        %v2493 = vpop.f32.mrb[0].mxu0
        %v2494 = vadd.f32 0.0, %v2493
        %v2495 = vpop.f32.mrb[0].mxu0
        %2496 = vmatprep.mubr.bf16.mxu0 0
        %2497 = vmatmul.mubr.bf16.gmra.mrb[0].mxu0 %v753
        %v2498 = vpop.f32.mrb[0].mxu0
        %v2499 = vadd.f32 0.0, %v2498
        %v2500 = vpop.f32.mrb[0].mxu0
        %v2501 = vpop.f32.mrb[0].mxu0
        %v2502 = vadd.f32 0.0, %v2501
        %v2503 = vpop.f32.mrb[0].mxu0
        %2504 = vmatprep.mubr.bf16.mxu0 0
        %2505 = vmatmul.mubr.bf16.gmra.mrb[0].mxu0 %v756
        %v2506 = vpop.f32.mrb[0].mxu0
        %v2507 = vadd.f32 0.0, %v2506
        %v2508 = vpop.f32.mrb[0].mxu0
        %v2509 = vpop.f32.mrb[0].mxu0
        %v2510 = vadd.f32 0.0, %v2509
        %v2511 = vpop.f32.mrb[0].mxu0
        %2512 = vmatprep.mubr.bf16.mxu0 0
        %2513 = vmatmul.mubr.bf16.gmra.mrb[0].mxu0 %v759
        %v2514 = vpop.f32.mrb[0].mxu0
        %v2515 = vadd.f32 0.0, %v2514
        %v2516 = vpop.f32.mrb[0].mxu0
        %v2517 = vpop.f32.mrb[0].mxu0
        %v2518 = vadd.f32 0.0, %v2517
        %v2519 = vpop.f32.mrb[0].mxu0
        %2520 = vmatprep.mubr.bf16.mxu0 0
        %2521 = vmatmul.mubr.bf16.gmra.mrb[0].mxu0 %v762
        %v2522 = vpop.f32.mrb[0].mxu0
        %v2523 = vadd.f32 0.0, %v2522
        %v2524 = vpop.f32.mrb[0].mxu0
        %v2525 = vpop.f32.mrb[0].mxu0
        %v2526 = vadd.f32 0.0, %v2525
        %v2527 = vpop.f32.mrb[0].mxu0
        %2528 = vmatprep.mubr.bf16.mxu0 0
        %2529 = vmatmul.mubr.bf16.gmra.mrb[0].mxu0 %v765
        %v2530 = vpop.f32.mrb[0].mxu0
        %v2531 = vadd.f32 0.0, %v2530
        %v2532 = vpop.f32.mrb[0].mxu0
        %v2533 = vpop.f32.mrb[0].mxu0
        %v2534 = vadd.f32 0.0, %v2533
        %v2535 = vpop.f32.mrb[0].mxu0
        %2536 = vmatprep.mubr.bf16.mxu0 0
        %2537 = vmatmul.mubr.bf16.gmra.mrb[0].mxu0 %v768
        %v2538 = vpop.f32.mrb[0].mxu0
        %v2539 = vadd.f32 0.0, %v2538
        %v2540 = vpop.f32.mrb[0].mxu0
        %v2541 = vpop.f32.mrb[0].mxu0
        %v2542 = vadd.f32 0.0, %v2541
        %v2543 = vpop.f32.mrb[0].mxu0
        %2544 = vmatprep.mubr.bf16.mxu0 0
        %2545 = vmatmul.mubr.bf16.gmra.mrb[0].mxu0 %v771
        %v2546 = vpop.f32.mrb[0].mxu0
        %v2547 = vadd.f32 0.0, %v2546
        %v2548 = vpop.f32.mrb[0].mxu0
        %v2549 = vpop.f32.mrb[0].mxu0
        %v2550 = vadd.f32 0.0, %v2549
        %v2551 = vpop.f32.mrb[0].mxu0
        %2552 = vmatprep.mubr.bf16.mxu0 0
        %2553 = vmatmul.mubr.bf16.gmra.mrb[0].mxu0 %v774
        %v2554 = vpop.f32.mrb[0].mxu0
        %v2555 = vadd.f32 0.0, %v2554
        %v2556 = vpop.f32.mrb[0].mxu0
        %v2557 = vpop.f32.mrb[0].mxu0
        %v2558 = vadd.f32 0.0, %v2557
        %v2559 = vpop.f32.mrb[0].mxu0
        %2560 = vmatprep.mubr.bf16.mxu0 0
        %2561 = vmatmul.mubr.bf16.gmra.mrb[0].mxu0 %v777
        %v2562 = vpop.f32.mrb[0].mxu0
        %v2563 = vadd.f32 0.0, %v2562
        %v2564 = vpop.f32.mrb[0].mxu0
        %v2565 = vpop.f32.mrb[0].mxu0
        %v2566 = vadd.f32 0.0, %v2565
        %v2567 = vpop.f32.mrb[0].mxu0
        %2568 = vmatprep.mubr.bf16.mxu0 0
        %2569 = vmatmul.mubr.bf16.gmra.mrb[0].mxu0 %v780
        %v2570 = vpop.f32.mrb[0].mxu0
        %v2571 = vadd.f32 0.0, %v2570
        %v2572 = vpop.f32.mrb[0].mxu0
        %v2573 = vpop.f32.mrb[0].mxu0
        %v2574 = vadd.f32 0.0, %v2573
        %v2575 = vpop.f32.mrb[0].mxu0
        %2576 = vmatprep.mubr.bf16.mxu0 0
        %2577 = vmatmul.mubr.bf16.gmra.mrb[0].mxu0 %v783
        %v2578 = vpop.f32.mrb[0].mxu0
        %v2579 = vadd.f32 0.0, %v2578
        %v2580 = vpop.f32.mrb[0].mxu0
        %v2581 = vpop.f32.mrb[0].mxu0
        %v2582 = vadd.f32 0.0, %v2581
        %v2583 = vpop.f32.mrb[0].mxu0
        %2584 = vmatprep.mubr.bf16.mxu0 0
        %2585 = vmatmul.mubr.bf16.gmra.mrb[0].mxu0 %v786
        %v2586 = vpop.f32.mrb[0].mxu0
        %v2587 = vadd.f32 0.0, %v2586
        %v2588 = vpop.f32.mrb[0].mxu0
        %v2589 = vpop.f32.mrb[0].mxu0
        %v2590 = vadd.f32 0.0, %v2589
        %v2591 = vpop.f32.mrb[0].mxu0
        %2592 = vmatprep.mubr.bf16.mxu0 0
        %2593 = vmatmul.mubr.bf16.gmra.mrb[0].mxu0 %v789
        %v2594 = vpop.f32.mrb[0].mxu0
        %v2595 = vadd.f32 0.0, %v2594
        %v2596 = vpop.f32.mrb[0].mxu0
        %v2597 = vpop.f32.mrb[0].mxu0
        %v2598 = vadd.f32 0.0, %v2597
        %v2599 = vpop.f32.mrb[0].mxu0
        %2600 = vmatprep.mubr.bf16.mxu0 0
        %2601 = vmatmul.mubr.bf16.gmra.mrb[0].mxu0 %v792
        %v2602 = vpop.f32.mrb[0].mxu0
        %v2603 = vadd.f32 0.0, %v2602
        %v2604 = vpop.f32.mrb[0].mxu0
        %v2605 = vpop.f32.mrb[0].mxu0
        %v2606 = vadd.f32 0.0, %v2605
        %v2607 = vpop.f32.mrb[0].mxu0
        %2608 = vmatprep.mubr.bf16.mxu0 0
        %2609 = vmatmul.mubr.bf16.gmra.mrb[0].mxu0 %v795
        %v2610 = vpop.f32.mrb[0].mxu0
        %v2611 = vadd.f32 0.0, %v2610
        %v2612 = vpop.f32.mrb[0].mxu0
        %v2613 = vpop.f32.mrb[0].mxu0
        %v2614 = vadd.f32 0.0, %v2613
        %v2615 = vpop.f32.mrb[0].mxu0
        %2616 = vmatprep.mubr.bf16.mxu0 0
        %2617 = vmatmul.mubr.bf16.gmra.mrb[0].mxu0 %v798
        %v2618 = vpop.f32.mrb[0].mxu0
        %v2619 = vadd.f32 0.0, %v2618
        %v2620 = vpop.f32.mrb[0].mxu0
        %v2621 = vpop.f32.mrb[0].mxu0
        %v2622 = vadd.f32 0.0, %v2621
        %v2623 = vpop.f32.mrb[0].mxu0
        %2624 = vmatprep.mubr.bf16.mxu0 0
        %2625 = vmatmul.mubr.bf16.gmra.mrb[0].mxu0 %v801
        %v2626 = vpop.f32.mrb[0].mxu0
        %v2627 = vadd.f32 0.0, %v2626
        %v2628 = vpop.f32.mrb[0].mxu0
        %v2629 = vpop.f32.mrb[0].mxu0
        %v2630 = vadd.f32 0.0, %v2629
        %v2631 = vpop.f32.mrb[0].mxu0
        %2632 = vmatprep.mubr.bf16.mxu0 0
        %2633 = vmatmul.mubr.bf16.gmra.mrb[0].mxu0 %v804
        %v2634 = vpop.f32.mrb[0].mxu0
        %v2635 = vadd.f32 0.0, %v2634
        %v2636 = vpop.f32.mrb[0].mxu0
        %v2637 = vpop.f32.mrb[0].mxu0
        %v2638 = vadd.f32 0.0, %v2637
        %v2639 = vpop.f32.mrb[0].mxu0
        %2640 = vmatprep.mubr.bf16.mxu0 0
        %2641 = vmatmul.mubr.bf16.gmra.mrb[0].mxu0 %v807
        %v2642 = vpop.f32.mrb[0].mxu0
        %v2643 = vadd.f32 0.0, %v2642
        %v2644 = vpop.f32.mrb[0].mxu0
        %v2645 = vpop.f32.mrb[0].mxu0
        %v2646 = vadd.f32 0.0, %v2645
        %v2647 = vpop.f32.mrb[0].mxu0
        %2648 = vmatprep.mubr.bf16.mxu0 0
        %2649 = vmatmul.mubr.bf16.gmra.mrb[0].mxu0 %v810
        %v2650 = vpop.f32.mrb[0].mxu0
        %v2651 = vadd.f32 0.0, %v2650
        %v2652 = vpop.f32.mrb[0].mxu0
        %v2653 = vpop.f32.mrb[0].mxu0
        %v2654 = vadd.f32 0.0, %v2653
        %v2655 = vpop.f32.mrb[0].mxu0
        %2656 = vmatprep.mubr.bf16.mxu0 0
        %2657 = vmatmul.mubr.bf16.gmra.mrb[0].mxu0 %v813
        %v2658 = vpop.f32.mrb[0].mxu0
        %v2659 = vadd.f32 0.0, %v2658
        %v2660 = vpop.f32.mrb[0].mxu0
        %v2661 = vpop.f32.mrb[0].mxu0
        %v2662 = vadd.f32 0.0, %v2661
        %v2663 = vpop.f32.mrb[0].mxu0
        %2664 = vmatprep.mubr.bf16.mxu0 0
        %2665 = vmatmul.mubr.bf16.gmra.mrb[0].mxu0 %v816
        %v2666 = vpop.f32.mrb[0].mxu0
        %v2667 = vadd.f32 0.0, %v2666
        %v2668 = vpop.f32.mrb[0].mxu0
        %v2669 = vpop.f32.mrb[0].mxu0
        %v2670 = vadd.f32 0.0, %v2669
        %v2671 = vpop.f32.mrb[0].mxu0
        %2672 = vmatprep.mubr.bf16.mxu0 0
        %2673 = vmatmul.mubr.bf16.gmra.mrb[0].mxu0 %v2397
        %v2674 = vpop.f32.mrb[0].mxu0
        %v2675 = vadd.f32 0.0, %v2674
        %v2676 = vpop.f32.mrb[0].mxu0
        %v2677 = vpop.f32.mrb[0].mxu0
        %v2678 = vadd.f32 0.0, %v2677
        %v2679 = vpop.f32.mrb[0].mxu0
        %2680 = vmatprep.mubr.bf16.mxu0 0
        %2681 = vmatmul.mubr.bf16.gmra.mrb[0].mxu0 %v2400
        %v2682 = vpop.f32.mrb[0].mxu0
        %v2683 = vadd.f32 0.0, %v2682
        %v2684 = vpop.f32.mrb[0].mxu0
        %v2685 = vpop.f32.mrb[0].mxu0
        %v2686 = vadd.f32 0.0, %v2685
        %v2687 = vpop.f32.mrb[0].mxu0
        %2688 = vmatprep.mubr.bf16.mxu0 0
        %2689 = vmatmul.mubr.bf16.gmra.mrb[0].mxu0 %v2403
        %v2690 = vpop.f32.mrb[0].mxu0
        %v2691 = vadd.f32 0.0, %v2690
        %v2692 = vpop.f32.mrb[0].mxu0
        %v2693 = vpop.f32.mrb[0].mxu0
        %v2694 = vadd.f32 0.0, %v2693
        %v2695 = vpop.f32.mrb[0].mxu0
        %2696 = vdwg.mxu0
        %v2697 = vadd.f32 %v2309, %v2443
        %v2698 = vadd.f32 %v2310, %v2446
        %v2699 = vadd.f32 %v2311, %v2451
        %v2700 = vadd.f32 %v2312, %v2454
        %v2701 = vadd.f32 %v2313, %v2459
        %v2702 = vadd.f32 %v2314, %v2462
        %v2703 = vadd.f32 %v2315, %v2467
        %v2704 = vadd.f32 %v2316, %v2470
        %v2705 = vadd.f32 %v2317, %v2475
        %v2706 = vadd.f32 %v2318, %v2478
        %v2707 = vadd.f32 %v2319, %v2483
        %v2708 = vadd.f32 %v2320, %v2486
        %v2709 = vadd.f32 %v2321, %v2491
        %v2710 = vadd.f32 %v2322, %v2494
        %v2711 = vadd.f32 %v2323, %v2499
        %v2712 = vadd.f32 %v2324, %v2502
        %v2713 = vadd.f32 %v2325, %v2507
        %v2714 = vadd.f32 %v2326, %v2510
        %v2715 = vadd.f32 %v2327, %v2515
        %v2716 = vadd.f32 %v2328, %v2518
        %v2717 = vadd.f32 %v2329, %v2523
        %v2718 = vadd.f32 %v2330, %v2526
        %v2719 = vadd.f32 %v2331, %v2531
        %v2720 = vadd.f32 %v2332, %v2534
        %v2721 = vadd.f32 %v2333, %v2539
        %v2722 = vadd.f32 %v2334, %v2542
        %v2723 = vadd.f32 %v2335, %v2547
        %v2724 = vadd.f32 %v2336, %v2550
        %v2725 = vadd.f32 %v2337, %v2555
        %v2726 = vadd.f32 %v2338, %v2558
        %v2727 = vadd.f32 %v2339, %v2563
        %v2728 = vadd.f32 %v2340, %v2566
        %v2729 = vadd.f32 %v2341, %v2571
        %v2730 = vadd.f32 %v2342, %v2574
        %v2731 = vadd.f32 %v2343, %v2579
        %v2732 = vadd.f32 %v2344, %v2582
        %v2733 = vadd.f32 %v2345, %v2587
        %v2734 = vadd.f32 %v2346, %v2590
        %v2735 = vadd.f32 %v2347, %v2595
        %v2736 = vadd.f32 %v2348, %v2598
        %v2737 = vadd.f32 %v2349, %v2603
        %v2738 = vadd.f32 %v2350, %v2606
        %v2739 = vadd.f32 %v2351, %v2611
        %v2740 = vadd.f32 %v2352, %v2614
        %v2741 = vadd.f32 %v2353, %v2619
        %v2742 = vadd.f32 %v2354, %v2622
        %v2743 = vadd.f32 %v2355, %v2627
        %v2744 = vadd.f32 %v2356, %v2630
        %v2745 = vadd.f32 %v2357, %v2635
        %v2746 = vadd.f32 %v2358, %v2638
        %v2747 = vadd.f32 %v2359, %v2643
        %v2748 = vadd.f32 %v2360, %v2646
        %v2749 = vadd.f32 %v2361, %v2651
        %v2750 = vadd.f32 %v2362, %v2654
        %v2751 = vadd.f32 %v2363, %v2659
        %v2752 = vadd.f32 %v2364, %v2662
        %v2753 = vadd.f32 %v2365, %v2667
        %v2754 = vadd.f32 %v2366, %v2670
        %v2755 = vadd.f32 %v2367, %v2675
        %v2756 = vadd.f32 %v2368, %v2678
        %v2757 = vadd.f32 %v2369, %v2683
        %v2758 = vadd.f32 %v2370, %v2686
        %v2759 = vadd.f32 %v2371, %v2691
        %v2760 = vadd.f32 %v2372, %v2694
        %v2761 = vrot.slane %v2001, 1
        %v2762 = vsel %vm1473, %v1535, %v2761
        %v2763 = vrot.slane %v2002, 1
        %v2764 = vsel %vm1473, %v2761, %v2763
        %v2765 = vrot.slane %v2375, 1
        %v2766 = vsel %vm1473, %v2763, %v2765
        %v2768 = vunpack.c.l.b16 %v287
        %v2769 = vpack.c.b16 %v2768, %v1540
        %v2771 = vshrl.u32 %v2769, 16
        %v2773 = vrot.slane %v2771, 3
        %v2774 = vshll.u32 %v2769, 16
        %v2776 = vrot.slane %v2774, 4
        %v2777 = vor.u32 %v2773, %v2776
        %v2779 = vsel %vm724, %v2762, 0
        %v2782 = vsel %vm724, %v2764, 0
        %v2785 = vsel %vm724, %v2766, 0
        %v2788 = vand.u32 %v2777, %v824
        %2790 = vmatprep.subr.bf16.mxu0 0
        %2791 = vmatpush1.bf16.msra.mxu0 %v2788
        %2792 = vmatprep.subr.bf16.mxu0 0
        %2793 = vmatpush1.bf16.msra.mxu0 0
        %2794 = vmatprep.subr.bf16.mxu0 0
        %2795 = vmatpush1.bf16.msra.mxu0 0
        %2796 = vmatprep.subr.bf16.mxu0 0
        %2797 = vmatpush1.bf16.msra.mxu0 0
        %2798 = vmatprep.subr.bf16.mxu0 0
        %2799 = vmatpush1.bf16.msra.mxu0 0
        %2800 = vmatprep.subr.bf16.mxu0 0
        %2801 = vmatpush1.bf16.msra.mxu0 0
        %2802 = vmatprep.subr.bf16.mxu0 0
        %2803 = vmatpush1.bf16.msra.mxu0 0
        %2804 = vmatprep.subr.bf16.mxu0 0
        %2805 = vmatpush1.bf16.msra.mxu0 0
        %2806 = vmatprep.subr.bf16.mxu0 0
        %2807 = vmatpush1.bf16.msra.mxu0 0
        %2808 = vmatprep.subr.bf16.mxu0 0
        %2809 = vmatpush1.bf16.msra.mxu0 0
        %2810 = vmatprep.subr.bf16.mxu0 0
        %2811 = vmatpush1.bf16.msra.mxu0 0
        %2812 = vmatprep.subr.bf16.mxu0 0
        %2813 = vmatpush1.bf16.msra.mxu0 0
        %2814 = vmatprep.subr.bf16.mxu0 0
        %2815 = vmatpush1.bf16.msra.mxu0 0
        %2816 = vmatprep.subr.bf16.mxu0 0
        %2817 = vmatpush1.bf16.msra.mxu0 0
        %2818 = vmatprep.subr.bf16.mxu0 0
        %2819 = vmatpush1.bf16.msra.mxu0 0
        %2820 = vmatprep.subr.bf16.mxu0 0
        %2821 = vmatpush1.bf16.msra.mxu0 0
        %2822 = vmatprep.mubr.bf16.mxu0 0
        %2823 = vmatmul.mubr.bf16.gmra.mrb[0].mxu0 %v1550
        %v2824 = vpop.f32.mrb[0].mxu0
        %v2825 = vadd.f32 0.0, %v2824
        %v2826 = vpop.f32.mrb[0].mxu0
        %v2827 = vpop.f32.mrb[0].mxu0
        %v2828 = vadd.f32 0.0, %v2827
        %v2829 = vpop.f32.mrb[0].mxu0
        %2830 = vmatprep.mubr.bf16.mxu0 0
        %2831 = vmatmul.mubr.bf16.gmra.mrb[0].mxu0 %v1553
        %v2832 = vpop.f32.mrb[0].mxu0
        %v2833 = vadd.f32 0.0, %v2832
        %v2834 = vpop.f32.mrb[0].mxu0
        %v2835 = vpop.f32.mrb[0].mxu0
        %v2836 = vadd.f32 0.0, %v2835
        %v2837 = vpop.f32.mrb[0].mxu0
        %2838 = vmatprep.mubr.bf16.mxu0 0
        %2839 = vmatmul.mubr.bf16.gmra.mrb[0].mxu0 %v1556
        %v2840 = vpop.f32.mrb[0].mxu0
        %v2841 = vadd.f32 0.0, %v2840
        %v2842 = vpop.f32.mrb[0].mxu0
        %v2843 = vpop.f32.mrb[0].mxu0
        %v2844 = vadd.f32 0.0, %v2843
        %v2845 = vpop.f32.mrb[0].mxu0
        %2846 = vmatprep.mubr.bf16.mxu0 0
        %2847 = vmatmul.mubr.bf16.gmra.mrb[0].mxu0 %v1559
        %v2848 = vpop.f32.mrb[0].mxu0
        %v2849 = vadd.f32 0.0, %v2848
        %v2850 = vpop.f32.mrb[0].mxu0
        %v2851 = vpop.f32.mrb[0].mxu0
        %v2852 = vadd.f32 0.0, %v2851
        %v2853 = vpop.f32.mrb[0].mxu0
        %2854 = vmatprep.mubr.bf16.mxu0 0
        %2855 = vmatmul.mubr.bf16.gmra.mrb[0].mxu0 %v1562
        %v2856 = vpop.f32.mrb[0].mxu0
        %v2857 = vadd.f32 0.0, %v2856
        %v2858 = vpop.f32.mrb[0].mxu0
        %v2859 = vpop.f32.mrb[0].mxu0
        %v2860 = vadd.f32 0.0, %v2859
        %v2861 = vpop.f32.mrb[0].mxu0
        %2862 = vmatprep.mubr.bf16.mxu0 0
        %2863 = vmatmul.mubr.bf16.gmra.mrb[0].mxu0 %v1565
        %v2864 = vpop.f32.mrb[0].mxu0
        %v2865 = vadd.f32 0.0, %v2864
        %v2866 = vpop.f32.mrb[0].mxu0
        %v2867 = vpop.f32.mrb[0].mxu0
        %v2868 = vadd.f32 0.0, %v2867
        %v2869 = vpop.f32.mrb[0].mxu0
        %2870 = vmatprep.mubr.bf16.mxu0 0
        %2871 = vmatmul.mubr.bf16.gmra.mrb[0].mxu0 %v1568
        %v2872 = vpop.f32.mrb[0].mxu0
        %v2873 = vadd.f32 0.0, %v2872
        %v2874 = vpop.f32.mrb[0].mxu0
        %v2875 = vpop.f32.mrb[0].mxu0
        %v2876 = vadd.f32 0.0, %v2875
        %v2877 = vpop.f32.mrb[0].mxu0
        %2878 = vmatprep.mubr.bf16.mxu0 0
        %2879 = vmatmul.mubr.bf16.gmra.mrb[0].mxu0 %v1571
        %v2880 = vpop.f32.mrb[0].mxu0
        %v2881 = vadd.f32 0.0, %v2880
        %v2882 = vpop.f32.mrb[0].mxu0
        %v2883 = vpop.f32.mrb[0].mxu0
        %v2884 = vadd.f32 0.0, %v2883
        %v2885 = vpop.f32.mrb[0].mxu0
        %2886 = vmatprep.mubr.bf16.mxu0 0
        %2887 = vmatmul.mubr.bf16.gmra.mrb[0].mxu0 %v1574
        %v2888 = vpop.f32.mrb[0].mxu0
        %v2889 = vadd.f32 0.0, %v2888
        %v2890 = vpop.f32.mrb[0].mxu0
        %v2891 = vpop.f32.mrb[0].mxu0
        %v2892 = vadd.f32 0.0, %v2891
        %v2893 = vpop.f32.mrb[0].mxu0
        %2894 = vmatprep.mubr.bf16.mxu0 0
        %2895 = vmatmul.mubr.bf16.gmra.mrb[0].mxu0 %v1577
        %v2896 = vpop.f32.mrb[0].mxu0
        %v2897 = vadd.f32 0.0, %v2896
        %v2898 = vpop.f32.mrb[0].mxu0
        %v2899 = vpop.f32.mrb[0].mxu0
        %v2900 = vadd.f32 0.0, %v2899
        %v2901 = vpop.f32.mrb[0].mxu0
        %2902 = vmatprep.mubr.bf16.mxu0 0
        %2903 = vmatmul.mubr.bf16.gmra.mrb[0].mxu0 %v1580
        %v2904 = vpop.f32.mrb[0].mxu0
        %v2905 = vadd.f32 0.0, %v2904
        %v2906 = vpop.f32.mrb[0].mxu0
        %v2907 = vpop.f32.mrb[0].mxu0
        %v2908 = vadd.f32 0.0, %v2907
        %v2909 = vpop.f32.mrb[0].mxu0
        %2910 = vmatprep.mubr.bf16.mxu0 0
        %2911 = vmatmul.mubr.bf16.gmra.mrb[0].mxu0 %v1583
        %v2912 = vpop.f32.mrb[0].mxu0
        %v2913 = vadd.f32 0.0, %v2912
        %v2914 = vpop.f32.mrb[0].mxu0
        %v2915 = vpop.f32.mrb[0].mxu0
        %v2916 = vadd.f32 0.0, %v2915
        %v2917 = vpop.f32.mrb[0].mxu0
        %2918 = vmatprep.mubr.bf16.mxu0 0
        %2919 = vmatmul.mubr.bf16.gmra.mrb[0].mxu0 %v1586
        %v2920 = vpop.f32.mrb[0].mxu0
        %v2921 = vadd.f32 0.0, %v2920
        %v2922 = vpop.f32.mrb[0].mxu0
        %v2923 = vpop.f32.mrb[0].mxu0
        %v2924 = vadd.f32 0.0, %v2923
        %v2925 = vpop.f32.mrb[0].mxu0
        %2926 = vmatprep.mubr.bf16.mxu0 0
        %2927 = vmatmul.mubr.bf16.gmra.mrb[0].mxu0 %v1589
        %v2928 = vpop.f32.mrb[0].mxu0
        %v2929 = vadd.f32 0.0, %v2928
        %v2930 = vpop.f32.mrb[0].mxu0
        %v2931 = vpop.f32.mrb[0].mxu0
        %v2932 = vadd.f32 0.0, %v2931
        %v2933 = vpop.f32.mrb[0].mxu0
        %2934 = vmatprep.mubr.bf16.mxu0 0
        %2935 = vmatmul.mubr.bf16.gmra.mrb[0].mxu0 %v1592
        %v2936 = vpop.f32.mrb[0].mxu0
        %v2937 = vadd.f32 0.0, %v2936
        %v2938 = vpop.f32.mrb[0].mxu0
        %v2939 = vpop.f32.mrb[0].mxu0
        %v2940 = vadd.f32 0.0, %v2939
        %v2941 = vpop.f32.mrb[0].mxu0
        %2942 = vmatprep.mubr.bf16.mxu0 0
        %2943 = vmatmul.mubr.bf16.gmra.mrb[0].mxu0 %v1595
        %v2944 = vpop.f32.mrb[0].mxu0
        %v2945 = vadd.f32 0.0, %v2944
        %v2946 = vpop.f32.mrb[0].mxu0
        %v2947 = vpop.f32.mrb[0].mxu0
        %v2948 = vadd.f32 0.0, %v2947
        %v2949 = vpop.f32.mrb[0].mxu0
        %2950 = vmatprep.mubr.bf16.mxu0 0
        %2951 = vmatmul.mubr.bf16.gmra.mrb[0].mxu0 %v1598
        %v2952 = vpop.f32.mrb[0].mxu0
        %v2953 = vadd.f32 0.0, %v2952
        %v2954 = vpop.f32.mrb[0].mxu0
        %v2955 = vpop.f32.mrb[0].mxu0
        %v2956 = vadd.f32 0.0, %v2955
        %v2957 = vpop.f32.mrb[0].mxu0
        %2958 = vmatprep.mubr.bf16.mxu0 0
        %2959 = vmatmul.mubr.bf16.gmra.mrb[0].mxu0 %v1601
        %v2960 = vpop.f32.mrb[0].mxu0
        %v2961 = vadd.f32 0.0, %v2960
        %v2962 = vpop.f32.mrb[0].mxu0
        %v2963 = vpop.f32.mrb[0].mxu0
        %v2964 = vadd.f32 0.0, %v2963
        %v2965 = vpop.f32.mrb[0].mxu0
        %2966 = vmatprep.mubr.bf16.mxu0 0
        %2967 = vmatmul.mubr.bf16.gmra.mrb[0].mxu0 %v1604
        %v2968 = vpop.f32.mrb[0].mxu0
        %v2969 = vadd.f32 0.0, %v2968
        %v2970 = vpop.f32.mrb[0].mxu0
        %v2971 = vpop.f32.mrb[0].mxu0
        %v2972 = vadd.f32 0.0, %v2971
        %v2973 = vpop.f32.mrb[0].mxu0
        %2974 = vmatprep.mubr.bf16.mxu0 0
        %2975 = vmatmul.mubr.bf16.gmra.mrb[0].mxu0 %v1607
        %v2976 = vpop.f32.mrb[0].mxu0
        %v2977 = vadd.f32 0.0, %v2976
        %v2978 = vpop.f32.mrb[0].mxu0
        %v2979 = vpop.f32.mrb[0].mxu0
        %v2980 = vadd.f32 0.0, %v2979
        %v2981 = vpop.f32.mrb[0].mxu0
        %2982 = vmatprep.mubr.bf16.mxu0 0
        %2983 = vmatmul.mubr.bf16.gmra.mrb[0].mxu0 %v1610
        %v2984 = vpop.f32.mrb[0].mxu0
        %v2985 = vadd.f32 0.0, %v2984
        %v2986 = vpop.f32.mrb[0].mxu0
        %v2987 = vpop.f32.mrb[0].mxu0
        %v2988 = vadd.f32 0.0, %v2987
        %v2989 = vpop.f32.mrb[0].mxu0
        %2990 = vmatprep.mubr.bf16.mxu0 0
        %2991 = vmatmul.mubr.bf16.gmra.mrb[0].mxu0 %v1613
        %v2992 = vpop.f32.mrb[0].mxu0
        %v2993 = vadd.f32 0.0, %v2992
        %v2994 = vpop.f32.mrb[0].mxu0
        %v2995 = vpop.f32.mrb[0].mxu0
        %v2996 = vadd.f32 0.0, %v2995
        %v2997 = vpop.f32.mrb[0].mxu0
        %2998 = vmatprep.mubr.bf16.mxu0 0
        %2999 = vmatmul.mubr.bf16.gmra.mrb[0].mxu0 %v1616
        %v3000 = vpop.f32.mrb[0].mxu0
        %v3001 = vadd.f32 0.0, %v3000
        %v3002 = vpop.f32.mrb[0].mxu0
        %v3003 = vpop.f32.mrb[0].mxu0
        %v3004 = vadd.f32 0.0, %v3003
        %v3005 = vpop.f32.mrb[0].mxu0
        %3006 = vmatprep.mubr.bf16.mxu0 0
        %3007 = vmatmul.mubr.bf16.gmra.mrb[0].mxu0 %v1619
        %v3008 = vpop.f32.mrb[0].mxu0
        %v3009 = vadd.f32 0.0, %v3008
        %v3010 = vpop.f32.mrb[0].mxu0
        %v3011 = vpop.f32.mrb[0].mxu0
        %v3012 = vadd.f32 0.0, %v3011
        %v3013 = vpop.f32.mrb[0].mxu0
        %3014 = vmatprep.mubr.bf16.mxu0 0
        %3015 = vmatmul.mubr.bf16.gmra.mrb[0].mxu0 %v1622
        %v3016 = vpop.f32.mrb[0].mxu0
        %v3017 = vadd.f32 0.0, %v3016
        %v3018 = vpop.f32.mrb[0].mxu0
        %v3019 = vpop.f32.mrb[0].mxu0
        %v3020 = vadd.f32 0.0, %v3019
        %v3021 = vpop.f32.mrb[0].mxu0
        %3022 = vmatprep.mubr.bf16.mxu0 0
        %3023 = vmatmul.mubr.bf16.gmra.mrb[0].mxu0 %v1625
        %v3024 = vpop.f32.mrb[0].mxu0
        %v3025 = vadd.f32 0.0, %v3024
        %v3026 = vpop.f32.mrb[0].mxu0
        %v3027 = vpop.f32.mrb[0].mxu0
        %v3028 = vadd.f32 0.0, %v3027
        %v3029 = vpop.f32.mrb[0].mxu0
        %3030 = vmatprep.mubr.bf16.mxu0 0
        %3031 = vmatmul.mubr.bf16.gmra.mrb[0].mxu0 %v1628
        %v3032 = vpop.f32.mrb[0].mxu0
        %v3033 = vadd.f32 0.0, %v3032
        %v3034 = vpop.f32.mrb[0].mxu0
        %v3035 = vpop.f32.mrb[0].mxu0
        %v3036 = vadd.f32 0.0, %v3035
        %v3037 = vpop.f32.mrb[0].mxu0
        %3038 = vmatprep.mubr.bf16.mxu0 0
        %3039 = vmatmul.mubr.bf16.gmra.mrb[0].mxu0 %v1631
        %v3040 = vpop.f32.mrb[0].mxu0
        %v3041 = vadd.f32 0.0, %v3040
        %v3042 = vpop.f32.mrb[0].mxu0
        %v3043 = vpop.f32.mrb[0].mxu0
        %v3044 = vadd.f32 0.0, %v3043
        %v3045 = vpop.f32.mrb[0].mxu0
        %3046 = vmatprep.mubr.bf16.mxu0 0
        %3047 = vmatmul.mubr.bf16.gmra.mrb[0].mxu0 %v1634
        %v3048 = vpop.f32.mrb[0].mxu0
        %v3049 = vadd.f32 0.0, %v3048
        %v3050 = vpop.f32.mrb[0].mxu0
        %v3051 = vpop.f32.mrb[0].mxu0
        %v3052 = vadd.f32 0.0, %v3051
        %v3053 = vpop.f32.mrb[0].mxu0
        %3054 = vmatprep.mubr.bf16.mxu0 0
        %3055 = vmatmul.mubr.bf16.gmra.mrb[0].mxu0 %v2779
        %v3056 = vpop.f32.mrb[0].mxu0
        %v3057 = vadd.f32 0.0, %v3056
        %v3058 = vpop.f32.mrb[0].mxu0
        %v3059 = vpop.f32.mrb[0].mxu0
        %v3060 = vadd.f32 0.0, %v3059
        %v3061 = vpop.f32.mrb[0].mxu0
        %3062 = vmatprep.mubr.bf16.mxu0 0
        %3063 = vmatmul.mubr.bf16.gmra.mrb[0].mxu0 %v2782
        %v3064 = vpop.f32.mrb[0].mxu0
        %v3065 = vadd.f32 0.0, %v3064
        %v3066 = vpop.f32.mrb[0].mxu0
        %v3067 = vpop.f32.mrb[0].mxu0
        %v3068 = vadd.f32 0.0, %v3067
        %v3069 = vpop.f32.mrb[0].mxu0
        %3070 = vmatprep.mubr.bf16.mxu0 0
        %3071 = vmatmul.mubr.bf16.gmra.mrb[0].mxu0 %v2785
        %v3072 = vpop.f32.mrb[0].mxu0
        %v3073 = vadd.f32 0.0, %v3072
        %v3074 = vpop.f32.mrb[0].mxu0
        %v3075 = vpop.f32.mrb[0].mxu0
        %v3076 = vadd.f32 0.0, %v3075
        %v3077 = vpop.f32.mrb[0].mxu0
        %3078 = vdwg.mxu0
        %v3079 = vadd.f32 %v2697, %v2825
        %v3080 = vadd.f32 %v2698, %v2828
        %v3081 = vadd.f32 %v2699, %v2833
        %v3082 = vadd.f32 %v2700, %v2836
        %v3083 = vadd.f32 %v2701, %v2841
        %v3084 = vadd.f32 %v2702, %v2844
        %v3085 = vadd.f32 %v2703, %v2849
        %v3086 = vadd.f32 %v2704, %v2852
        %v3087 = vadd.f32 %v2705, %v2857
        %v3088 = vadd.f32 %v2706, %v2860
        %v3089 = vadd.f32 %v2707, %v2865
        %v3090 = vadd.f32 %v2708, %v2868
        %v3091 = vadd.f32 %v2709, %v2873
        %v3092 = vadd.f32 %v2710, %v2876
        %v3093 = vadd.f32 %v2711, %v2881
        %v3094 = vadd.f32 %v2712, %v2884
        %v3095 = vadd.f32 %v2713, %v2889
        %v3096 = vadd.f32 %v2714, %v2892
        %v3097 = vadd.f32 %v2715, %v2897
        %v3098 = vadd.f32 %v2716, %v2900
        %v3099 = vadd.f32 %v2717, %v2905
        %v3100 = vadd.f32 %v2718, %v2908
        %v3101 = vadd.f32 %v2719, %v2913
        %v3102 = vadd.f32 %v2720, %v2916
        %v3103 = vadd.f32 %v2721, %v2921
        %v3104 = vadd.f32 %v2722, %v2924
        %v3105 = vadd.f32 %v2723, %v2929
        %v3106 = vadd.f32 %v2724, %v2932
        %v3107 = vadd.f32 %v2725, %v2937
        %v3108 = vadd.f32 %v2726, %v2940
        %v3109 = vadd.f32 %v2727, %v2945
        %v3110 = vadd.f32 %v2728, %v2948
        %v3111 = vadd.f32 %v2729, %v2953
        %v3112 = vadd.f32 %v2730, %v2956
        %v3113 = vadd.f32 %v2731, %v2961
        %v3114 = vadd.f32 %v2732, %v2964
        %v3115 = vadd.f32 %v2733, %v2969
        %v3116 = vadd.f32 %v2734, %v2972
        %v3117 = vadd.f32 %v2735, %v2977
        %v3118 = vadd.f32 %v2736, %v2980
        %v3119 = vadd.f32 %v2737, %v2985
        %v3120 = vadd.f32 %v2738, %v2988
        %v3121 = vadd.f32 %v2739, %v2993
        %v3122 = vadd.f32 %v2740, %v2996
        %v3123 = vadd.f32 %v2741, %v3001
        %v3124 = vadd.f32 %v2742, %v3004
        %v3125 = vadd.f32 %v2743, %v3009
        %v3126 = vadd.f32 %v2744, %v3012
        %v3127 = vadd.f32 %v2745, %v3017
        %v3128 = vadd.f32 %v2746, %v3020
        %v3129 = vadd.f32 %v2747, %v3025
        %v3130 = vadd.f32 %v2748, %v3028
        %v3131 = vadd.f32 %v2749, %v3033
        %v3132 = vadd.f32 %v2750, %v3036
        %v3133 = vadd.f32 %v2751, %v3041
        %v3134 = vadd.f32 %v2752, %v3044
        %v3135 = vadd.f32 %v2753, %v3049
        %v3136 = vadd.f32 %v2754, %v3052
        %v3137 = vadd.f32 %v2755, %v3057
        %v3138 = vadd.f32 %v2756, %v3060
        %v3139 = vadd.f32 %v2757, %v3065
        %v3140 = vadd.f32 %v2758, %v3068
        %v3141 = vadd.f32 %v2759, %v3073
        %v3142 = vadd.f32 %v2760, %v3076
        %v3146 = vunpack.c.l.b16 %v281
        %v3147 = vunpack.c.l.b16 %v282
        %v3148 = vunpack.c.l.b16 %v283
        %v3149 = vpack.c.b16 %v3146, %v2374
        %v3150 = vpack.c.b16 %v3148, %v3147
        %v3151 = vpack.c.b16 %v2768, %v2768
        %v3152 = vrot.slane %v3151, 1
        %v3154 = vsel %vm724, %v3149, 0
        %v3157 = vsel %vm724, %v3150, 0
        %v3160 = vand.u32 %v3152, %v824
        %3162 = vmatprep.subr.bf16.mxu0 0
        %3163 = vmatpush1.bf16.msra.mxu0 %v3160
        %3164 = vmatprep.subr.bf16.mxu0 0
        %3165 = vmatpush1.bf16.msra.mxu0 0
        %3166 = vmatprep.subr.bf16.mxu0 0
        %3167 = vmatpush1.bf16.msra.mxu0 0
        %3168 = vmatprep.subr.bf16.mxu0 0
        %3169 = vmatpush1.bf16.msra.mxu0 0
        %3170 = vmatprep.subr.bf16.mxu0 0
        %3171 = vmatpush1.bf16.msra.mxu0 0
        %3172 = vmatprep.subr.bf16.mxu0 0
        %3173 = vmatpush1.bf16.msra.mxu0 0
        %3174 = vmatprep.subr.bf16.mxu0 0
        %3175 = vmatpush1.bf16.msra.mxu0 0
        %3176 = vmatprep.subr.bf16.mxu0 0
        %3177 = vmatpush1.bf16.msra.mxu0 0
        %3178 = vmatprep.subr.bf16.mxu0 0
        %3179 = vmatpush1.bf16.msra.mxu0 0
        %3180 = vmatprep.subr.bf16.mxu0 0
        %3181 = vmatpush1.bf16.msra.mxu0 0
        %3182 = vmatprep.subr.bf16.mxu0 0
        %3183 = vmatpush1.bf16.msra.mxu0 0
        %3184 = vmatprep.subr.bf16.mxu0 0
        %3185 = vmatpush1.bf16.msra.mxu0 0
        %3186 = vmatprep.subr.bf16.mxu0 0
        %3187 = vmatpush1.bf16.msra.mxu0 0
        %3188 = vmatprep.subr.bf16.mxu0 0
        %3189 = vmatpush1.bf16.msra.mxu0 0
        %3190 = vmatprep.subr.bf16.mxu0 0
        %3191 = vmatpush1.bf16.msra.mxu0 0
        %3192 = vmatprep.subr.bf16.mxu0 0
        %3193 = vmatpush1.bf16.msra.mxu0 0
        %3194 = vmatprep.mubr.bf16.mxu0 0
        %3195 = vmatmul.mubr.bf16.gmra.mrb[0].mxu0 %v1125
        %v3196 = vpop.f32.mrb[0].mxu0
        %v3197 = vadd.f32 0.0, %v3196
        %v3198 = vpop.f32.mrb[0].mxu0
        %v3199 = vpop.f32.mrb[0].mxu0
        %v3200 = vadd.f32 0.0, %v3199
        %v3201 = vpop.f32.mrb[0].mxu0
        %3202 = vmatprep.mubr.bf16.mxu0 0
        %3203 = vmatmul.mubr.bf16.gmra.mrb[0].mxu0 %v1127
        %v3204 = vpop.f32.mrb[0].mxu0
        %v3205 = vadd.f32 0.0, %v3204
        %v3206 = vpop.f32.mrb[0].mxu0
        %v3207 = vpop.f32.mrb[0].mxu0
        %v3208 = vadd.f32 0.0, %v3207
        %v3209 = vpop.f32.mrb[0].mxu0
        %3210 = vmatprep.mubr.bf16.mxu0 0
        %3211 = vmatmul.mubr.bf16.gmra.mrb[0].mxu0 %v1129
        %v3212 = vpop.f32.mrb[0].mxu0
        %v3213 = vadd.f32 0.0, %v3212
        %v3214 = vpop.f32.mrb[0].mxu0
        %v3215 = vpop.f32.mrb[0].mxu0
        %v3216 = vadd.f32 0.0, %v3215
        %v3217 = vpop.f32.mrb[0].mxu0
        %3218 = vmatprep.mubr.bf16.mxu0 0
        %3219 = vmatmul.mubr.bf16.gmra.mrb[0].mxu0 %v1131
        %v3220 = vpop.f32.mrb[0].mxu0
        %v3221 = vadd.f32 0.0, %v3220
        %v3222 = vpop.f32.mrb[0].mxu0
        %v3223 = vpop.f32.mrb[0].mxu0
        %v3224 = vadd.f32 0.0, %v3223
        %v3225 = vpop.f32.mrb[0].mxu0
        %3226 = vmatprep.mubr.bf16.mxu0 0
        %3227 = vmatmul.mubr.bf16.gmra.mrb[0].mxu0 %v1133
        %v3228 = vpop.f32.mrb[0].mxu0
        %v3229 = vadd.f32 0.0, %v3228
        %v3230 = vpop.f32.mrb[0].mxu0
        %v3231 = vpop.f32.mrb[0].mxu0
        %v3232 = vadd.f32 0.0, %v3231
        %v3233 = vpop.f32.mrb[0].mxu0
        %3234 = vmatprep.mubr.bf16.mxu0 0
        %3235 = vmatmul.mubr.bf16.gmra.mrb[0].mxu0 %v1135
        %v3236 = vpop.f32.mrb[0].mxu0
        %v3237 = vadd.f32 0.0, %v3236
        %v3238 = vpop.f32.mrb[0].mxu0
        %v3239 = vpop.f32.mrb[0].mxu0
        %v3240 = vadd.f32 0.0, %v3239
        %v3241 = vpop.f32.mrb[0].mxu0
        %3242 = vmatprep.mubr.bf16.mxu0 0
        %3243 = vmatmul.mubr.bf16.gmra.mrb[0].mxu0 %v1137
        %v3244 = vpop.f32.mrb[0].mxu0
        %v3245 = vadd.f32 0.0, %v3244
        %v3246 = vpop.f32.mrb[0].mxu0
        %v3247 = vpop.f32.mrb[0].mxu0
        %v3248 = vadd.f32 0.0, %v3247
        %v3249 = vpop.f32.mrb[0].mxu0
        %3250 = vmatprep.mubr.bf16.mxu0 0
        %3251 = vmatmul.mubr.bf16.gmra.mrb[0].mxu0 %v1139
        %v3252 = vpop.f32.mrb[0].mxu0
        %v3253 = vadd.f32 0.0, %v3252
        %v3254 = vpop.f32.mrb[0].mxu0
        %v3255 = vpop.f32.mrb[0].mxu0
        %v3256 = vadd.f32 0.0, %v3255
        %v3257 = vpop.f32.mrb[0].mxu0
        %3258 = vmatprep.mubr.bf16.mxu0 0
        %3259 = vmatmul.mubr.bf16.gmra.mrb[0].mxu0 %v1141
        %v3260 = vpop.f32.mrb[0].mxu0
        %v3261 = vadd.f32 0.0, %v3260
        %v3262 = vpop.f32.mrb[0].mxu0
        %v3263 = vpop.f32.mrb[0].mxu0
        %v3264 = vadd.f32 0.0, %v3263
        %v3265 = vpop.f32.mrb[0].mxu0
        %3266 = vmatprep.mubr.bf16.mxu0 0
        %3267 = vmatmul.mubr.bf16.gmra.mrb[0].mxu0 %v1143
        %v3268 = vpop.f32.mrb[0].mxu0
        %v3269 = vadd.f32 0.0, %v3268
        %v3270 = vpop.f32.mrb[0].mxu0
        %v3271 = vpop.f32.mrb[0].mxu0
        %v3272 = vadd.f32 0.0, %v3271
        %v3273 = vpop.f32.mrb[0].mxu0
        %3274 = vmatprep.mubr.bf16.mxu0 0
        %3275 = vmatmul.mubr.bf16.gmra.mrb[0].mxu0 %v1145
        %v3276 = vpop.f32.mrb[0].mxu0
        %v3277 = vadd.f32 0.0, %v3276
        %v3278 = vpop.f32.mrb[0].mxu0
        %v3279 = vpop.f32.mrb[0].mxu0
        %v3280 = vadd.f32 0.0, %v3279
        %v3281 = vpop.f32.mrb[0].mxu0
        %3282 = vmatprep.mubr.bf16.mxu0 0
        %3283 = vmatmul.mubr.bf16.gmra.mrb[0].mxu0 %v1147
        %v3284 = vpop.f32.mrb[0].mxu0
        %v3285 = vadd.f32 0.0, %v3284
        %v3286 = vpop.f32.mrb[0].mxu0
        %v3287 = vpop.f32.mrb[0].mxu0
        %v3288 = vadd.f32 0.0, %v3287
        %v3289 = vpop.f32.mrb[0].mxu0
        %3290 = vmatprep.mubr.bf16.mxu0 0
        %3291 = vmatmul.mubr.bf16.gmra.mrb[0].mxu0 %v1149
        %v3292 = vpop.f32.mrb[0].mxu0
        %v3293 = vadd.f32 0.0, %v3292
        %v3294 = vpop.f32.mrb[0].mxu0
        %v3295 = vpop.f32.mrb[0].mxu0
        %v3296 = vadd.f32 0.0, %v3295
        %v3297 = vpop.f32.mrb[0].mxu0
        %3298 = vmatprep.mubr.bf16.mxu0 0
        %3299 = vmatmul.mubr.bf16.gmra.mrb[0].mxu0 %v1151
        %v3300 = vpop.f32.mrb[0].mxu0
        %v3301 = vadd.f32 0.0, %v3300
        %v3302 = vpop.f32.mrb[0].mxu0
        %v3303 = vpop.f32.mrb[0].mxu0
        %v3304 = vadd.f32 0.0, %v3303
        %v3305 = vpop.f32.mrb[0].mxu0
        %3306 = vmatprep.mubr.bf16.mxu0 0
        %3307 = vmatmul.mubr.bf16.gmra.mrb[0].mxu0 %v1153
        %v3308 = vpop.f32.mrb[0].mxu0
        %v3309 = vadd.f32 0.0, %v3308
        %v3310 = vpop.f32.mrb[0].mxu0
        %v3311 = vpop.f32.mrb[0].mxu0
        %v3312 = vadd.f32 0.0, %v3311
        %v3313 = vpop.f32.mrb[0].mxu0
        %3314 = vmatprep.mubr.bf16.mxu0 0
        %3315 = vmatmul.mubr.bf16.gmra.mrb[0].mxu0 %v1155
        %v3316 = vpop.f32.mrb[0].mxu0
        %v3317 = vadd.f32 0.0, %v3316
        %v3318 = vpop.f32.mrb[0].mxu0
        %v3319 = vpop.f32.mrb[0].mxu0
        %v3320 = vadd.f32 0.0, %v3319
        %v3321 = vpop.f32.mrb[0].mxu0
        %3322 = vmatprep.mubr.bf16.mxu0 0
        %3323 = vmatmul.mubr.bf16.gmra.mrb[0].mxu0 %v1157
        %v3324 = vpop.f32.mrb[0].mxu0
        %v3325 = vadd.f32 0.0, %v3324
        %v3326 = vpop.f32.mrb[0].mxu0
        %v3327 = vpop.f32.mrb[0].mxu0
        %v3328 = vadd.f32 0.0, %v3327
        %v3329 = vpop.f32.mrb[0].mxu0
        %3330 = vmatprep.mubr.bf16.mxu0 0
        %3331 = vmatmul.mubr.bf16.gmra.mrb[0].mxu0 %v1159
        %v3332 = vpop.f32.mrb[0].mxu0
        %v3333 = vadd.f32 0.0, %v3332
        %v3334 = vpop.f32.mrb[0].mxu0
        %v3335 = vpop.f32.mrb[0].mxu0
        %v3336 = vadd.f32 0.0, %v3335
        %v3337 = vpop.f32.mrb[0].mxu0
        %3338 = vmatprep.mubr.bf16.mxu0 0
        %3339 = vmatmul.mubr.bf16.gmra.mrb[0].mxu0 %v1161
        %v3340 = vpop.f32.mrb[0].mxu0
        %v3341 = vadd.f32 0.0, %v3340
        %v3342 = vpop.f32.mrb[0].mxu0
        %v3343 = vpop.f32.mrb[0].mxu0
        %v3344 = vadd.f32 0.0, %v3343
        %v3345 = vpop.f32.mrb[0].mxu0
        %3346 = vmatprep.mubr.bf16.mxu0 0
        %3347 = vmatmul.mubr.bf16.gmra.mrb[0].mxu0 %v1163
        %v3348 = vpop.f32.mrb[0].mxu0
        %v3349 = vadd.f32 0.0, %v3348
        %v3350 = vpop.f32.mrb[0].mxu0
        %v3351 = vpop.f32.mrb[0].mxu0
        %v3352 = vadd.f32 0.0, %v3351
        %v3353 = vpop.f32.mrb[0].mxu0
        %3354 = vmatprep.mubr.bf16.mxu0 0
        %3355 = vmatmul.mubr.bf16.gmra.mrb[0].mxu0 %v1165
        %v3356 = vpop.f32.mrb[0].mxu0
        %v3357 = vadd.f32 0.0, %v3356
        %v3358 = vpop.f32.mrb[0].mxu0
        %v3359 = vpop.f32.mrb[0].mxu0
        %v3360 = vadd.f32 0.0, %v3359
        %v3361 = vpop.f32.mrb[0].mxu0
        %3362 = vmatprep.mubr.bf16.mxu0 0
        %3363 = vmatmul.mubr.bf16.gmra.mrb[0].mxu0 %v1167
        %v3364 = vpop.f32.mrb[0].mxu0
        %v3365 = vadd.f32 0.0, %v3364
        %v3366 = vpop.f32.mrb[0].mxu0
        %v3367 = vpop.f32.mrb[0].mxu0
        %v3368 = vadd.f32 0.0, %v3367
        %v3369 = vpop.f32.mrb[0].mxu0
        %3370 = vmatprep.mubr.bf16.mxu0 0
        %3371 = vmatmul.mubr.bf16.gmra.mrb[0].mxu0 %v1169
        %v3372 = vpop.f32.mrb[0].mxu0
        %v3373 = vadd.f32 0.0, %v3372
        %v3374 = vpop.f32.mrb[0].mxu0
        %v3375 = vpop.f32.mrb[0].mxu0
        %v3376 = vadd.f32 0.0, %v3375
        %v3377 = vpop.f32.mrb[0].mxu0
        %3378 = vmatprep.mubr.bf16.mxu0 0
        %3379 = vmatmul.mubr.bf16.gmra.mrb[0].mxu0 %v1171
        %v3380 = vpop.f32.mrb[0].mxu0
        %v3381 = vadd.f32 0.0, %v3380
        %v3382 = vpop.f32.mrb[0].mxu0
        %v3383 = vpop.f32.mrb[0].mxu0
        %v3384 = vadd.f32 0.0, %v3383
        %v3385 = vpop.f32.mrb[0].mxu0
        %3386 = vmatprep.mubr.bf16.mxu0 0
        %3387 = vmatmul.mubr.bf16.gmra.mrb[0].mxu0 %v1173
        %v3388 = vpop.f32.mrb[0].mxu0
        %v3389 = vadd.f32 0.0, %v3388
        %v3390 = vpop.f32.mrb[0].mxu0
        %v3391 = vpop.f32.mrb[0].mxu0
        %v3392 = vadd.f32 0.0, %v3391
        %v3393 = vpop.f32.mrb[0].mxu0
        %3394 = vmatprep.mubr.bf16.mxu0 0
        %3395 = vmatmul.mubr.bf16.gmra.mrb[0].mxu0 %v1175
        %v3396 = vpop.f32.mrb[0].mxu0
        %v3397 = vadd.f32 0.0, %v3396
        %v3398 = vpop.f32.mrb[0].mxu0
        %v3399 = vpop.f32.mrb[0].mxu0
        %v3400 = vadd.f32 0.0, %v3399
        %v3401 = vpop.f32.mrb[0].mxu0
        %3402 = vmatprep.mubr.bf16.mxu0 0
        %3403 = vmatmul.mubr.bf16.gmra.mrb[0].mxu0 %v1177
        %v3404 = vpop.f32.mrb[0].mxu0
        %v3405 = vadd.f32 0.0, %v3404
        %v3406 = vpop.f32.mrb[0].mxu0
        %v3407 = vpop.f32.mrb[0].mxu0
        %v3408 = vadd.f32 0.0, %v3407
        %v3409 = vpop.f32.mrb[0].mxu0
        %3410 = vmatprep.mubr.bf16.mxu0 0
        %3411 = vmatmul.mubr.bf16.gmra.mrb[0].mxu0 %v1179
        %v3412 = vpop.f32.mrb[0].mxu0
        %v3413 = vadd.f32 0.0, %v3412
        %v3414 = vpop.f32.mrb[0].mxu0
        %v3415 = vpop.f32.mrb[0].mxu0
        %v3416 = vadd.f32 0.0, %v3415
        %v3417 = vpop.f32.mrb[0].mxu0
        %3418 = vmatprep.mubr.bf16.mxu0 0
        %3419 = vmatmul.mubr.bf16.gmra.mrb[0].mxu0 %v2012
        %v3420 = vpop.f32.mrb[0].mxu0
        %v3421 = vadd.f32 0.0, %v3420
        %v3422 = vpop.f32.mrb[0].mxu0
        %v3423 = vpop.f32.mrb[0].mxu0
        %v3424 = vadd.f32 0.0, %v3423
        %v3425 = vpop.f32.mrb[0].mxu0
        %3426 = vmatprep.mubr.bf16.mxu0 0
        %3427 = vmatmul.mubr.bf16.gmra.mrb[0].mxu0 %v2015
        %v3428 = vpop.f32.mrb[0].mxu0
        %v3429 = vadd.f32 0.0, %v3428
        %v3430 = vpop.f32.mrb[0].mxu0
        %v3431 = vpop.f32.mrb[0].mxu0
        %v3432 = vadd.f32 0.0, %v3431
        %v3433 = vpop.f32.mrb[0].mxu0
        %3434 = vmatprep.mubr.bf16.mxu0 0
        %3435 = vmatmul.mubr.bf16.gmra.mrb[0].mxu0 %v3154
        %v3436 = vpop.f32.mrb[0].mxu0
        %v3437 = vadd.f32 0.0, %v3436
        %v3438 = vpop.f32.mrb[0].mxu0
        %v3439 = vpop.f32.mrb[0].mxu0
        %v3440 = vadd.f32 0.0, %v3439
        %v3441 = vpop.f32.mrb[0].mxu0
        %3442 = vmatprep.mubr.bf16.mxu0 0
        %3443 = vmatmul.mubr.bf16.gmra.mrb[0].mxu0 %v3157
        %v3444 = vpop.f32.mrb[0].mxu0
        %v3445 = vadd.f32 0.0, %v3444
        %v3446 = vpop.f32.mrb[0].mxu0
        %v3447 = vpop.f32.mrb[0].mxu0
        %v3448 = vadd.f32 0.0, %v3447
        %v3449 = vpop.f32.mrb[0].mxu0
        %3450 = vdwg.mxu0
        %v3451 = vadd.f32 %v3079, %v3197
        %v3452 = vadd.f32 %v3080, %v3200
        %v3453 = vadd.f32 %v3081, %v3205
        %v3454 = vadd.f32 %v3082, %v3208
        %v3455 = vadd.f32 %v3083, %v3213
        %v3456 = vadd.f32 %v3084, %v3216
        %v3457 = vadd.f32 %v3085, %v3221
        %v3458 = vadd.f32 %v3086, %v3224
        %v3459 = vadd.f32 %v3087, %v3229
        %v3460 = vadd.f32 %v3088, %v3232
        %v3461 = vadd.f32 %v3089, %v3237
        %v3462 = vadd.f32 %v3090, %v3240
        %v3463 = vadd.f32 %v3091, %v3245
        %v3464 = vadd.f32 %v3092, %v3248
        %v3465 = vadd.f32 %v3093, %v3253
        %v3466 = vadd.f32 %v3094, %v3256
        %v3467 = vadd.f32 %v3095, %v3261
        %v3468 = vadd.f32 %v3096, %v3264
        %v3469 = vadd.f32 %v3097, %v3269
        %v3470 = vadd.f32 %v3098, %v3272
        %v3471 = vadd.f32 %v3099, %v3277
        %v3472 = vadd.f32 %v3100, %v3280
        %v3473 = vadd.f32 %v3101, %v3285
        %v3474 = vadd.f32 %v3102, %v3288
        %v3475 = vadd.f32 %v3103, %v3293
        %v3476 = vadd.f32 %v3104, %v3296
        %v3477 = vadd.f32 %v3105, %v3301
        %v3478 = vadd.f32 %v3106, %v3304
        %v3479 = vadd.f32 %v3107, %v3309
        %v3480 = vadd.f32 %v3108, %v3312
        %v3481 = vadd.f32 %v3109, %v3317
        %v3482 = vadd.f32 %v3110, %v3320
        %v3483 = vadd.f32 %v3111, %v3325
        %v3484 = vadd.f32 %v3112, %v3328
        %v3485 = vadd.f32 %v3113, %v3333
        %v3486 = vadd.f32 %v3114, %v3336
        %v3487 = vadd.f32 %v3115, %v3341
        %v3488 = vadd.f32 %v3116, %v3344
        %v3489 = vadd.f32 %v3117, %v3349
        %v3490 = vadd.f32 %v3118, %v3352
        %v3491 = vadd.f32 %v3119, %v3357
        %v3492 = vadd.f32 %v3120, %v3360
        %v3493 = vadd.f32 %v3121, %v3365
        %v3494 = vadd.f32 %v3122, %v3368
        %v3495 = vadd.f32 %v3123, %v3373
        %v3496 = vadd.f32 %v3124, %v3376
        %v3497 = vadd.f32 %v3125, %v3381
        %v3498 = vadd.f32 %v3126, %v3384
        %v3499 = vadd.f32 %v3127, %v3389
        %v3500 = vadd.f32 %v3128, %v3392
        %v3501 = vadd.f32 %v3129, %v3397
        %v3502 = vadd.f32 %v3130, %v3400
        %v3503 = vadd.f32 %v3131, %v3405
        %v3504 = vadd.f32 %v3132, %v3408
        %v3505 = vadd.f32 %v3133, %v3413
        %v3506 = vadd.f32 %v3134, %v3416
        %v3507 = vadd.f32 %v3135, %v3421
        %v3508 = vadd.f32 %v3136, %v3424
        %v3509 = vadd.f32 %v3137, %v3429
        %v3510 = vadd.f32 %v3138, %v3432
        %v3511 = vadd.f32 %v3139, %v3437
        %v3512 = vadd.f32 %v3140, %v3440
        %v3513 = vadd.f32 %v3141, %v3445
        %v3514 = vadd.f32 %v3142, %v3448
        %v3516 = vunpack.c.l.b16 %v284
        %v3517 = vpack.c.b16 %v3516, %v3516
        %v3518 = vshll.u32 %v3149, 16
        %v3520 = vrot.slane %v3518, 1
        %v3521 = vsel %vm452, %v2389, %v3520
        %v3522 = vshrl.u32 %v3149, 16
        %v3524 = vor.u32 %v3522, %v3520
        %v3525 = vshll.u32 %v3150, 16
        %v3527 = vrot.slane %v3525, 1
        %v3528 = vsel %vm452, %v3524, %v3527
        %v3529 = vshrl.u32 %v3150, 16
        %v3531 = vor.u32 %v3529, %v3527
        %v3533 = vshll.u32 %v3517, 16
        %v3535 = vrot.slane %v3533, 1
        %v3536 = vsel %vm452, %v3531, %v3535
        %v3538 = vshrl.u32 %v3151, 16
        %v3540 = vrot.slane %v3538, 2
        %v3541 = vshll.u32 %v3151, 16
        %v3543 = vrot.slane %v3541, 3
        %v3544 = vor.u32 %v3540, %v3543
        %v3546 = vsel %vm724, %v3521, 0
        %v3549 = vsel %vm724, %v3528, 0
        %v3552 = vsel %vm724, %v3536, 0
        %v3555 = vand.u32 %v3544, %v824
        %3557 = vmatprep.subr.bf16.mxu0 0
        %3558 = vmatpush1.bf16.msra.mxu0 %v3555
        %3559 = vmatprep.subr.bf16.mxu0 0
        %3560 = vmatpush1.bf16.msra.mxu0 0
        %3561 = vmatprep.subr.bf16.mxu0 0
        %3562 = vmatpush1.bf16.msra.mxu0 0
        %3563 = vmatprep.subr.bf16.mxu0 0
        %3564 = vmatpush1.bf16.msra.mxu0 0
        %3565 = vmatprep.subr.bf16.mxu0 0
        %3566 = vmatpush1.bf16.msra.mxu0 0
        %3567 = vmatprep.subr.bf16.mxu0 0
        %3568 = vmatpush1.bf16.msra.mxu0 0
        %3569 = vmatprep.subr.bf16.mxu0 0
        %3570 = vmatpush1.bf16.msra.mxu0 0
        %3571 = vmatprep.subr.bf16.mxu0 0
        %3572 = vmatpush1.bf16.msra.mxu0 0
        %3573 = vmatprep.subr.bf16.mxu0 0
        %3574 = vmatpush1.bf16.msra.mxu0 0
        %3575 = vmatprep.subr.bf16.mxu0 0
        %3576 = vmatpush1.bf16.msra.mxu0 0
        %3577 = vmatprep.subr.bf16.mxu0 0
        %3578 = vmatpush1.bf16.msra.mxu0 0
        %3579 = vmatprep.subr.bf16.mxu0 0
        %3580 = vmatpush1.bf16.msra.mxu0 0
        %3581 = vmatprep.subr.bf16.mxu0 0
        %3582 = vmatpush1.bf16.msra.mxu0 0
        %3583 = vmatprep.subr.bf16.mxu0 0
        %3584 = vmatpush1.bf16.msra.mxu0 0
        %3585 = vmatprep.subr.bf16.mxu0 0
        %3586 = vmatpush1.bf16.msra.mxu0 0
        %3587 = vmatprep.subr.bf16.mxu0 0
        %3588 = vmatpush1.bf16.msra.mxu0 0
        %3589 = vmatprep.mubr.bf16.mxu0 0
        %3590 = vmatmul.mubr.bf16.gmra.mrb[0].mxu0 %v738
        %v3591 = vpop.f32.mrb[0].mxu0
        %v3592 = vadd.f32 0.0, %v3591
        %v3593 = vpop.f32.mrb[0].mxu0
        %v3594 = vpop.f32.mrb[0].mxu0
        %v3595 = vadd.f32 0.0, %v3594
        %v3596 = vpop.f32.mrb[0].mxu0
        %3597 = vmatprep.mubr.bf16.mxu0 0
        %3598 = vmatmul.mubr.bf16.gmra.mrb[0].mxu0 %v741
        %v3599 = vpop.f32.mrb[0].mxu0
        %v3600 = vadd.f32 0.0, %v3599
        %v3601 = vpop.f32.mrb[0].mxu0
        %v3602 = vpop.f32.mrb[0].mxu0
        %v3603 = vadd.f32 0.0, %v3602
        %v3604 = vpop.f32.mrb[0].mxu0
        %3605 = vmatprep.mubr.bf16.mxu0 0
        %3606 = vmatmul.mubr.bf16.gmra.mrb[0].mxu0 %v744
        %v3607 = vpop.f32.mrb[0].mxu0
        %v3608 = vadd.f32 0.0, %v3607
        %v3609 = vpop.f32.mrb[0].mxu0
        %v3610 = vpop.f32.mrb[0].mxu0
        %v3611 = vadd.f32 0.0, %v3610
        %v3612 = vpop.f32.mrb[0].mxu0
        %3613 = vmatprep.mubr.bf16.mxu0 0
        %3614 = vmatmul.mubr.bf16.gmra.mrb[0].mxu0 %v747
        %v3615 = vpop.f32.mrb[0].mxu0
        %v3616 = vadd.f32 0.0, %v3615
        %v3617 = vpop.f32.mrb[0].mxu0
        %v3618 = vpop.f32.mrb[0].mxu0
        %v3619 = vadd.f32 0.0, %v3618
        %v3620 = vpop.f32.mrb[0].mxu0
        %3621 = vmatprep.mubr.bf16.mxu0 0
        %3622 = vmatmul.mubr.bf16.gmra.mrb[0].mxu0 %v750
        %v3623 = vpop.f32.mrb[0].mxu0
        %v3624 = vadd.f32 0.0, %v3623
        %v3625 = vpop.f32.mrb[0].mxu0
        %v3626 = vpop.f32.mrb[0].mxu0
        %v3627 = vadd.f32 0.0, %v3626
        %v3628 = vpop.f32.mrb[0].mxu0
        %3629 = vmatprep.mubr.bf16.mxu0 0
        %3630 = vmatmul.mubr.bf16.gmra.mrb[0].mxu0 %v753
        %v3631 = vpop.f32.mrb[0].mxu0
        %v3632 = vadd.f32 0.0, %v3631
        %v3633 = vpop.f32.mrb[0].mxu0
        %v3634 = vpop.f32.mrb[0].mxu0
        %v3635 = vadd.f32 0.0, %v3634
        %v3636 = vpop.f32.mrb[0].mxu0
        %3637 = vmatprep.mubr.bf16.mxu0 0
        %3638 = vmatmul.mubr.bf16.gmra.mrb[0].mxu0 %v756
        %v3639 = vpop.f32.mrb[0].mxu0
        %v3640 = vadd.f32 0.0, %v3639
        %v3641 = vpop.f32.mrb[0].mxu0
        %v3642 = vpop.f32.mrb[0].mxu0
        %v3643 = vadd.f32 0.0, %v3642
        %v3644 = vpop.f32.mrb[0].mxu0
        %3645 = vmatprep.mubr.bf16.mxu0 0
        %3646 = vmatmul.mubr.bf16.gmra.mrb[0].mxu0 %v759
        %v3647 = vpop.f32.mrb[0].mxu0
        %v3648 = vadd.f32 0.0, %v3647
        %v3649 = vpop.f32.mrb[0].mxu0
        %v3650 = vpop.f32.mrb[0].mxu0
        %v3651 = vadd.f32 0.0, %v3650
        %v3652 = vpop.f32.mrb[0].mxu0
        %3653 = vmatprep.mubr.bf16.mxu0 0
        %3654 = vmatmul.mubr.bf16.gmra.mrb[0].mxu0 %v762
        %v3655 = vpop.f32.mrb[0].mxu0
        %v3656 = vadd.f32 0.0, %v3655
        %v3657 = vpop.f32.mrb[0].mxu0
        %v3658 = vpop.f32.mrb[0].mxu0
        %v3659 = vadd.f32 0.0, %v3658
        %v3660 = vpop.f32.mrb[0].mxu0
        %3661 = vmatprep.mubr.bf16.mxu0 0
        %3662 = vmatmul.mubr.bf16.gmra.mrb[0].mxu0 %v765
        %v3663 = vpop.f32.mrb[0].mxu0
        %v3664 = vadd.f32 0.0, %v3663
        %v3665 = vpop.f32.mrb[0].mxu0
        %v3666 = vpop.f32.mrb[0].mxu0
        %v3667 = vadd.f32 0.0, %v3666
        %v3668 = vpop.f32.mrb[0].mxu0
        %3669 = vmatprep.mubr.bf16.mxu0 0
        %3670 = vmatmul.mubr.bf16.gmra.mrb[0].mxu0 %v768
        %v3671 = vpop.f32.mrb[0].mxu0
        %v3672 = vadd.f32 0.0, %v3671
        %v3673 = vpop.f32.mrb[0].mxu0
        %v3674 = vpop.f32.mrb[0].mxu0
        %v3675 = vadd.f32 0.0, %v3674
        %v3676 = vpop.f32.mrb[0].mxu0
        %3677 = vmatprep.mubr.bf16.mxu0 0
        %3678 = vmatmul.mubr.bf16.gmra.mrb[0].mxu0 %v771
        %v3679 = vpop.f32.mrb[0].mxu0
        %v3680 = vadd.f32 0.0, %v3679
        %v3681 = vpop.f32.mrb[0].mxu0
        %v3682 = vpop.f32.mrb[0].mxu0
        %v3683 = vadd.f32 0.0, %v3682
        %v3684 = vpop.f32.mrb[0].mxu0
        %3685 = vmatprep.mubr.bf16.mxu0 0
        %3686 = vmatmul.mubr.bf16.gmra.mrb[0].mxu0 %v774
        %v3687 = vpop.f32.mrb[0].mxu0
        %v3688 = vadd.f32 0.0, %v3687
        %v3689 = vpop.f32.mrb[0].mxu0
        %v3690 = vpop.f32.mrb[0].mxu0
        %v3691 = vadd.f32 0.0, %v3690
        %v3692 = vpop.f32.mrb[0].mxu0
        %3693 = vmatprep.mubr.bf16.mxu0 0
        %3694 = vmatmul.mubr.bf16.gmra.mrb[0].mxu0 %v777
        %v3695 = vpop.f32.mrb[0].mxu0
        %v3696 = vadd.f32 0.0, %v3695
        %v3697 = vpop.f32.mrb[0].mxu0
        %v3698 = vpop.f32.mrb[0].mxu0
        %v3699 = vadd.f32 0.0, %v3698
        %v3700 = vpop.f32.mrb[0].mxu0
        %3701 = vmatprep.mubr.bf16.mxu0 0
        %3702 = vmatmul.mubr.bf16.gmra.mrb[0].mxu0 %v780
        %v3703 = vpop.f32.mrb[0].mxu0
        %v3704 = vadd.f32 0.0, %v3703
        %v3705 = vpop.f32.mrb[0].mxu0
        %v3706 = vpop.f32.mrb[0].mxu0
        %v3707 = vadd.f32 0.0, %v3706
        %v3708 = vpop.f32.mrb[0].mxu0
        %3709 = vmatprep.mubr.bf16.mxu0 0
        %3710 = vmatmul.mubr.bf16.gmra.mrb[0].mxu0 %v783
        %v3711 = vpop.f32.mrb[0].mxu0
        %v3712 = vadd.f32 0.0, %v3711
        %v3713 = vpop.f32.mrb[0].mxu0
        %v3714 = vpop.f32.mrb[0].mxu0
        %v3715 = vadd.f32 0.0, %v3714
        %v3716 = vpop.f32.mrb[0].mxu0
        %3717 = vmatprep.mubr.bf16.mxu0 0
        %3718 = vmatmul.mubr.bf16.gmra.mrb[0].mxu0 %v786
        %v3719 = vpop.f32.mrb[0].mxu0
        %v3720 = vadd.f32 0.0, %v3719
        %v3721 = vpop.f32.mrb[0].mxu0
        %v3722 = vpop.f32.mrb[0].mxu0
        %v3723 = vadd.f32 0.0, %v3722
        %v3724 = vpop.f32.mrb[0].mxu0
        %3725 = vmatprep.mubr.bf16.mxu0 0
        %3726 = vmatmul.mubr.bf16.gmra.mrb[0].mxu0 %v789
        %v3727 = vpop.f32.mrb[0].mxu0
        %v3728 = vadd.f32 0.0, %v3727
        %v3729 = vpop.f32.mrb[0].mxu0
        %v3730 = vpop.f32.mrb[0].mxu0
        %v3731 = vadd.f32 0.0, %v3730
        %v3732 = vpop.f32.mrb[0].mxu0
        %3733 = vmatprep.mubr.bf16.mxu0 0
        %3734 = vmatmul.mubr.bf16.gmra.mrb[0].mxu0 %v792
        %v3735 = vpop.f32.mrb[0].mxu0
        %v3736 = vadd.f32 0.0, %v3735
        %v3737 = vpop.f32.mrb[0].mxu0
        %v3738 = vpop.f32.mrb[0].mxu0
        %v3739 = vadd.f32 0.0, %v3738
        %v3740 = vpop.f32.mrb[0].mxu0
        %3741 = vmatprep.mubr.bf16.mxu0 0
        %3742 = vmatmul.mubr.bf16.gmra.mrb[0].mxu0 %v795
        %v3743 = vpop.f32.mrb[0].mxu0
        %v3744 = vadd.f32 0.0, %v3743
        %v3745 = vpop.f32.mrb[0].mxu0
        %v3746 = vpop.f32.mrb[0].mxu0
        %v3747 = vadd.f32 0.0, %v3746
        %v3748 = vpop.f32.mrb[0].mxu0
        %3749 = vmatprep.mubr.bf16.mxu0 0
        %3750 = vmatmul.mubr.bf16.gmra.mrb[0].mxu0 %v798
        %v3751 = vpop.f32.mrb[0].mxu0
        %v3752 = vadd.f32 0.0, %v3751
        %v3753 = vpop.f32.mrb[0].mxu0
        %v3754 = vpop.f32.mrb[0].mxu0
        %v3755 = vadd.f32 0.0, %v3754
        %v3756 = vpop.f32.mrb[0].mxu0
        %3757 = vmatprep.mubr.bf16.mxu0 0
        %3758 = vmatmul.mubr.bf16.gmra.mrb[0].mxu0 %v801
        %v3759 = vpop.f32.mrb[0].mxu0
        %v3760 = vadd.f32 0.0, %v3759
        %v3761 = vpop.f32.mrb[0].mxu0
        %v3762 = vpop.f32.mrb[0].mxu0
        %v3763 = vadd.f32 0.0, %v3762
        %v3764 = vpop.f32.mrb[0].mxu0
        %3765 = vmatprep.mubr.bf16.mxu0 0
        %3766 = vmatmul.mubr.bf16.gmra.mrb[0].mxu0 %v804
        %v3767 = vpop.f32.mrb[0].mxu0
        %v3768 = vadd.f32 0.0, %v3767
        %v3769 = vpop.f32.mrb[0].mxu0
        %v3770 = vpop.f32.mrb[0].mxu0
        %v3771 = vadd.f32 0.0, %v3770
        %v3772 = vpop.f32.mrb[0].mxu0
        %3773 = vmatprep.mubr.bf16.mxu0 0
        %3774 = vmatmul.mubr.bf16.gmra.mrb[0].mxu0 %v807
        %v3775 = vpop.f32.mrb[0].mxu0
        %v3776 = vadd.f32 0.0, %v3775
        %v3777 = vpop.f32.mrb[0].mxu0
        %v3778 = vpop.f32.mrb[0].mxu0
        %v3779 = vadd.f32 0.0, %v3778
        %v3780 = vpop.f32.mrb[0].mxu0
        %3781 = vmatprep.mubr.bf16.mxu0 0
        %3782 = vmatmul.mubr.bf16.gmra.mrb[0].mxu0 %v810
        %v3783 = vpop.f32.mrb[0].mxu0
        %v3784 = vadd.f32 0.0, %v3783
        %v3785 = vpop.f32.mrb[0].mxu0
        %v3786 = vpop.f32.mrb[0].mxu0
        %v3787 = vadd.f32 0.0, %v3786
        %v3788 = vpop.f32.mrb[0].mxu0
        %3789 = vmatprep.mubr.bf16.mxu0 0
        %3790 = vmatmul.mubr.bf16.gmra.mrb[0].mxu0 %v813
        %v3791 = vpop.f32.mrb[0].mxu0
        %v3792 = vadd.f32 0.0, %v3791
        %v3793 = vpop.f32.mrb[0].mxu0
        %v3794 = vpop.f32.mrb[0].mxu0
        %v3795 = vadd.f32 0.0, %v3794
        %v3796 = vpop.f32.mrb[0].mxu0
        %3797 = vmatprep.mubr.bf16.mxu0 0
        %3798 = vmatmul.mubr.bf16.gmra.mrb[0].mxu0 %v816
        %v3799 = vpop.f32.mrb[0].mxu0
        %v3800 = vadd.f32 0.0, %v3799
        %v3801 = vpop.f32.mrb[0].mxu0
        %v3802 = vpop.f32.mrb[0].mxu0
        %v3803 = vadd.f32 0.0, %v3802
        %v3804 = vpop.f32.mrb[0].mxu0
        %3805 = vmatprep.mubr.bf16.mxu0 0
        %3806 = vmatmul.mubr.bf16.gmra.mrb[0].mxu0 %v2397
        %v3807 = vpop.f32.mrb[0].mxu0
        %v3808 = vadd.f32 0.0, %v3807
        %v3809 = vpop.f32.mrb[0].mxu0
        %v3810 = vpop.f32.mrb[0].mxu0
        %v3811 = vadd.f32 0.0, %v3810
        %v3812 = vpop.f32.mrb[0].mxu0
        %3813 = vmatprep.mubr.bf16.mxu0 0
        %3814 = vmatmul.mubr.bf16.gmra.mrb[0].mxu0 %v2400
        %v3815 = vpop.f32.mrb[0].mxu0
        %v3816 = vadd.f32 0.0, %v3815
        %v3817 = vpop.f32.mrb[0].mxu0
        %v3818 = vpop.f32.mrb[0].mxu0
        %v3819 = vadd.f32 0.0, %v3818
        %v3820 = vpop.f32.mrb[0].mxu0
        %3821 = vmatprep.mubr.bf16.mxu0 0
        %3822 = vmatmul.mubr.bf16.gmra.mrb[0].mxu0 %v3546
        %v3823 = vpop.f32.mrb[0].mxu0
        %v3824 = vadd.f32 0.0, %v3823
        %v3825 = vpop.f32.mrb[0].mxu0
        %v3826 = vpop.f32.mrb[0].mxu0
        %v3827 = vadd.f32 0.0, %v3826
        %v3828 = vpop.f32.mrb[0].mxu0
        %3829 = vmatprep.mubr.bf16.mxu0 0
        %3830 = vmatmul.mubr.bf16.gmra.mrb[0].mxu0 %v3549
        %v3831 = vpop.f32.mrb[0].mxu0
        %v3832 = vadd.f32 0.0, %v3831
        %v3833 = vpop.f32.mrb[0].mxu0
        %v3834 = vpop.f32.mrb[0].mxu0
        %v3835 = vadd.f32 0.0, %v3834
        %v3836 = vpop.f32.mrb[0].mxu0
        %3837 = vmatprep.mubr.bf16.mxu0 0
        %3838 = vmatmul.mubr.bf16.gmra.mrb[0].mxu0 %v3552
        %v3839 = vpop.f32.mrb[0].mxu0
        %v3840 = vadd.f32 0.0, %v3839
        %v3841 = vpop.f32.mrb[0].mxu0
        %v3842 = vpop.f32.mrb[0].mxu0
        %v3843 = vadd.f32 0.0, %v3842
        %v3844 = vpop.f32.mrb[0].mxu0
        %3845 = vdwg.mxu0
        %v3846 = vadd.f32 %v3451, %v3592
        %v3847 = vadd.f32 %v3452, %v3595
        %v3848 = vadd.f32 %v3453, %v3600
        %v3849 = vadd.f32 %v3454, %v3603
        %v3850 = vadd.f32 %v3455, %v3608
        %v3851 = vadd.f32 %v3456, %v3611
        %v3852 = vadd.f32 %v3457, %v3616
        %v3853 = vadd.f32 %v3458, %v3619
        %v3854 = vadd.f32 %v3459, %v3624
        %v3855 = vadd.f32 %v3460, %v3627
        %v3856 = vadd.f32 %v3461, %v3632
        %v3857 = vadd.f32 %v3462, %v3635
        %v3858 = vadd.f32 %v3463, %v3640
        %v3859 = vadd.f32 %v3464, %v3643
        %v3860 = vadd.f32 %v3465, %v3648
        %v3861 = vadd.f32 %v3466, %v3651
        %v3862 = vadd.f32 %v3467, %v3656
        %v3863 = vadd.f32 %v3468, %v3659
        %v3864 = vadd.f32 %v3469, %v3664
        %v3865 = vadd.f32 %v3470, %v3667
        %v3866 = vadd.f32 %v3471, %v3672
        %v3867 = vadd.f32 %v3472, %v3675
        %v3868 = vadd.f32 %v3473, %v3680
        %v3869 = vadd.f32 %v3474, %v3683
        %v3870 = vadd.f32 %v3475, %v3688
        %v3871 = vadd.f32 %v3476, %v3691
        %v3872 = vadd.f32 %v3477, %v3696
        %v3873 = vadd.f32 %v3478, %v3699
        %v3874 = vadd.f32 %v3479, %v3704
        %v3875 = vadd.f32 %v3480, %v3707
        %v3876 = vadd.f32 %v3481, %v3712
        %v3877 = vadd.f32 %v3482, %v3715
        %v3878 = vadd.f32 %v3483, %v3720
        %v3879 = vadd.f32 %v3484, %v3723
        %v3880 = vadd.f32 %v3485, %v3728
        %v3881 = vadd.f32 %v3486, %v3731
        %v3882 = vadd.f32 %v3487, %v3736
        %v3883 = vadd.f32 %v3488, %v3739
        %v3884 = vadd.f32 %v3489, %v3744
        %v3885 = vadd.f32 %v3490, %v3747
        %v3886 = vadd.f32 %v3491, %v3752
        %v3887 = vadd.f32 %v3492, %v3755
        %v3888 = vadd.f32 %v3493, %v3760
        %v3889 = vadd.f32 %v3494, %v3763
        %v3890 = vadd.f32 %v3495, %v3768
        %v3891 = vadd.f32 %v3496, %v3771
        %v3892 = vadd.f32 %v3497, %v3776
        %v3893 = vadd.f32 %v3498, %v3779
        %v3894 = vadd.f32 %v3499, %v3784
        %v3895 = vadd.f32 %v3500, %v3787
        %v3896 = vadd.f32 %v3501, %v3792
        %v3897 = vadd.f32 %v3502, %v3795
        %v3898 = vadd.f32 %v3503, %v3800
        %v3899 = vadd.f32 %v3504, %v3803
        %v3900 = vadd.f32 %v3505, %v3808
        %v3901 = vadd.f32 %v3506, %v3811
        %v3902 = vadd.f32 %v3507, %v3816
        %v3903 = vadd.f32 %v3508, %v3819
        %v3904 = vadd.f32 %v3509, %v3824
        %v3905 = vadd.f32 %v3510, %v3827
        %v3906 = vadd.f32 %v3511, %v3832
        %v3907 = vadd.f32 %v3512, %v3835
        %v3908 = vadd.f32 %v3513, %v3840
        %v3909 = vadd.f32 %v3514, %v3843
        %v3910 = vrot.slane %v3149, 1
        %v3911 = vsel %vm1473, %v2763, %v3910
        %v3912 = vrot.slane %v3150, 1
        %v3913 = vsel %vm1473, %v3910, %v3912
        %v3914 = vrot.slane %v3517, 1
        %v3915 = vsel %vm1473, %v3912, %v3914
        %v3917 = vsel %vm724, %v3911, 0
        %v3920 = vsel %vm724, %v3913, 0
        %v3923 = vsel %vm724, %v3915, 0
        %v3926 = vand.u32 %v288, %v824
        %3928 = vmatprep.subr.bf16.mxu0 0
        %3929 = vmatpush1.bf16.msra.mxu0 %v3926
        %3930 = vmatprep.subr.bf16.mxu0 0
        %3931 = vmatpush1.bf16.msra.mxu0 0
        %3932 = vmatprep.subr.bf16.mxu0 0
        %3933 = vmatpush1.bf16.msra.mxu0 0
        %3934 = vmatprep.subr.bf16.mxu0 0
        %3935 = vmatpush1.bf16.msra.mxu0 0
        %3936 = vmatprep.subr.bf16.mxu0 0
        %3937 = vmatpush1.bf16.msra.mxu0 0
        %3938 = vmatprep.subr.bf16.mxu0 0
        %3939 = vmatpush1.bf16.msra.mxu0 0
        %3940 = vmatprep.subr.bf16.mxu0 0
        %3941 = vmatpush1.bf16.msra.mxu0 0
        %3942 = vmatprep.subr.bf16.mxu0 0
        %3943 = vmatpush1.bf16.msra.mxu0 0
        %3944 = vmatprep.subr.bf16.mxu0 0
        %3945 = vmatpush1.bf16.msra.mxu0 0
        %3946 = vmatprep.subr.bf16.mxu0 0
        %3947 = vmatpush1.bf16.msra.mxu0 0
        %3948 = vmatprep.subr.bf16.mxu0 0
        %3949 = vmatpush1.bf16.msra.mxu0 0
        %3950 = vmatprep.subr.bf16.mxu0 0
        %3951 = vmatpush1.bf16.msra.mxu0 0
        %3952 = vmatprep.subr.bf16.mxu0 0
        %3953 = vmatpush1.bf16.msra.mxu0 0
        %3954 = vmatprep.subr.bf16.mxu0 0
        %3955 = vmatpush1.bf16.msra.mxu0 0
        %3956 = vmatprep.subr.bf16.mxu0 0
        %3957 = vmatpush1.bf16.msra.mxu0 0
        %3958 = vmatprep.subr.bf16.mxu0 0
        %3959 = vmatpush1.bf16.msra.mxu0 0
        %3960 = vmatprep.mubr.bf16.mxu0 0
        %3961 = vmatmul.mubr.bf16.gmra.mrb[0].mxu0 %v1556
        %v3962 = vpop.f32.mrb[0].mxu0
        %v3963 = vadd.f32 0.0, %v3962
        %v3964 = vpop.f32.mrb[0].mxu0
        %v3965 = vpop.f32.mrb[0].mxu0
        %v3966 = vadd.f32 0.0, %v3965
        %v3967 = vpop.f32.mrb[0].mxu0
        %3968 = vmatprep.mubr.bf16.mxu0 0
        %3969 = vmatmul.mubr.bf16.gmra.mrb[0].mxu0 %v1559
        %v3970 = vpop.f32.mrb[0].mxu0
        %v3971 = vadd.f32 0.0, %v3970
        %v3972 = vpop.f32.mrb[0].mxu0
        %v3973 = vpop.f32.mrb[0].mxu0
        %v3974 = vadd.f32 0.0, %v3973
        %v3975 = vpop.f32.mrb[0].mxu0
        %3976 = vmatprep.mubr.bf16.mxu0 0
        %3977 = vmatmul.mubr.bf16.gmra.mrb[0].mxu0 %v1562
        %v3978 = vpop.f32.mrb[0].mxu0
        %v3979 = vadd.f32 0.0, %v3978
        %v3980 = vpop.f32.mrb[0].mxu0
        %v3981 = vpop.f32.mrb[0].mxu0
        %v3982 = vadd.f32 0.0, %v3981
        %v3983 = vpop.f32.mrb[0].mxu0
        %3984 = vmatprep.mubr.bf16.mxu0 0
        %3985 = vmatmul.mubr.bf16.gmra.mrb[0].mxu0 %v1565
        %v3986 = vpop.f32.mrb[0].mxu0
        %v3987 = vadd.f32 0.0, %v3986
        %v3988 = vpop.f32.mrb[0].mxu0
        %v3989 = vpop.f32.mrb[0].mxu0
        %v3990 = vadd.f32 0.0, %v3989
        %v3991 = vpop.f32.mrb[0].mxu0
        %3992 = vmatprep.mubr.bf16.mxu0 0
        %3993 = vmatmul.mubr.bf16.gmra.mrb[0].mxu0 %v1568
        %v3994 = vpop.f32.mrb[0].mxu0
        %v3995 = vadd.f32 0.0, %v3994
        %v3996 = vpop.f32.mrb[0].mxu0
        %v3997 = vpop.f32.mrb[0].mxu0
        %v3998 = vadd.f32 0.0, %v3997
        %v3999 = vpop.f32.mrb[0].mxu0
        %4000 = vmatprep.mubr.bf16.mxu0 0
        %4001 = vmatmul.mubr.bf16.gmra.mrb[0].mxu0 %v1571
        %v4002 = vpop.f32.mrb[0].mxu0
        %v4003 = vadd.f32 0.0, %v4002
        %v4004 = vpop.f32.mrb[0].mxu0
        %v4005 = vpop.f32.mrb[0].mxu0
        %v4006 = vadd.f32 0.0, %v4005
        %v4007 = vpop.f32.mrb[0].mxu0
        %4008 = vmatprep.mubr.bf16.mxu0 0
        %4009 = vmatmul.mubr.bf16.gmra.mrb[0].mxu0 %v1574
        %v4010 = vpop.f32.mrb[0].mxu0
        %v4011 = vadd.f32 0.0, %v4010
        %v4012 = vpop.f32.mrb[0].mxu0
        %v4013 = vpop.f32.mrb[0].mxu0
        %v4014 = vadd.f32 0.0, %v4013
        %v4015 = vpop.f32.mrb[0].mxu0
        %4016 = vmatprep.mubr.bf16.mxu0 0
        %4017 = vmatmul.mubr.bf16.gmra.mrb[0].mxu0 %v1577
        %v4018 = vpop.f32.mrb[0].mxu0
        %v4019 = vadd.f32 0.0, %v4018
        %v4020 = vpop.f32.mrb[0].mxu0
        %v4021 = vpop.f32.mrb[0].mxu0
        %v4022 = vadd.f32 0.0, %v4021
        %v4023 = vpop.f32.mrb[0].mxu0
        %4024 = vmatprep.mubr.bf16.mxu0 0
        %4025 = vmatmul.mubr.bf16.gmra.mrb[0].mxu0 %v1580
        %v4026 = vpop.f32.mrb[0].mxu0
        %v4027 = vadd.f32 0.0, %v4026
        %v4028 = vpop.f32.mrb[0].mxu0
        %v4029 = vpop.f32.mrb[0].mxu0
        %v4030 = vadd.f32 0.0, %v4029
        %v4031 = vpop.f32.mrb[0].mxu0
        %4032 = vmatprep.mubr.bf16.mxu0 0
        %4033 = vmatmul.mubr.bf16.gmra.mrb[0].mxu0 %v1583
        %v4034 = vpop.f32.mrb[0].mxu0
        %v4035 = vadd.f32 0.0, %v4034
        %v4036 = vpop.f32.mrb[0].mxu0
        %v4037 = vpop.f32.mrb[0].mxu0
        %v4038 = vadd.f32 0.0, %v4037
        %v4039 = vpop.f32.mrb[0].mxu0
        %4040 = vmatprep.mubr.bf16.mxu0 0
        %4041 = vmatmul.mubr.bf16.gmra.mrb[0].mxu0 %v1586
        %v4042 = vpop.f32.mrb[0].mxu0
        %v4043 = vadd.f32 0.0, %v4042
        %v4044 = vpop.f32.mrb[0].mxu0
        %v4045 = vpop.f32.mrb[0].mxu0
        %v4046 = vadd.f32 0.0, %v4045
        %v4047 = vpop.f32.mrb[0].mxu0
        %4048 = vmatprep.mubr.bf16.mxu0 0
        %4049 = vmatmul.mubr.bf16.gmra.mrb[0].mxu0 %v1589
        %v4050 = vpop.f32.mrb[0].mxu0
        %v4051 = vadd.f32 0.0, %v4050
        %v4052 = vpop.f32.mrb[0].mxu0
        %v4053 = vpop.f32.mrb[0].mxu0
        %v4054 = vadd.f32 0.0, %v4053
        %v4055 = vpop.f32.mrb[0].mxu0
        %4056 = vmatprep.mubr.bf16.mxu0 0
        %4057 = vmatmul.mubr.bf16.gmra.mrb[0].mxu0 %v1592
        %v4058 = vpop.f32.mrb[0].mxu0
        %v4059 = vadd.f32 0.0, %v4058
        %v4060 = vpop.f32.mrb[0].mxu0
        %v4061 = vpop.f32.mrb[0].mxu0
        %v4062 = vadd.f32 0.0, %v4061
        %v4063 = vpop.f32.mrb[0].mxu0
        %4064 = vmatprep.mubr.bf16.mxu0 0
        %4065 = vmatmul.mubr.bf16.gmra.mrb[0].mxu0 %v1595
        %v4066 = vpop.f32.mrb[0].mxu0
        %v4067 = vadd.f32 0.0, %v4066
        %v4068 = vpop.f32.mrb[0].mxu0
        %v4069 = vpop.f32.mrb[0].mxu0
        %v4070 = vadd.f32 0.0, %v4069
        %v4071 = vpop.f32.mrb[0].mxu0
        %4072 = vmatprep.mubr.bf16.mxu0 0
        %4073 = vmatmul.mubr.bf16.gmra.mrb[0].mxu0 %v1598
        %v4074 = vpop.f32.mrb[0].mxu0
        %v4075 = vadd.f32 0.0, %v4074
        %v4076 = vpop.f32.mrb[0].mxu0
        %v4077 = vpop.f32.mrb[0].mxu0
        %v4078 = vadd.f32 0.0, %v4077
        %v4079 = vpop.f32.mrb[0].mxu0
        %4080 = vmatprep.mubr.bf16.mxu0 0
        %4081 = vmatmul.mubr.bf16.gmra.mrb[0].mxu0 %v1601
        %v4082 = vpop.f32.mrb[0].mxu0
        %v4083 = vadd.f32 0.0, %v4082
        %v4084 = vpop.f32.mrb[0].mxu0
        %v4085 = vpop.f32.mrb[0].mxu0
        %v4086 = vadd.f32 0.0, %v4085
        %v4087 = vpop.f32.mrb[0].mxu0
        %4088 = vmatprep.mubr.bf16.mxu0 0
        %4089 = vmatmul.mubr.bf16.gmra.mrb[0].mxu0 %v1604
        %v4090 = vpop.f32.mrb[0].mxu0
        %v4091 = vadd.f32 0.0, %v4090
        %v4092 = vpop.f32.mrb[0].mxu0
        %v4093 = vpop.f32.mrb[0].mxu0
        %v4094 = vadd.f32 0.0, %v4093
        %v4095 = vpop.f32.mrb[0].mxu0
        %4096 = vmatprep.mubr.bf16.mxu0 0
        %4097 = vmatmul.mubr.bf16.gmra.mrb[0].mxu0 %v1607
        %v4098 = vpop.f32.mrb[0].mxu0
        %v4099 = vadd.f32 0.0, %v4098
        %v4100 = vpop.f32.mrb[0].mxu0
        %v4101 = vpop.f32.mrb[0].mxu0
        %v4102 = vadd.f32 0.0, %v4101
        %v4103 = vpop.f32.mrb[0].mxu0
        %4104 = vmatprep.mubr.bf16.mxu0 0
        %4105 = vmatmul.mubr.bf16.gmra.mrb[0].mxu0 %v1610
        %v4106 = vpop.f32.mrb[0].mxu0
        %v4107 = vadd.f32 0.0, %v4106
        %v4108 = vpop.f32.mrb[0].mxu0
        %v4109 = vpop.f32.mrb[0].mxu0
        %v4110 = vadd.f32 0.0, %v4109
        %v4111 = vpop.f32.mrb[0].mxu0
        %4112 = vmatprep.mubr.bf16.mxu0 0
        %4113 = vmatmul.mubr.bf16.gmra.mrb[0].mxu0 %v1613
        %v4114 = vpop.f32.mrb[0].mxu0
        %v4115 = vadd.f32 0.0, %v4114
        %v4116 = vpop.f32.mrb[0].mxu0
        %v4117 = vpop.f32.mrb[0].mxu0
        %v4118 = vadd.f32 0.0, %v4117
        %v4119 = vpop.f32.mrb[0].mxu0
        %4120 = vmatprep.mubr.bf16.mxu0 0
        %4121 = vmatmul.mubr.bf16.gmra.mrb[0].mxu0 %v1616
        %v4122 = vpop.f32.mrb[0].mxu0
        %v4123 = vadd.f32 0.0, %v4122
        %v4124 = vpop.f32.mrb[0].mxu0
        %v4125 = vpop.f32.mrb[0].mxu0
        %v4126 = vadd.f32 0.0, %v4125
        %v4127 = vpop.f32.mrb[0].mxu0
        %4128 = vmatprep.mubr.bf16.mxu0 0
        %4129 = vmatmul.mubr.bf16.gmra.mrb[0].mxu0 %v1619
        %v4130 = vpop.f32.mrb[0].mxu0
        %v4131 = vadd.f32 0.0, %v4130
        %v4132 = vpop.f32.mrb[0].mxu0
        %v4133 = vpop.f32.mrb[0].mxu0
        %v4134 = vadd.f32 0.0, %v4133
        %v4135 = vpop.f32.mrb[0].mxu0
        %4136 = vmatprep.mubr.bf16.mxu0 0
        %4137 = vmatmul.mubr.bf16.gmra.mrb[0].mxu0 %v1622
        %v4138 = vpop.f32.mrb[0].mxu0
        %v4139 = vadd.f32 0.0, %v4138
        %v4140 = vpop.f32.mrb[0].mxu0
        %v4141 = vpop.f32.mrb[0].mxu0
        %v4142 = vadd.f32 0.0, %v4141
        %v4143 = vpop.f32.mrb[0].mxu0
        %4144 = vmatprep.mubr.bf16.mxu0 0
        %4145 = vmatmul.mubr.bf16.gmra.mrb[0].mxu0 %v1625
        %v4146 = vpop.f32.mrb[0].mxu0
        %v4147 = vadd.f32 0.0, %v4146
        %v4148 = vpop.f32.mrb[0].mxu0
        %v4149 = vpop.f32.mrb[0].mxu0
        %v4150 = vadd.f32 0.0, %v4149
        %v4151 = vpop.f32.mrb[0].mxu0
        %4152 = vmatprep.mubr.bf16.mxu0 0
        %4153 = vmatmul.mubr.bf16.gmra.mrb[0].mxu0 %v1628
        %v4154 = vpop.f32.mrb[0].mxu0
        %v4155 = vadd.f32 0.0, %v4154
        %v4156 = vpop.f32.mrb[0].mxu0
        %v4157 = vpop.f32.mrb[0].mxu0
        %v4158 = vadd.f32 0.0, %v4157
        %v4159 = vpop.f32.mrb[0].mxu0
        %4160 = vmatprep.mubr.bf16.mxu0 0
        %4161 = vmatmul.mubr.bf16.gmra.mrb[0].mxu0 %v1631
        %v4162 = vpop.f32.mrb[0].mxu0
        %v4163 = vadd.f32 0.0, %v4162
        %v4164 = vpop.f32.mrb[0].mxu0
        %v4165 = vpop.f32.mrb[0].mxu0
        %v4166 = vadd.f32 0.0, %v4165
        %v4167 = vpop.f32.mrb[0].mxu0
        %4168 = vmatprep.mubr.bf16.mxu0 0
        %4169 = vmatmul.mubr.bf16.gmra.mrb[0].mxu0 %v1634
        %v4170 = vpop.f32.mrb[0].mxu0
        %v4171 = vadd.f32 0.0, %v4170
        %v4172 = vpop.f32.mrb[0].mxu0
        %v4173 = vpop.f32.mrb[0].mxu0
        %v4174 = vadd.f32 0.0, %v4173
        %v4175 = vpop.f32.mrb[0].mxu0
        %4176 = vmatprep.mubr.bf16.mxu0 0
        %4177 = vmatmul.mubr.bf16.gmra.mrb[0].mxu0 %v2779
        %v4178 = vpop.f32.mrb[0].mxu0
        %v4179 = vadd.f32 0.0, %v4178
        %v4180 = vpop.f32.mrb[0].mxu0
        %v4181 = vpop.f32.mrb[0].mxu0
        %v4182 = vadd.f32 0.0, %v4181
        %v4183 = vpop.f32.mrb[0].mxu0
        %4184 = vmatprep.mubr.bf16.mxu0 0
        %4185 = vmatmul.mubr.bf16.gmra.mrb[0].mxu0 %v2782
        %v4186 = vpop.f32.mrb[0].mxu0
        %v4187 = vadd.f32 0.0, %v4186
        %v4188 = vpop.f32.mrb[0].mxu0
        %v4189 = vpop.f32.mrb[0].mxu0
        %v4190 = vadd.f32 0.0, %v4189
        %v4191 = vpop.f32.mrb[0].mxu0
        %4192 = vmatprep.mubr.bf16.mxu0 0
        %4193 = vmatmul.mubr.bf16.gmra.mrb[0].mxu0 %v3917
        %v4194 = vpop.f32.mrb[0].mxu0
        %v4195 = vadd.f32 0.0, %v4194
        %v4196 = vpop.f32.mrb[0].mxu0
        %v4197 = vpop.f32.mrb[0].mxu0
        %v4198 = vadd.f32 0.0, %v4197
        %v4199 = vpop.f32.mrb[0].mxu0
        %4200 = vmatprep.mubr.bf16.mxu0 0
        %4201 = vmatmul.mubr.bf16.gmra.mrb[0].mxu0 %v3920
        %v4202 = vpop.f32.mrb[0].mxu0
        %v4203 = vadd.f32 0.0, %v4202
        %v4204 = vpop.f32.mrb[0].mxu0
        %v4205 = vpop.f32.mrb[0].mxu0
        %v4206 = vadd.f32 0.0, %v4205
        %v4207 = vpop.f32.mrb[0].mxu0
        %4208 = vmatprep.mubr.bf16.mxu0 0
        %4209 = vmatmul.mubr.bf16.gmra.mrb[0].mxu0 %v3923
        %v4210 = vpop.f32.mrb[0].mxu0
        %v4211 = vadd.f32 0.0, %v4210
        %v4212 = vpop.f32.mrb[0].mxu0
        %v4213 = vpop.f32.mrb[0].mxu0
        %v4214 = vadd.f32 0.0, %v4213
        %v4215 = vpop.f32.mrb[0].mxu0
        %4216 = vdwg.mxu0
        %v4217 = vadd.f32 %v3846, %v3963
        %v4218 = vadd.f32 %v3847, %v3966
        %v4219 = vadd.f32 %v3848, %v3971
        %v4220 = vadd.f32 %v3849, %v3974
        %v4221 = vadd.f32 %v3850, %v3979
        %v4222 = vadd.f32 %v3851, %v3982
        %v4223 = vadd.f32 %v3852, %v3987
        %v4224 = vadd.f32 %v3853, %v3990
        %v4225 = vadd.f32 %v3854, %v3995
        %v4226 = vadd.f32 %v3855, %v3998
        %v4227 = vadd.f32 %v3856, %v4003
        %v4228 = vadd.f32 %v3857, %v4006
        %v4229 = vadd.f32 %v3858, %v4011
        %v4230 = vadd.f32 %v3859, %v4014
        %v4231 = vadd.f32 %v3860, %v4019
        %v4232 = vadd.f32 %v3861, %v4022
        %v4233 = vadd.f32 %v3862, %v4027
        %v4234 = vadd.f32 %v3863, %v4030
        %v4235 = vadd.f32 %v3864, %v4035
        %v4236 = vadd.f32 %v3865, %v4038
        %v4237 = vadd.f32 %v3866, %v4043
        %v4238 = vadd.f32 %v3867, %v4046
        %v4239 = vadd.f32 %v3868, %v4051
        %v4240 = vadd.f32 %v3869, %v4054
        %v4241 = vadd.f32 %v3870, %v4059
        %v4242 = vadd.f32 %v3871, %v4062
        %v4243 = vadd.f32 %v3872, %v4067
        %v4244 = vadd.f32 %v3873, %v4070
        %v4245 = vadd.f32 %v3874, %v4075
        %v4246 = vadd.f32 %v3875, %v4078
        %v4247 = vadd.f32 %v3876, %v4083
        %v4248 = vadd.f32 %v3877, %v4086
        %v4249 = vadd.f32 %v3878, %v4091
        %v4250 = vadd.f32 %v3879, %v4094
        %v4251 = vadd.f32 %v3880, %v4099
        %v4252 = vadd.f32 %v3881, %v4102
        %v4253 = vadd.f32 %v3882, %v4107
        %v4254 = vadd.f32 %v3883, %v4110
        %v4255 = vadd.f32 %v3884, %v4115
        %v4256 = vadd.f32 %v3885, %v4118
        %v4257 = vadd.f32 %v3886, %v4123
        %v4258 = vadd.f32 %v3887, %v4126
        %v4259 = vadd.f32 %v3888, %v4131
        %v4260 = vadd.f32 %v3889, %v4134
        %v4261 = vadd.f32 %v3890, %v4139
        %v4262 = vadd.f32 %v3891, %v4142
        %v4263 = vadd.f32 %v3892, %v4147
        %v4264 = vadd.f32 %v3893, %v4150
        %v4265 = vadd.f32 %v3894, %v4155
        %v4266 = vadd.f32 %v3895, %v4158
        %v4267 = vadd.f32 %v3896, %v4163
        %v4268 = vadd.f32 %v3897, %v4166
        %v4269 = vadd.f32 %v3898, %v4171
        %v4270 = vadd.f32 %v3899, %v4174
        %v4271 = vadd.f32 %v3900, %v4179
        %v4272 = vadd.f32 %v3901, %v4182
        %v4273 = vadd.f32 %v3902, %v4187
        %v4274 = vadd.f32 %v3903, %v4190
        %v4275 = vadd.f32 %v3904, %v4195
        %v4276 = vadd.f32 %v3905, %v4198
        %v4277 = vadd.f32 %v3906, %v4203
        %v4278 = vadd.f32 %v3907, %v4206
        %v4279 = vadd.f32 %v3908, %v4211
        %v4280 = vadd.f32 %v3909, %v4214
        %v4282 = vlaneseq
        %v4283 = vshrl.u32 %v4282, 7
        %v4284 = vsub.s32 0, %v4283
        %v4285 = vrot.slane %v199, %v4284
        %v4287 = vmul.f32 %v4217, %v4285
        %v4288 = vmul.f32 %v4218, %v4285
        %v4289 = vmul.f32 %v4219, %v4285
        %v4290 = vmul.f32 %v4220, %v4285
        %v4291 = vmul.f32 %v4221, %v4285
        %v4292 = vmul.f32 %v4222, %v4285
        %v4293 = vmul.f32 %v4223, %v4285
        %v4294 = vmul.f32 %v4224, %v4285
        %v4295 = vmul.f32 %v4225, %v4285
        %v4296 = vmul.f32 %v4226, %v4285
        %v4297 = vmul.f32 %v4227, %v4285
        %v4298 = vmul.f32 %v4228, %v4285
        %v4299 = vmul.f32 %v4229, %v4285
        %v4300 = vmul.f32 %v4230, %v4285
        %v4301 = vmul.f32 %v4231, %v4285
        %v4302 = vmul.f32 %v4232, %v4285
        %v4303 = vmul.f32 %v4233, %v4285
        %v4304 = vmul.f32 %v4234, %v4285
        %v4305 = vmul.f32 %v4235, %v4285
        %v4306 = vmul.f32 %v4236, %v4285
        %v4307 = vmul.f32 %v4237, %v4285
        %v4308 = vmul.f32 %v4238, %v4285
        %v4309 = vmul.f32 %v4239, %v4285
        %v4310 = vmul.f32 %v4240, %v4285
        %v4311 = vmul.f32 %v4241, %v4285
        %v4312 = vmul.f32 %v4242, %v4285
        %v4313 = vmul.f32 %v4243, %v4285
        %v4314 = vmul.f32 %v4244, %v4285
        %v4315 = vmul.f32 %v4245, %v4285
        %v4316 = vmul.f32 %v4246, %v4285
        %v4317 = vmul.f32 %v4247, %v4285
        %v4318 = vmul.f32 %v4248, %v4285
        %v4319 = vmul.f32 %v4249, %v4285
        %v4320 = vmul.f32 %v4250, %v4285
        %v4321 = vmul.f32 %v4251, %v4285
        %v4322 = vmul.f32 %v4252, %v4285
        %v4323 = vmul.f32 %v4253, %v4285
        %v4324 = vmul.f32 %v4254, %v4285
        %v4325 = vmul.f32 %v4255, %v4285
        %v4326 = vmul.f32 %v4256, %v4285
        %v4327 = vmul.f32 %v4257, %v4285
        %v4328 = vmul.f32 %v4258, %v4285
        %v4329 = vmul.f32 %v4259, %v4285
        %v4330 = vmul.f32 %v4260, %v4285
        %v4331 = vmul.f32 %v4261, %v4285
        %v4332 = vmul.f32 %v4262, %v4285
        %v4333 = vmul.f32 %v4263, %v4285
        %v4334 = vmul.f32 %v4264, %v4285
        %v4335 = vmul.f32 %v4265, %v4285
        %v4336 = vmul.f32 %v4266, %v4285
        %v4337 = vmul.f32 %v4267, %v4285
        %v4338 = vmul.f32 %v4268, %v4285
        %v4339 = vmul.f32 %v4269, %v4285
        %v4340 = vmul.f32 %v4270, %v4285
        %v4341 = vmul.f32 %v4271, %v4285
        %v4342 = vmul.f32 %v4272, %v4285
        %v4343 = vmul.f32 %v4273, %v4285
        %v4344 = vmul.f32 %v4274, %v4285
        %v4345 = vmul.f32 %v4275, %v4285
        %v4346 = vmul.f32 %v4276, %v4285
        %v4347 = vmul.f32 %v4277, %v4285
        %v4348 = vmul.f32 %v4278, %v4285
        %v4349 = vmul.f32 %v4279, %v4285
        %v4350 = vmul.f32 %v4280, %v4285
        %v4352 = vlaneseq
        %v4353 = vshrl.u32 %v4352, 7
        %v4354 = vsub.s32 0, %v4353
        %v4355 = vrot.slane %v200, %v4354
        %v4357 = vadd.f32 %v4287, %v4355
        %v4358 = vadd.f32 %v4288, %v4355
        %v4359 = vadd.f32 %v4289, %v4355
        %v4360 = vadd.f32 %v4290, %v4355
        %v4361 = vadd.f32 %v4291, %v4355
        %v4362 = vadd.f32 %v4292, %v4355
        %v4363 = vadd.f32 %v4293, %v4355
        %v4364 = vadd.f32 %v4294, %v4355
        %v4365 = vadd.f32 %v4295, %v4355
        %v4366 = vadd.f32 %v4296, %v4355
        %v4367 = vadd.f32 %v4297, %v4355
        %v4368 = vadd.f32 %v4298, %v4355
        %v4369 = vadd.f32 %v4299, %v4355
        %v4370 = vadd.f32 %v4300, %v4355
        %v4371 = vadd.f32 %v4301, %v4355
        %v4372 = vadd.f32 %v4302, %v4355
        %v4373 = vadd.f32 %v4303, %v4355
        %v4374 = vadd.f32 %v4304, %v4355
        %v4375 = vadd.f32 %v4305, %v4355
        %v4376 = vadd.f32 %v4306, %v4355
        %v4377 = vadd.f32 %v4307, %v4355
        %v4378 = vadd.f32 %v4308, %v4355
        %v4379 = vadd.f32 %v4309, %v4355
        %v4380 = vadd.f32 %v4310, %v4355
        %v4381 = vadd.f32 %v4311, %v4355
        %v4382 = vadd.f32 %v4312, %v4355
        %v4383 = vadd.f32 %v4313, %v4355
        %v4384 = vadd.f32 %v4314, %v4355
        %v4385 = vadd.f32 %v4315, %v4355
        %v4386 = vadd.f32 %v4316, %v4355
        %v4387 = vadd.f32 %v4317, %v4355
        %v4388 = vadd.f32 %v4318, %v4355
        %v4389 = vadd.f32 %v4319, %v4355
        %v4390 = vadd.f32 %v4320, %v4355
        %v4391 = vadd.f32 %v4321, %v4355
        %v4392 = vadd.f32 %v4322, %v4355
        %v4393 = vadd.f32 %v4323, %v4355
        %v4394 = vadd.f32 %v4324, %v4355
        %v4395 = vadd.f32 %v4325, %v4355
        %v4396 = vadd.f32 %v4326, %v4355
        %v4397 = vadd.f32 %v4327, %v4355
        %v4398 = vadd.f32 %v4328, %v4355
        %v4399 = vadd.f32 %v4329, %v4355
        %v4400 = vadd.f32 %v4330, %v4355
        %v4401 = vadd.f32 %v4331, %v4355
        %v4402 = vadd.f32 %v4332, %v4355
        %v4403 = vadd.f32 %v4333, %v4355
        %v4404 = vadd.f32 %v4334, %v4355
        %v4405 = vadd.f32 %v4335, %v4355
        %v4406 = vadd.f32 %v4336, %v4355
        %v4407 = vadd.f32 %v4337, %v4355
        %v4408 = vadd.f32 %v4338, %v4355
        %v4409 = vadd.f32 %v4339, %v4355
        %v4410 = vadd.f32 %v4340, %v4355
        %v4411 = vadd.f32 %v4341, %v4355
        %v4412 = vadd.f32 %v4342, %v4355
        %v4413 = vadd.f32 %v4343, %v4355
        %v4414 = vadd.f32 %v4344, %v4355
        %v4415 = vadd.f32 %v4345, %v4355
        %v4416 = vadd.f32 %v4346, %v4355
        %v4417 = vadd.f32 %v4347, %v4355
        %v4418 = vadd.f32 %v4348, %v4355
        %v4419 = vadd.f32 %v4349, %v4355
        %v4420 = vadd.f32 %v4350, %v4355
        %v4421 = vmin.f32 %v4357, 20.0
        %v4422 = vmin.f32 %v4358, 20.0
        %v4423 = vmin.f32 %v4359, 20.0
        %v4424 = vmin.f32 %v4360, 20.0
        %v4425 = vmin.f32 %v4361, 20.0
        %v4426 = vmin.f32 %v4362, 20.0
        %v4427 = vmin.f32 %v4363, 20.0
        %v4428 = vmin.f32 %v4364, 20.0
        %v4429 = vmin.f32 %v4365, 20.0
        %v4430 = vmin.f32 %v4366, 20.0
        %v4431 = vmin.f32 %v4367, 20.0
        %v4432 = vmin.f32 %v4368, 20.0
        %v4433 = vmin.f32 %v4369, 20.0
        %v4434 = vmin.f32 %v4370, 20.0
        %v4435 = vmin.f32 %v4371, 20.0
        %v4436 = vmin.f32 %v4372, 20.0
        %v4437 = vmin.f32 %v4373, 20.0
        %v4438 = vmin.f32 %v4374, 20.0
        %v4439 = vmin.f32 %v4375, 20.0
        %v4440 = vmin.f32 %v4376, 20.0
        %v4441 = vmin.f32 %v4377, 20.0
        %v4442 = vmin.f32 %v4378, 20.0
        %v4443 = vmin.f32 %v4379, 20.0
        %v4444 = vmin.f32 %v4380, 20.0
        %v4445 = vmin.f32 %v4381, 20.0
        %v4446 = vmin.f32 %v4382, 20.0
        %v4447 = vmin.f32 %v4383, 20.0
        %v4448 = vmin.f32 %v4384, 20.0
        %v4449 = vmin.f32 %v4385, 20.0
        %v4450 = vmin.f32 %v4386, 20.0
        %v4451 = vmin.f32 %v4387, 20.0
        %v4452 = vmin.f32 %v4388, 20.0
        %v4453 = vmin.f32 %v4389, 20.0
        %v4454 = vmin.f32 %v4390, 20.0
        %v4455 = vmin.f32 %v4391, 20.0
        %v4456 = vmin.f32 %v4392, 20.0
        %v4457 = vmin.f32 %v4393, 20.0
        %v4458 = vmin.f32 %v4394, 20.0
        %v4459 = vmin.f32 %v4395, 20.0
        %v4460 = vmin.f32 %v4396, 20.0
        %v4461 = vmin.f32 %v4397, 20.0
        %v4462 = vmin.f32 %v4398, 20.0
        %v4463 = vmin.f32 %v4399, 20.0
        %v4464 = vmin.f32 %v4400, 20.0
        %v4465 = vmin.f32 %v4401, 20.0
        %v4466 = vmin.f32 %v4402, 20.0
        %v4467 = vmin.f32 %v4403, 20.0
        %v4468 = vmin.f32 %v4404, 20.0
        %v4469 = vmin.f32 %v4405, 20.0
        %v4470 = vmin.f32 %v4406, 20.0
        %v4471 = vmin.f32 %v4407, 20.0
        %v4472 = vmin.f32 %v4408, 20.0
        %v4473 = vmin.f32 %v4409, 20.0
        %v4474 = vmin.f32 %v4410, 20.0
        %v4475 = vmin.f32 %v4411, 20.0
        %v4476 = vmin.f32 %v4412, 20.0
        %v4477 = vmin.f32 %v4413, 20.0
        %v4478 = vmin.f32 %v4414, 20.0
        %v4479 = vmin.f32 %v4415, 20.0
        %v4480 = vmin.f32 %v4416, 20.0
        %v4481 = vmin.f32 %v4417, 20.0
        %v4482 = vmin.f32 %v4418, 20.0
        %v4483 = vmin.f32 %v4419, 20.0
        %v4484 = vmin.f32 %v4420, 20.0
        %v4485 = vmul.f32 %v4421, 1.442695
        %v4486 = vpow.pop %v4485
        %v4487 = vmul.f32 %v4422, 1.442695
        %v4488 = vpow.pop %v4487
        %v4489 = vmul.f32 %v4423, 1.442695
        %v4490 = vpow.pop %v4489
        %v4491 = vmul.f32 %v4424, 1.442695
        %v4492 = vpow.pop %v4491
        %v4493 = vmul.f32 %v4425, 1.442695
        %v4494 = vpow.pop %v4493
        %v4495 = vmul.f32 %v4426, 1.442695
        %v4496 = vpow.pop %v4495
        %v4497 = vmul.f32 %v4427, 1.442695
        %v4498 = vpow.pop %v4497
        %v4499 = vmul.f32 %v4428, 1.442695
        %v4500 = vpow.pop %v4499
        %v4501 = vmul.f32 %v4429, 1.442695
        %v4502 = vpow.pop %v4501
        %v4503 = vmul.f32 %v4430, 1.442695
        %v4504 = vpow.pop %v4503
        %v4505 = vmul.f32 %v4431, 1.442695
        %v4506 = vpow.pop %v4505
        %v4507 = vmul.f32 %v4432, 1.442695
        %v4508 = vpow.pop %v4507
        %v4509 = vmul.f32 %v4433, 1.442695
        %v4510 = vpow.pop %v4509
        %v4511 = vmul.f32 %v4434, 1.442695
        %v4512 = vpow.pop %v4511
        %v4513 = vmul.f32 %v4435, 1.442695
        %v4514 = vpow.pop %v4513
        %v4515 = vmul.f32 %v4436, 1.442695
        %v4516 = vpow.pop %v4515
        %v4517 = vmul.f32 %v4437, 1.442695
        %v4518 = vpow.pop %v4517
        %v4519 = vmul.f32 %v4438, 1.442695
        %v4520 = vpow.pop %v4519
        %v4521 = vmul.f32 %v4439, 1.442695
        %v4522 = vpow.pop %v4521
        %v4523 = vmul.f32 %v4440, 1.442695
        %v4524 = vpow.pop %v4523
        %v4525 = vmul.f32 %v4441, 1.442695
        %v4526 = vpow.pop %v4525
        %v4527 = vmul.f32 %v4442, 1.442695
        %v4528 = vpow.pop %v4527
        %v4529 = vmul.f32 %v4443, 1.442695
        %v4530 = vpow.pop %v4529
        %v4531 = vmul.f32 %v4444, 1.442695
        %v4532 = vpow.pop %v4531
        %v4533 = vmul.f32 %v4445, 1.442695
        %v4534 = vpow.pop %v4533
        %v4535 = vmul.f32 %v4446, 1.442695
        %v4536 = vpow.pop %v4535
        %v4537 = vmul.f32 %v4447, 1.442695
        %v4538 = vpow.pop %v4537
        %v4539 = vmul.f32 %v4448, 1.442695
        %v4540 = vpow.pop %v4539
        %v4541 = vmul.f32 %v4449, 1.442695
        %v4542 = vpow.pop %v4541
        %v4543 = vmul.f32 %v4450, 1.442695
        %v4544 = vpow.pop %v4543
        %v4545 = vmul.f32 %v4451, 1.442695
        %v4546 = vpow.pop %v4545
        %v4547 = vmul.f32 %v4452, 1.442695
        %v4548 = vpow.pop %v4547
        %v4549 = vmul.f32 %v4453, 1.442695
        %v4550 = vpow.pop %v4549
        %v4551 = vmul.f32 %v4454, 1.442695
        %v4552 = vpow.pop %v4551
        %v4553 = vmul.f32 %v4455, 1.442695
        %v4554 = vpow.pop %v4553
        %v4555 = vmul.f32 %v4456, 1.442695
        %v4556 = vpow.pop %v4555
        %v4557 = vmul.f32 %v4457, 1.442695
        %v4558 = vpow.pop %v4557
        %v4559 = vmul.f32 %v4458, 1.442695
        %v4560 = vpow.pop %v4559
        %v4561 = vmul.f32 %v4459, 1.442695
        %v4562 = vpow.pop %v4561
        %v4563 = vmul.f32 %v4460, 1.442695
        %v4564 = vpow.pop %v4563
        %v4565 = vmul.f32 %v4461, 1.442695
        %v4566 = vpow.pop %v4565
        %v4567 = vmul.f32 %v4462, 1.442695
        %v4568 = vpow.pop %v4567
        %v4569 = vmul.f32 %v4463, 1.442695
        %v4570 = vpow.pop %v4569
        %v4571 = vmul.f32 %v4464, 1.442695
        %v4572 = vpow.pop %v4571
        %v4573 = vmul.f32 %v4465, 1.442695
        %v4574 = vpow.pop %v4573
        %v4575 = vmul.f32 %v4466, 1.442695
        %v4576 = vpow.pop %v4575
        %v4577 = vmul.f32 %v4467, 1.442695
        %v4578 = vpow.pop %v4577
        %v4579 = vmul.f32 %v4468, 1.442695
        %v4580 = vpow.pop %v4579
        %v4581 = vmul.f32 %v4469, 1.442695
        %v4582 = vpow.pop %v4581
        %v4583 = vmul.f32 %v4470, 1.442695
        %v4584 = vpow.pop %v4583
        %v4585 = vmul.f32 %v4471, 1.442695
        %v4586 = vpow.pop %v4585
        %v4587 = vmul.f32 %v4472, 1.442695
        %v4588 = vpow.pop %v4587
        %v4589 = vmul.f32 %v4473, 1.442695
        %v4590 = vpow.pop %v4589
        %v4591 = vmul.f32 %v4474, 1.442695
        %v4592 = vpow.pop %v4591
        %v4593 = vmul.f32 %v4475, 1.442695
        %v4594 = vpow.pop %v4593
        %v4595 = vmul.f32 %v4476, 1.442695
        %v4596 = vpow.pop %v4595
        %v4597 = vmul.f32 %v4477, 1.442695
        %v4598 = vpow.pop %v4597
        %v4599 = vmul.f32 %v4478, 1.442695
        %v4600 = vpow.pop %v4599
        %v4601 = vmul.f32 %v4479, 1.442695
        %v4602 = vpow.pop %v4601
        %v4603 = vmul.f32 %v4480, 1.442695
        %v4604 = vpow.pop %v4603
        %v4605 = vmul.f32 %v4481, 1.442695
        %v4606 = vpow.pop %v4605
        %v4607 = vmul.f32 %v4482, 1.442695
        %v4608 = vpow.pop %v4607
        %v4609 = vmul.f32 %v4483, 1.442695
        %v4610 = vpow.pop %v4609
        %v4611 = vmul.f32 %v4484, 1.442695
        %v4612 = vpow.pop %v4611
        %v4613 = vmul.f32 %v4486, %v4486
        %v4614 = vmul.f32 %v4488, %v4488
        %v4615 = vmul.f32 %v4490, %v4490
        %v4616 = vmul.f32 %v4492, %v4492
        %v4617 = vmul.f32 %v4494, %v4494
        %v4618 = vmul.f32 %v4496, %v4496
        %v4619 = vmul.f32 %v4498, %v4498
        %v4620 = vmul.f32 %v4500, %v4500
        %v4621 = vmul.f32 %v4502, %v4502
        %v4622 = vmul.f32 %v4504, %v4504
        %v4623 = vmul.f32 %v4506, %v4506
        %v4624 = vmul.f32 %v4508, %v4508
        %v4625 = vmul.f32 %v4510, %v4510
        %v4626 = vmul.f32 %v4512, %v4512
        %v4627 = vmul.f32 %v4514, %v4514
        %v4628 = vmul.f32 %v4516, %v4516
        %v4629 = vmul.f32 %v4518, %v4518
        %v4630 = vmul.f32 %v4520, %v4520
        %v4631 = vmul.f32 %v4522, %v4522
        %v4632 = vmul.f32 %v4524, %v4524
        %v4633 = vmul.f32 %v4526, %v4526
        %v4634 = vmul.f32 %v4528, %v4528
        %v4635 = vmul.f32 %v4530, %v4530
        %v4636 = vmul.f32 %v4532, %v4532
        %v4637 = vmul.f32 %v4534, %v4534
        %v4638 = vmul.f32 %v4536, %v4536
        %v4639 = vmul.f32 %v4538, %v4538
        %v4640 = vmul.f32 %v4540, %v4540
        %v4641 = vmul.f32 %v4542, %v4542
        %v4642 = vmul.f32 %v4544, %v4544
        %v4643 = vmul.f32 %v4546, %v4546
        %v4644 = vmul.f32 %v4548, %v4548
        %v4645 = vmul.f32 %v4550, %v4550
        %v4646 = vmul.f32 %v4552, %v4552
        %v4647 = vmul.f32 %v4554, %v4554
        %v4648 = vmul.f32 %v4556, %v4556
        %v4649 = vmul.f32 %v4558, %v4558
        %v4650 = vmul.f32 %v4560, %v4560
        %v4651 = vmul.f32 %v4562, %v4562
        %v4652 = vmul.f32 %v4564, %v4564
        %v4653 = vmul.f32 %v4566, %v4566
        %v4654 = vmul.f32 %v4568, %v4568
        %v4655 = vmul.f32 %v4570, %v4570
        %v4656 = vmul.f32 %v4572, %v4572
        %v4657 = vmul.f32 %v4574, %v4574
        %v4658 = vmul.f32 %v4576, %v4576
        %v4659 = vmul.f32 %v4578, %v4578
        %v4660 = vmul.f32 %v4580, %v4580
        %v4661 = vmul.f32 %v4582, %v4582
        %v4662 = vmul.f32 %v4584, %v4584
        %v4663 = vmul.f32 %v4586, %v4586
        %v4664 = vmul.f32 %v4588, %v4588
        %v4665 = vmul.f32 %v4590, %v4590
        %v4666 = vmul.f32 %v4592, %v4592
        %v4667 = vmul.f32 %v4594, %v4594
        %v4668 = vmul.f32 %v4596, %v4596
        %v4669 = vmul.f32 %v4598, %v4598
        %v4670 = vmul.f32 %v4600, %v4600
        %v4671 = vmul.f32 %v4602, %v4602
        %v4672 = vmul.f32 %v4604, %v4604
        %v4673 = vmul.f32 %v4606, %v4606
        %v4674 = vmul.f32 %v4608, %v4608
        %v4675 = vmul.f32 %v4610, %v4610
        %v4676 = vmul.f32 %v4612, %v4612
        %v4677 = vmul.f32 %v4486, 2.0
        %v4678 = vmul.f32 %v4488, 2.0
        %v4679 = vmul.f32 %v4490, 2.0
        %v4680 = vmul.f32 %v4492, 2.0
        %v4681 = vmul.f32 %v4494, 2.0
        %v4682 = vmul.f32 %v4496, 2.0
        %v4683 = vmul.f32 %v4498, 2.0
        %v4684 = vmul.f32 %v4500, 2.0
        %v4685 = vmul.f32 %v4502, 2.0
        %v4686 = vmul.f32 %v4504, 2.0
        %v4687 = vmul.f32 %v4506, 2.0
        %v4688 = vmul.f32 %v4508, 2.0
        %v4689 = vmul.f32 %v4510, 2.0
        %v4690 = vmul.f32 %v4512, 2.0
        %v4691 = vmul.f32 %v4514, 2.0
        %v4692 = vmul.f32 %v4516, 2.0
        %v4693 = vmul.f32 %v4518, 2.0
        %v4694 = vmul.f32 %v4520, 2.0
        %v4695 = vmul.f32 %v4522, 2.0
        %v4696 = vmul.f32 %v4524, 2.0
        %v4697 = vmul.f32 %v4526, 2.0
        %v4698 = vmul.f32 %v4528, 2.0
        %v4699 = vmul.f32 %v4530, 2.0
        %v4700 = vmul.f32 %v4532, 2.0
        %v4701 = vmul.f32 %v4534, 2.0
        %v4702 = vmul.f32 %v4536, 2.0
        %v4703 = vmul.f32 %v4538, 2.0
        %v4704 = vmul.f32 %v4540, 2.0
        %v4705 = vmul.f32 %v4542, 2.0
        %v4706 = vmul.f32 %v4544, 2.0
        %v4707 = vmul.f32 %v4546, 2.0
        %v4708 = vmul.f32 %v4548, 2.0
        %v4709 = vmul.f32 %v4550, 2.0
        %v4710 = vmul.f32 %v4552, 2.0
        %v4711 = vmul.f32 %v4554, 2.0
        %v4712 = vmul.f32 %v4556, 2.0
        %v4713 = vmul.f32 %v4558, 2.0
        %v4714 = vmul.f32 %v4560, 2.0
        %v4715 = vmul.f32 %v4562, 2.0
        %v4716 = vmul.f32 %v4564, 2.0
        %v4717 = vmul.f32 %v4566, 2.0
        %v4718 = vmul.f32 %v4568, 2.0
        %v4719 = vmul.f32 %v4570, 2.0
        %v4720 = vmul.f32 %v4572, 2.0
        %v4721 = vmul.f32 %v4574, 2.0
        %v4722 = vmul.f32 %v4576, 2.0
        %v4723 = vmul.f32 %v4578, 2.0
        %v4724 = vmul.f32 %v4580, 2.0
        %v4725 = vmul.f32 %v4582, 2.0
        %v4726 = vmul.f32 %v4584, 2.0
        %v4727 = vmul.f32 %v4586, 2.0
        %v4728 = vmul.f32 %v4588, 2.0
        %v4729 = vmul.f32 %v4590, 2.0
        %v4730 = vmul.f32 %v4592, 2.0
        %v4731 = vmul.f32 %v4594, 2.0
        %v4732 = vmul.f32 %v4596, 2.0
        %v4733 = vmul.f32 %v4598, 2.0
        %v4734 = vmul.f32 %v4600, 2.0
        %v4735 = vmul.f32 %v4602, 2.0
        %v4736 = vmul.f32 %v4604, 2.0
        %v4737 = vmul.f32 %v4606, 2.0
        %v4738 = vmul.f32 %v4608, 2.0
        %v4739 = vmul.f32 %v4610, 2.0
        %v4740 = vmul.f32 %v4612, 2.0
        %v4741 = vadd.f32 %v4613, %v4677
        %v4742 = vadd.f32 %v4614, %v4678
        %v4743 = vadd.f32 %v4615, %v4679
        %v4744 = vadd.f32 %v4616, %v4680
        %v4745 = vadd.f32 %v4617, %v4681
        %v4746 = vadd.f32 %v4618, %v4682
        %v4747 = vadd.f32 %v4619, %v4683
        %v4748 = vadd.f32 %v4620, %v4684
        %v4749 = vadd.f32 %v4621, %v4685
        %v4750 = vadd.f32 %v4622, %v4686
        %v4751 = vadd.f32 %v4623, %v4687
        %v4752 = vadd.f32 %v4624, %v4688
        %v4753 = vadd.f32 %v4625, %v4689
        %v4754 = vadd.f32 %v4626, %v4690
        %v4755 = vadd.f32 %v4627, %v4691
        %v4756 = vadd.f32 %v4628, %v4692
        %v4757 = vadd.f32 %v4629, %v4693
        %v4758 = vadd.f32 %v4630, %v4694
        %v4759 = vadd.f32 %v4631, %v4695
        %v4760 = vadd.f32 %v4632, %v4696
        %v4761 = vadd.f32 %v4633, %v4697
        %v4762 = vadd.f32 %v4634, %v4698
        %v4763 = vadd.f32 %v4635, %v4699
        %v4764 = vadd.f32 %v4636, %v4700
        %v4765 = vadd.f32 %v4637, %v4701
        %v4766 = vadd.f32 %v4638, %v4702
        %v4767 = vadd.f32 %v4639, %v4703
        %v4768 = vadd.f32 %v4640, %v4704
        %v4769 = vadd.f32 %v4641, %v4705
        %v4770 = vadd.f32 %v4642, %v4706
        %v4771 = vadd.f32 %v4643, %v4707
        %v4772 = vadd.f32 %v4644, %v4708
        %v4773 = vadd.f32 %v4645, %v4709
        %v4774 = vadd.f32 %v4646, %v4710
        %v4775 = vadd.f32 %v4647, %v4711
        %v4776 = vadd.f32 %v4648, %v4712
        %v4777 = vadd.f32 %v4649, %v4713
        %v4778 = vadd.f32 %v4650, %v4714
        %v4779 = vadd.f32 %v4651, %v4715
        %v4780 = vadd.f32 %v4652, %v4716
        %v4781 = vadd.f32 %v4653, %v4717
        %v4782 = vadd.f32 %v4654, %v4718
        %v4783 = vadd.f32 %v4655, %v4719
        %v4784 = vadd.f32 %v4656, %v4720
        %v4785 = vadd.f32 %v4657, %v4721
        %v4786 = vadd.f32 %v4658, %v4722
        %v4787 = vadd.f32 %v4659, %v4723
        %v4788 = vadd.f32 %v4660, %v4724
        %v4789 = vadd.f32 %v4661, %v4725
        %v4790 = vadd.f32 %v4662, %v4726
        %v4791 = vadd.f32 %v4663, %v4727
        %v4792 = vadd.f32 %v4664, %v4728
        %v4793 = vadd.f32 %v4665, %v4729
        %v4794 = vadd.f32 %v4666, %v4730
        %v4795 = vadd.f32 %v4667, %v4731
        %v4796 = vadd.f32 %v4668, %v4732
        %v4797 = vadd.f32 %v4669, %v4733
        %v4798 = vadd.f32 %v4670, %v4734
        %v4799 = vadd.f32 %v4671, %v4735
        %v4800 = vadd.f32 %v4672, %v4736
        %v4801 = vadd.f32 %v4673, %v4737
        %v4802 = vadd.f32 %v4674, %v4738
        %v4803 = vadd.f32 %v4675, %v4739
        %v4804 = vadd.f32 %v4676, %v4740
        %v4805 = vmul.f32 %v4357, %v4741
        %v4806 = vmul.f32 %v4358, %v4742
        %v4807 = vmul.f32 %v4359, %v4743
        %v4808 = vmul.f32 %v4360, %v4744
        %v4809 = vmul.f32 %v4361, %v4745
        %v4810 = vmul.f32 %v4362, %v4746
        %v4811 = vmul.f32 %v4363, %v4747
        %v4812 = vmul.f32 %v4364, %v4748
        %v4813 = vmul.f32 %v4365, %v4749
        %v4814 = vmul.f32 %v4366, %v4750
        %v4815 = vmul.f32 %v4367, %v4751
        %v4816 = vmul.f32 %v4368, %v4752
        %v4817 = vmul.f32 %v4369, %v4753
        %v4818 = vmul.f32 %v4370, %v4754
        %v4819 = vmul.f32 %v4371, %v4755
        %v4820 = vmul.f32 %v4372, %v4756
        %v4821 = vmul.f32 %v4373, %v4757
        %v4822 = vmul.f32 %v4374, %v4758
        %v4823 = vmul.f32 %v4375, %v4759
        %v4824 = vmul.f32 %v4376, %v4760
        %v4825 = vmul.f32 %v4377, %v4761
        %v4826 = vmul.f32 %v4378, %v4762
        %v4827 = vmul.f32 %v4379, %v4763
        %v4828 = vmul.f32 %v4380, %v4764
        %v4829 = vmul.f32 %v4381, %v4765
        %v4830 = vmul.f32 %v4382, %v4766
        %v4831 = vmul.f32 %v4383, %v4767
        %v4832 = vmul.f32 %v4384, %v4768
        %v4833 = vmul.f32 %v4385, %v4769
        %v4834 = vmul.f32 %v4386, %v4770
        %v4835 = vmul.f32 %v4387, %v4771
        %v4836 = vmul.f32 %v4388, %v4772
        %v4837 = vmul.f32 %v4389, %v4773
        %v4838 = vmul.f32 %v4390, %v4774
        %v4839 = vmul.f32 %v4391, %v4775
        %v4840 = vmul.f32 %v4392, %v4776
        %v4841 = vmul.f32 %v4393, %v4777
        %v4842 = vmul.f32 %v4394, %v4778
        %v4843 = vmul.f32 %v4395, %v4779
        %v4844 = vmul.f32 %v4396, %v4780
        %v4845 = vmul.f32 %v4397, %v4781
        %v4846 = vmul.f32 %v4398, %v4782
        %v4847 = vmul.f32 %v4399, %v4783
        %v4848 = vmul.f32 %v4400, %v4784
        %v4849 = vmul.f32 %v4401, %v4785
        %v4850 = vmul.f32 %v4402, %v4786
        %v4851 = vmul.f32 %v4403, %v4787
        %v4852 = vmul.f32 %v4404, %v4788
        %v4853 = vmul.f32 %v4405, %v4789
        %v4854 = vmul.f32 %v4406, %v4790
        %v4855 = vmul.f32 %v4407, %v4791
        %v4856 = vmul.f32 %v4408, %v4792
        %v4857 = vmul.f32 %v4409, %v4793
        %v4858 = vmul.f32 %v4410, %v4794
        %v4859 = vmul.f32 %v4411, %v4795
        %v4860 = vmul.f32 %v4412, %v4796
        %v4861 = vmul.f32 %v4413, %v4797
        %v4862 = vmul.f32 %v4414, %v4798
        %v4863 = vmul.f32 %v4415, %v4799
        %v4864 = vmul.f32 %v4416, %v4800
        %v4865 = vmul.f32 %v4417, %v4801
        %v4866 = vmul.f32 %v4418, %v4802
        %v4867 = vmul.f32 %v4419, %v4803
        %v4868 = vmul.f32 %v4420, %v4804
        %v4869 = vadd.f32 %v4741, 2.0
        %v4870 = vadd.f32 %v4742, 2.0
        %v4871 = vadd.f32 %v4743, 2.0
        %v4872 = vadd.f32 %v4744, 2.0
        %v4873 = vadd.f32 %v4745, 2.0
        %v4874 = vadd.f32 %v4746, 2.0
        %v4875 = vadd.f32 %v4747, 2.0
        %v4876 = vadd.f32 %v4748, 2.0
        %v4877 = vadd.f32 %v4749, 2.0
        %v4878 = vadd.f32 %v4750, 2.0
        %v4879 = vadd.f32 %v4751, 2.0
        %v4880 = vadd.f32 %v4752, 2.0
        %v4881 = vadd.f32 %v4753, 2.0
        %v4882 = vadd.f32 %v4754, 2.0
        %v4883 = vadd.f32 %v4755, 2.0
        %v4884 = vadd.f32 %v4756, 2.0
        %v4885 = vadd.f32 %v4757, 2.0
        %v4886 = vadd.f32 %v4758, 2.0
        %v4887 = vadd.f32 %v4759, 2.0
        %v4888 = vadd.f32 %v4760, 2.0
        %v4889 = vadd.f32 %v4761, 2.0
        %v4890 = vadd.f32 %v4762, 2.0
        %v4891 = vadd.f32 %v4763, 2.0
        %v4892 = vadd.f32 %v4764, 2.0
        %v4893 = vadd.f32 %v4765, 2.0
        %v4894 = vadd.f32 %v4766, 2.0
        %v4895 = vadd.f32 %v4767, 2.0
        %v4896 = vadd.f32 %v4768, 2.0
        %v4897 = vadd.f32 %v4769, 2.0
        %v4898 = vadd.f32 %v4770, 2.0
        %v4899 = vadd.f32 %v4771, 2.0
        %v4900 = vadd.f32 %v4772, 2.0
        %v4901 = vadd.f32 %v4773, 2.0
        %v4902 = vadd.f32 %v4774, 2.0
        %v4903 = vadd.f32 %v4775, 2.0
        %v4904 = vadd.f32 %v4776, 2.0
        %v4905 = vadd.f32 %v4777, 2.0
        %v4906 = vadd.f32 %v4778, 2.0
        %v4907 = vadd.f32 %v4779, 2.0
        %v4908 = vadd.f32 %v4780, 2.0
        %v4909 = vadd.f32 %v4781, 2.0
        %v4910 = vadd.f32 %v4782, 2.0
        %v4911 = vadd.f32 %v4783, 2.0
        %v4912 = vadd.f32 %v4784, 2.0
        %v4913 = vadd.f32 %v4785, 2.0
        %v4914 = vadd.f32 %v4786, 2.0
        %v4915 = vadd.f32 %v4787, 2.0
        %v4916 = vadd.f32 %v4788, 2.0
        %v4917 = vadd.f32 %v4789, 2.0
        %v4918 = vadd.f32 %v4790, 2.0
        %v4919 = vadd.f32 %v4791, 2.0
        %v4920 = vadd.f32 %v4792, 2.0
        %v4921 = vadd.f32 %v4793, 2.0
        %v4922 = vadd.f32 %v4794, 2.0
        %v4923 = vadd.f32 %v4795, 2.0
        %v4924 = vadd.f32 %v4796, 2.0
        %v4925 = vadd.f32 %v4797, 2.0
        %v4926 = vadd.f32 %v4798, 2.0
        %v4927 = vadd.f32 %v4799, 2.0
        %v4928 = vadd.f32 %v4800, 2.0
        %v4929 = vadd.f32 %v4801, 2.0
        %v4930 = vadd.f32 %v4802, 2.0
        %v4931 = vadd.f32 %v4803, 2.0
        %v4932 = vadd.f32 %v4804, 2.0
        %v4933 = vrcp.pop %v4869
        %v4934 = vrcp.pop %v4870
        %v4935 = vrcp.pop %v4871
        %v4936 = vrcp.pop %v4872
        %v4937 = vrcp.pop %v4873
        %v4938 = vrcp.pop %v4874
        %v4939 = vrcp.pop %v4875
        %v4940 = vrcp.pop %v4876
        %v4941 = vrcp.pop %v4877
        %v4942 = vrcp.pop %v4878
        %v4943 = vrcp.pop %v4879
        %v4944 = vrcp.pop %v4880
        %v4945 = vrcp.pop %v4881
        %v4946 = vrcp.pop %v4882
        %v4947 = vrcp.pop %v4883
        %v4948 = vrcp.pop %v4884
        %v4949 = vrcp.pop %v4885
        %v4950 = vrcp.pop %v4886
        %v4951 = vrcp.pop %v4887
        %v4952 = vrcp.pop %v4888
        %v4953 = vrcp.pop %v4889
        %v4954 = vrcp.pop %v4890
        %v4955 = vrcp.pop %v4891
        %v4956 = vrcp.pop %v4892
        %v4957 = vrcp.pop %v4893
        %v4958 = vrcp.pop %v4894
        %v4959 = vrcp.pop %v4895
        %v4960 = vrcp.pop %v4896
        %v4961 = vrcp.pop %v4897
        %v4962 = vrcp.pop %v4898
        %v4963 = vrcp.pop %v4899
        %v4964 = vrcp.pop %v4900
        %v4965 = vrcp.pop %v4901
        %v4966 = vrcp.pop %v4902
        %v4967 = vrcp.pop %v4903
        %v4968 = vrcp.pop %v4904
        %v4969 = vrcp.pop %v4905
        %v4970 = vrcp.pop %v4906
        %v4971 = vrcp.pop %v4907
        %v4972 = vrcp.pop %v4908
        %v4973 = vrcp.pop %v4909
        %v4974 = vrcp.pop %v4910
        %v4975 = vrcp.pop %v4911
        %v4976 = vrcp.pop %v4912
        %v4977 = vrcp.pop %v4913
        %v4978 = vrcp.pop %v4914
        %v4979 = vrcp.pop %v4915
        %v4980 = vrcp.pop %v4916
        %v4981 = vrcp.pop %v4917
        %v4982 = vrcp.pop %v4918
        %v4983 = vrcp.pop %v4919
        %v4984 = vrcp.pop %v4920
        %v4985 = vrcp.pop %v4921
        %v4986 = vrcp.pop %v4922
        %v4987 = vrcp.pop %v4923
        %v4988 = vrcp.pop %v4924
        %v4989 = vrcp.pop %v4925
        %v4990 = vrcp.pop %v4926
        %v4991 = vrcp.pop %v4927
        %v4992 = vrcp.pop %v4928
        %v4993 = vrcp.pop %v4929
        %v4994 = vrcp.pop %v4930
        %v4995 = vrcp.pop %v4931
        %v4996 = vrcp.pop %v4932
        %v4997 = vmul.f32 %v4805, %v4933
        %v4998 = vmul.f32 %v4806, %v4934
        %v4999 = vmul.f32 %v4807, %v4935
        %v5000 = vmul.f32 %v4808, %v4936
        %v5001 = vmul.f32 %v4809, %v4937
        %v5002 = vmul.f32 %v4810, %v4938
        %v5003 = vmul.f32 %v4811, %v4939
        %v5004 = vmul.f32 %v4812, %v4940
        %v5005 = vmul.f32 %v4813, %v4941
        %v5006 = vmul.f32 %v4814, %v4942
        %v5007 = vmul.f32 %v4815, %v4943
        %v5008 = vmul.f32 %v4816, %v4944
        %v5009 = vmul.f32 %v4817, %v4945
        %v5010 = vmul.f32 %v4818, %v4946
        %v5011 = vmul.f32 %v4819, %v4947
        %v5012 = vmul.f32 %v4820, %v4948
        %v5013 = vmul.f32 %v4821, %v4949
        %v5014 = vmul.f32 %v4822, %v4950
        %v5015 = vmul.f32 %v4823, %v4951
        %v5016 = vmul.f32 %v4824, %v4952
        %v5017 = vmul.f32 %v4825, %v4953
        %v5018 = vmul.f32 %v4826, %v4954
        %v5019 = vmul.f32 %v4827, %v4955
        %v5020 = vmul.f32 %v4828, %v4956
        %v5021 = vmul.f32 %v4829, %v4957
        %v5022 = vmul.f32 %v4830, %v4958
        %v5023 = vmul.f32 %v4831, %v4959
        %v5024 = vmul.f32 %v4832, %v4960
        %v5025 = vmul.f32 %v4833, %v4961
        %v5026 = vmul.f32 %v4834, %v4962
        %v5027 = vmul.f32 %v4835, %v4963
        %v5028 = vmul.f32 %v4836, %v4964
        %v5029 = vmul.f32 %v4837, %v4965
        %v5030 = vmul.f32 %v4838, %v4966
        %v5031 = vmul.f32 %v4839, %v4967
        %v5032 = vmul.f32 %v4840, %v4968
        %v5033 = vmul.f32 %v4841, %v4969
        %v5034 = vmul.f32 %v4842, %v4970
        %v5035 = vmul.f32 %v4843, %v4971
        %v5036 = vmul.f32 %v4844, %v4972
        %v5037 = vmul.f32 %v4845, %v4973
        %v5038 = vmul.f32 %v4846, %v4974
        %v5039 = vmul.f32 %v4847, %v4975
        %v5040 = vmul.f32 %v4848, %v4976
        %v5041 = vmul.f32 %v4849, %v4977
        %v5042 = vmul.f32 %v4850, %v4978
        %v5043 = vmul.f32 %v4851, %v4979
        %v5044 = vmul.f32 %v4852, %v4980
        %v5045 = vmul.f32 %v4853, %v4981
        %v5046 = vmul.f32 %v4854, %v4982
        %v5047 = vmul.f32 %v4855, %v4983
        %v5048 = vmul.f32 %v4856, %v4984
        %v5049 = vmul.f32 %v4857, %v4985
        %v5050 = vmul.f32 %v4858, %v4986
        %v5051 = vmul.f32 %v4859, %v4987
        %v5052 = vmul.f32 %v4860, %v4988
        %v5053 = vmul.f32 %v4861, %v4989
        %v5054 = vmul.f32 %v4862, %v4990
        %v5055 = vmul.f32 %v4863, %v4991
        %v5056 = vmul.f32 %v4864, %v4992
        %v5057 = vmul.f32 %v4865, %v4993
        %v5058 = vmul.f32 %v4866, %v4994
        %v5059 = vmul.f32 %v4867, %v4995
        %v5060 = vmul.f32 %v4868, %v4996
        %v5061 = vpack.c.bf16 %v4998, %v4997
        %v5062 = vpack.c.bf16 %v5000, %v4999
        %v5063 = vpack.c.bf16 %v5002, %v5001
        %v5064 = vpack.c.bf16 %v5004, %v5003
        %v5065 = vpack.c.bf16 %v5006, %v5005
        %v5066 = vpack.c.bf16 %v5008, %v5007
        %v5067 = vpack.c.bf16 %v5010, %v5009
        %v5068 = vpack.c.bf16 %v5012, %v5011
        %v5069 = vpack.c.bf16 %v5014, %v5013
        %v5070 = vpack.c.bf16 %v5016, %v5015
        %v5071 = vpack.c.bf16 %v5018, %v5017
        %v5072 = vpack.c.bf16 %v5020, %v5019
        %v5073 = vpack.c.bf16 %v5022, %v5021
        %v5074 = vpack.c.bf16 %v5024, %v5023
        %v5075 = vpack.c.bf16 %v5026, %v5025
        %v5076 = vpack.c.bf16 %v5028, %v5027
        %v5077 = vpack.c.bf16 %v5030, %v5029
        %v5078 = vpack.c.bf16 %v5032, %v5031
        %v5079 = vpack.c.bf16 %v5034, %v5033
        %v5080 = vpack.c.bf16 %v5036, %v5035
        %v5081 = vpack.c.bf16 %v5038, %v5037
        %v5082 = vpack.c.bf16 %v5040, %v5039
        %v5083 = vpack.c.bf16 %v5042, %v5041
        %v5084 = vpack.c.bf16 %v5044, %v5043
        %v5085 = vpack.c.bf16 %v5046, %v5045
        %v5086 = vpack.c.bf16 %v5048, %v5047
        %v5087 = vpack.c.bf16 %v5050, %v5049
        %v5088 = vpack.c.bf16 %v5052, %v5051
        %v5089 = vpack.c.bf16 %v5054, %v5053
        %v5090 = vpack.c.bf16 %v5056, %v5055
        %v5091 = vpack.c.bf16 %v5058, %v5057
        %v5092 = vpack.c.bf16 %v5060, %v5059
        %s5093 = sshra.s32 %s207, 4
        %s5094 = sand.u32 %s207, 15
        %s5095 = smul.addr %s5093, 8
        %s5096 = scalar_lea.vmem [#allocation2], %s5095
        %vm5097 = vcmask 523264
        %5098 = vst.msk [vmem:[%s5096] sm:$0xff] %vm5097, %v5061
        %5099 = vst.msk [vmem:[%s5096 + $0x8] sm:$0xff] %vm5097, %v5062
        %5100 = vst.msk [vmem:[%s5096 + $0x10] sm:$0xff] %vm5097, %v5063
        %5101 = vst.msk [vmem:[%s5096 + $0x18] sm:$0xff] %vm5097, %v5064
        %5102 = vst.msk [vmem:[%s5096 + $0x20] sm:$0xff] %vm5097, %v5065
        %5103 = vst.msk [vmem:[%s5096 + $0x28] sm:$0xff] %vm5097, %v5066
        %5104 = vst.msk [vmem:[%s5096 + $0x30] sm:$0xff] %vm5097, %v5067
        %5105 = vst.msk [vmem:[%s5096 + $0x38] sm:$0xff] %vm5097, %v5068
        %5106 = vst.msk [vmem:[%s5096 + $0x40] sm:$0xff] %vm5097, %v5069
        %5107 = vst.msk [vmem:[%s5096 + $0x48] sm:$0xff] %vm5097, %v5070
        %5108 = vst.msk [vmem:[%s5096 + $0x50] sm:$0xff] %vm5097, %v5071
        %5109 = vst.msk [vmem:[%s5096 + $0x58] sm:$0xff] %vm5097, %v5072
        %5110 = vst.msk [vmem:[%s5096 + $0x60] sm:$0xff] %vm5097, %v5073
        %5111 = vst.msk [vmem:[%s5096 + $0x68] sm:$0xff] %vm5097, %v5074
        %5112 = vst.msk [vmem:[%s5096 + $0x70] sm:$0xff] %vm5097, %v5075
        %5113 = vst.msk [vmem:[%s5096 + $0x78] sm:$0xff] %vm5097, %v5076
        %5114 = vst.msk [vmem:[%s5096 + $0x80] sm:$0xff] %vm5097, %v5077
        %5115 = vst.msk [vmem:[%s5096 + $0x88] sm:$0xff] %vm5097, %v5078
        %5116 = vst.msk [vmem:[%s5096 + $0x90] sm:$0xff] %vm5097, %v5079
        %5117 = vst.msk [vmem:[%s5096 + $0x98] sm:$0xff] %vm5097, %v5080
        %5118 = vst.msk [vmem:[%s5096 + $0xa0] sm:$0xff] %vm5097, %v5081
        %5119 = vst.msk [vmem:[%s5096 + $0xa8] sm:$0xff] %vm5097, %v5082
        %5120 = vst.msk [vmem:[%s5096 + $0xb0] sm:$0xff] %vm5097, %v5083
        %5121 = vst.msk [vmem:[%s5096 + $0xb8] sm:$0xff] %vm5097, %v5084
        %5122 = vst.msk [vmem:[%s5096 + $0xc0] sm:$0xff] %vm5097, %v5085
        %5123 = vst.msk [vmem:[%s5096 + $0xc8] sm:$0xff] %vm5097, %v5086
        %5124 = vst.msk [vmem:[%s5096 + $0xd0] sm:$0xff] %vm5097, %v5087
        %5125 = vst.msk [vmem:[%s5096 + $0xd8] sm:$0xff] %vm5097, %v5088
        %5126 = vst.msk [vmem:[%s5096 + $0xe0] sm:$0xff] %vm5097, %v5089
        %5127 = vst.msk [vmem:[%s5096 + $0xe8] sm:$0xff] %vm5097, %v5090
        %5128 = vst.msk [vmem:[%s5096 + $0xf0] sm:$0xff] %vm5097, %v5091
        %5129 = vst.msk [vmem:[%s5096 + $0xf8] sm:$0xff] %vm5097, %v5092
      $region41: #{tpu_custom_call.1} parent=35 // loop_footer
        %s206 = sadd.s32 1, %s202
      $region42: #{tpu_custom_call.1} parent=35 // loop_footer_branch
        %201 = sbr.rel target = $region38
      $region43: #{tpu_custom_call.1} parent=35 // loop_exit
        _
      %v5130 = vld [vmem:[#allocation2] sm:$0xff]
      %v5131 = vld [vmem:[#allocation2 + $0x8] sm:$0xff]
      %v5132 = vld [vmem:[#allocation2 + $0x10] sm:$0xff]
      %v5133 = vld [vmem:[#allocation2 + $0x18] sm:$0xff]
      %v5134 = vld [vmem:[#allocation2 + $0x20] sm:$0xff]
      %v5135 = vld [vmem:[#allocation2 + $0x28] sm:$0xff]
      %v5136 = vld [vmem:[#allocation2 + $0x30] sm:$0xff]
      %v5137 = vld [vmem:[#allocation2 + $0x38] sm:$0xff]
      %v5138 = vld [vmem:[#allocation2 + $0x40] sm:$0xff]
      %v5139 = vld [vmem:[#allocation2 + $0x48] sm:$0xff]
      %v5140 = vld [vmem:[#allocation2 + $0x50] sm:$0xff]
      %v5141 = vld [vmem:[#allocation2 + $0x58] sm:$0xff]
      %v5142 = vld [vmem:[#allocation2 + $0x60] sm:$0xff]
      %v5143 = vld [vmem:[#allocation2 + $0x68] sm:$0xff]
      %v5144 = vld [vmem:[#allocation2 + $0x70] sm:$0xff]
      %v5145 = vld [vmem:[#allocation2 + $0x78] sm:$0xff]
      %v5146 = vld [vmem:[#allocation2 + $0x80] sm:$0xff]
      %v5147 = vld [vmem:[#allocation2 + $0x88] sm:$0xff]
      %v5148 = vld [vmem:[#allocation2 + $0x90] sm:$0xff]
      %v5149 = vld [vmem:[#allocation2 + $0x98] sm:$0xff]
      %v5150 = vld [vmem:[#allocation2 + $0xa0] sm:$0xff]
      %v5151 = vld [vmem:[#allocation2 + $0xa8] sm:$0xff]
      %v5152 = vld [vmem:[#allocation2 + $0xb0] sm:$0xff]
      %v5153 = vld [vmem:[#allocation2 + $0xb8] sm:$0xff]
      %v5154 = vld [vmem:[#allocation2 + $0xc0] sm:$0xff]
      %v5155 = vld [vmem:[#allocation2 + $0xc8] sm:$0xff]
      %v5156 = vld [vmem:[#allocation2 + $0xd0] sm:$0xff]
      %v5157 = vld [vmem:[#allocation2 + $0xd8] sm:$0xff]
      %v5158 = vld [vmem:[#allocation2 + $0xe0] sm:$0xff]
      %v5159 = vld [vmem:[#allocation2 + $0xe8] sm:$0xff]
      %v5160 = vld [vmem:[#allocation2 + $0xf0] sm:$0xff]
      %v5161 = vld [vmem:[#allocation2 + $0xf8] sm:$0xff]
      %v5162 = vld [vmem:[#allocation2 + $0x100] sm:$0xff]
      %v5163 = vld [vmem:[#allocation2 + $0x108] sm:$0xff]
      %v5164 = vld [vmem:[#allocation2 + $0x110] sm:$0xff]
      %v5165 = vld [vmem:[#allocation2 + $0x118] sm:$0xff]
      %v5166 = vld [vmem:[#allocation2 + $0x120] sm:$0xff]
      %v5167 = vld [vmem:[#allocation2 + $0x128] sm:$0xff]
      %v5168 = vld [vmem:[#allocation2 + $0x130] sm:$0xff]
      %v5169 = vld [vmem:[#allocation2 + $0x138] sm:$0xff]
      %v5170 = vld [vmem:[#allocation2 + $0x140] sm:$0xff]
      %v5171 = vld [vmem:[#allocation2 + $0x148] sm:$0xff]
      %v5172 = vld [vmem:[#allocation2 + $0x150] sm:$0xff]
      %v5173 = vld [vmem:[#allocation2 + $0x158] sm:$0xff]
      %v5174 = vld [vmem:[#allocation2 + $0x160] sm:$0xff]
      %v5175 = vld [vmem:[#allocation2 + $0x168] sm:$0xff]
      %v5176 = vld [vmem:[#allocation2 + $0x170] sm:$0xff]
      %v5177 = vld [vmem:[#allocation2 + $0x178] sm:$0xff]
      %v5178 = vld [vmem:[#allocation2 + $0x180] sm:$0xff]
      %v5179 = vld [vmem:[#allocation2 + $0x188] sm:$0xff]
      %v5180 = vld [vmem:[#allocation2 + $0x190] sm:$0xff]
      %v5181 = vld [vmem:[#allocation2 + $0x198] sm:$0xff]
      %v5182 = vld [vmem:[#allocation2 + $0x1a0] sm:$0xff]
      %v5183 = vld [vmem:[#allocation2 + $0x1a8] sm:$0xff]
      %v5184 = vld [vmem:[#allocation2 + $0x1b0] sm:$0xff]
      %v5185 = vld [vmem:[#allocation2 + $0x1b8] sm:$0xff]
      %v5186 = vld [vmem:[#allocation2 + $0x1c0] sm:$0xff]
      %v5187 = vld [vmem:[#allocation2 + $0x1c8] sm:$0xff]
      %v5188 = vld [vmem:[#allocation2 + $0x1d0] sm:$0xff]
      %v5189 = vld [vmem:[#allocation2 + $0x1d8] sm:$0xff]
      %vm5190 = vsmask.f32 7424
      %v5192 = vshrl.u32 %v5130, 16
      %v5194 = vshll.u32 %v5130, 16
      %v5196 = vrot.slane %v5194, 1
      %v5197 = vor.u32 %v5192, %v5196
      %v5199 = vshll.u32 %v5131, 16
      %v5201 = vrot.slane %v5199, 1
      %v5202 = vsel %vm5190, %v5197, %v5201
      %v5203 = vshrl.u32 %v5131, 16
      %v5205 = vor.u32 %v5203, %v5201
      %v5207 = vshll.u32 %v5132, 16
      %v5209 = vrot.slane %v5207, 1
      %v5210 = vsel %vm5190, %v5205, %v5209
      %v5211 = vshrl.u32 %v5132, 16
      %v5213 = vor.u32 %v5211, %v5209
      %v5215 = vshll.u32 %v5133, 16
      %v5217 = vrot.slane %v5215, 1
      %v5218 = vsel %vm5190, %v5213, %v5217
      %v5219 = vshrl.u32 %v5133, 16
      %v5221 = vor.u32 %v5219, %v5217
      %v5223 = vshll.u32 %v5134, 16
      %v5225 = vrot.slane %v5223, 1
      %v5226 = vsel %vm5190, %v5221, %v5225
      %v5227 = vshrl.u32 %v5134, 16
      %v5229 = vor.u32 %v5227, %v5225
      %v5231 = vshll.u32 %v5135, 16
      %v5233 = vrot.slane %v5231, 1
      %v5234 = vsel %vm5190, %v5229, %v5233
      %v5235 = vshrl.u32 %v5135, 16
      %v5237 = vor.u32 %v5235, %v5233
      %v5239 = vshll.u32 %v5136, 16
      %v5241 = vrot.slane %v5239, 1
      %v5242 = vsel %vm5190, %v5237, %v5241
      %v5243 = vshrl.u32 %v5136, 16
      %v5245 = vor.u32 %v5243, %v5241
      %v5247 = vshll.u32 %v5137, 16
      %v5249 = vrot.slane %v5247, 1
      %v5250 = vsel %vm5190, %v5245, %v5249
      %v5251 = vshrl.u32 %v5137, 16
      %v5253 = vor.u32 %v5251, %v5249
      %v5255 = vshll.u32 %v5138, 16
      %v5257 = vrot.slane %v5255, 1
      %v5258 = vsel %vm5190, %v5253, %v5257
      %v5259 = vshrl.u32 %v5138, 16
      %v5261 = vor.u32 %v5259, %v5257
      %v5263 = vshll.u32 %v5139, 16
      %v5265 = vrot.slane %v5263, 1
      %v5266 = vsel %vm5190, %v5261, %v5265
      %v5267 = vshrl.u32 %v5139, 16
      %v5269 = vor.u32 %v5267, %v5265
      %v5271 = vshll.u32 %v5140, 16
      %v5273 = vrot.slane %v5271, 1
      %v5274 = vsel %vm5190, %v5269, %v5273
      %v5275 = vshrl.u32 %v5140, 16
      %v5277 = vor.u32 %v5275, %v5273
      %v5279 = vshll.u32 %v5141, 16
      %v5281 = vrot.slane %v5279, 1
      %v5282 = vsel %vm5190, %v5277, %v5281
      %v5283 = vshrl.u32 %v5141, 16
      %v5285 = vor.u32 %v5283, %v5281
      %v5287 = vshll.u32 %v5142, 16
      %v5289 = vrot.slane %v5287, 1
      %v5290 = vsel %vm5190, %v5285, %v5289
      %v5291 = vshrl.u32 %v5142, 16
      %v5293 = vor.u32 %v5291, %v5289
      %v5295 = vshll.u32 %v5143, 16
      %v5297 = vrot.slane %v5295, 1
      %v5298 = vsel %vm5190, %v5293, %v5297
      %v5299 = vshrl.u32 %v5143, 16
      %v5301 = vor.u32 %v5299, %v5297
      %v5303 = vshll.u32 %v5144, 16
      %v5305 = vrot.slane %v5303, 1
      %v5306 = vsel %vm5190, %v5301, %v5305
      %v5307 = vshrl.u32 %v5144, 16
      %v5309 = vor.u32 %v5307, %v5305
      %v5311 = vshll.u32 %v5145, 16
      %v5313 = vrot.slane %v5311, 1
      %v5314 = vsel %vm5190, %v5309, %v5313
      %v5315 = vshrl.u32 %v5145, 16
      %v5317 = vor.u32 %v5315, %v5313
      %v5319 = vshll.u32 %v5146, 16
      %v5321 = vrot.slane %v5319, 1
      %v5322 = vsel %vm5190, %v5317, %v5321
      %v5323 = vshrl.u32 %v5146, 16
      %v5325 = vor.u32 %v5323, %v5321
      %v5327 = vshll.u32 %v5147, 16
      %v5329 = vrot.slane %v5327, 1
      %v5330 = vsel %vm5190, %v5325, %v5329
      %v5331 = vshrl.u32 %v5147, 16
      %v5333 = vor.u32 %v5331, %v5329
      %v5335 = vshll.u32 %v5148, 16
      %v5337 = vrot.slane %v5335, 1
      %v5338 = vsel %vm5190, %v5333, %v5337
      %v5339 = vshrl.u32 %v5148, 16
      %v5341 = vor.u32 %v5339, %v5337
      %v5343 = vshll.u32 %v5149, 16
      %v5345 = vrot.slane %v5343, 1
      %v5346 = vsel %vm5190, %v5341, %v5345
      %v5347 = vshrl.u32 %v5149, 16
      %v5349 = vor.u32 %v5347, %v5345
      %v5351 = vshll.u32 %v5150, 16
      %v5353 = vrot.slane %v5351, 1
      %v5354 = vsel %vm5190, %v5349, %v5353
      %v5355 = vshrl.u32 %v5150, 16
      %v5357 = vor.u32 %v5355, %v5353
      %v5359 = vshll.u32 %v5151, 16
      %v5361 = vrot.slane %v5359, 1
      %v5362 = vsel %vm5190, %v5357, %v5361
      %v5363 = vshrl.u32 %v5151, 16
      %v5365 = vor.u32 %v5363, %v5361
      %v5367 = vshll.u32 %v5152, 16
      %v5369 = vrot.slane %v5367, 1
      %v5370 = vsel %vm5190, %v5365, %v5369
      %v5371 = vshrl.u32 %v5152, 16
      %v5373 = vor.u32 %v5371, %v5369
      %v5375 = vshll.u32 %v5153, 16
      %v5377 = vrot.slane %v5375, 1
      %v5378 = vsel %vm5190, %v5373, %v5377
      %v5379 = vshrl.u32 %v5153, 16
      %v5381 = vor.u32 %v5379, %v5377
      %v5383 = vshll.u32 %v5154, 16
      %v5385 = vrot.slane %v5383, 1
      %v5386 = vsel %vm5190, %v5381, %v5385
      %v5387 = vshrl.u32 %v5154, 16
      %v5389 = vor.u32 %v5387, %v5385
      %v5391 = vshll.u32 %v5155, 16
      %v5393 = vrot.slane %v5391, 1
      %v5394 = vsel %vm5190, %v5389, %v5393
      %v5395 = vshrl.u32 %v5155, 16
      %v5397 = vor.u32 %v5395, %v5393
      %v5399 = vshll.u32 %v5156, 16
      %v5401 = vrot.slane %v5399, 1
      %v5402 = vsel %vm5190, %v5397, %v5401
      %v5403 = vshrl.u32 %v5156, 16
      %v5405 = vor.u32 %v5403, %v5401
      %v5407 = vshll.u32 %v5157, 16
      %v5409 = vrot.slane %v5407, 1
      %v5410 = vsel %vm5190, %v5405, %v5409
      %v5411 = vshrl.u32 %v5157, 16
      %v5413 = vor.u32 %v5411, %v5409
      %v5415 = vshll.u32 %v5158, 16
      %v5417 = vrot.slane %v5415, 1
      %v5418 = vsel %vm5190, %v5413, %v5417
      %v5419 = vshrl.u32 %v5158, 16
      %v5421 = vor.u32 %v5419, %v5417
      %v5423 = vshll.u32 %v5159, 16
      %v5425 = vrot.slane %v5423, 1
      %v5426 = vsel %vm5190, %v5421, %v5425
      %v5427 = vshrl.u32 %v5159, 16
      %v5429 = vor.u32 %v5427, %v5425
      %v5431 = vshll.u32 %v5160, 16
      %v5433 = vrot.slane %v5431, 1
      %v5434 = vsel %vm5190, %v5429, %v5433
      %v5435 = vshrl.u32 %v5160, 16
      %v5437 = vor.u32 %v5435, %v5433
      %v5439 = vshll.u32 %v5161, 16
      %v5441 = vrot.slane %v5439, 1
      %v5442 = vsel %vm5190, %v5437, %v5441
      %v5443 = vshrl.u32 %v5161, 16
      %v5445 = vor.u32 %v5443, %v5441
      %v5447 = vshll.u32 %v5162, 16
      %v5449 = vrot.slane %v5447, 1
      %v5450 = vsel %vm5190, %v5445, %v5449
      %v5451 = vshrl.u32 %v5162, 16
      %v5453 = vor.u32 %v5451, %v5449
      %v5455 = vshll.u32 %v5163, 16
      %v5457 = vrot.slane %v5455, 1
      %v5458 = vsel %vm5190, %v5453, %v5457
      %v5459 = vshrl.u32 %v5163, 16
      %v5461 = vor.u32 %v5459, %v5457
      %v5463 = vshll.u32 %v5164, 16
      %v5465 = vrot.slane %v5463, 1
      %v5466 = vsel %vm5190, %v5461, %v5465
      %v5467 = vshrl.u32 %v5164, 16
      %v5469 = vor.u32 %v5467, %v5465
      %v5471 = vshll.u32 %v5165, 16
      %v5473 = vrot.slane %v5471, 1
      %v5474 = vsel %vm5190, %v5469, %v5473
      %v5475 = vshrl.u32 %v5165, 16
      %v5477 = vor.u32 %v5475, %v5473
      %v5479 = vshll.u32 %v5166, 16
      %v5481 = vrot.slane %v5479, 1
      %v5482 = vsel %vm5190, %v5477, %v5481
      %v5483 = vshrl.u32 %v5166, 16
      %v5485 = vor.u32 %v5483, %v5481
      %v5487 = vshll.u32 %v5167, 16
      %v5489 = vrot.slane %v5487, 1
      %v5490 = vsel %vm5190, %v5485, %v5489
      %v5491 = vshrl.u32 %v5167, 16
      %v5493 = vor.u32 %v5491, %v5489
      %v5495 = vshll.u32 %v5168, 16
      %v5497 = vrot.slane %v5495, 1
      %v5498 = vsel %vm5190, %v5493, %v5497
      %v5499 = vshrl.u32 %v5168, 16
      %v5501 = vor.u32 %v5499, %v5497
      %v5503 = vshll.u32 %v5169, 16
      %v5505 = vrot.slane %v5503, 1
      %v5506 = vsel %vm5190, %v5501, %v5505
      %v5507 = vshrl.u32 %v5169, 16
      %v5509 = vor.u32 %v5507, %v5505
      %v5511 = vshll.u32 %v5170, 16
      %v5513 = vrot.slane %v5511, 1
      %v5514 = vsel %vm5190, %v5509, %v5513
      %v5515 = vshrl.u32 %v5170, 16
      %v5517 = vor.u32 %v5515, %v5513
      %v5519 = vshll.u32 %v5171, 16
      %v5521 = vrot.slane %v5519, 1
      %v5522 = vsel %vm5190, %v5517, %v5521
      %v5523 = vshrl.u32 %v5171, 16
      %v5525 = vor.u32 %v5523, %v5521
      %v5527 = vshll.u32 %v5172, 16
      %v5529 = vrot.slane %v5527, 1
      %v5530 = vsel %vm5190, %v5525, %v5529
      %v5531 = vshrl.u32 %v5172, 16
      %v5533 = vor.u32 %v5531, %v5529
      %v5535 = vshll.u32 %v5173, 16
      %v5537 = vrot.slane %v5535, 1
      %v5538 = vsel %vm5190, %v5533, %v5537
      %v5539 = vshrl.u32 %v5173, 16
      %v5541 = vor.u32 %v5539, %v5537
      %v5543 = vshll.u32 %v5174, 16
      %v5545 = vrot.slane %v5543, 1
      %v5546 = vsel %vm5190, %v5541, %v5545
      %v5547 = vshrl.u32 %v5174, 16
      %v5549 = vor.u32 %v5547, %v5545
      %v5551 = vshll.u32 %v5175, 16
      %v5553 = vrot.slane %v5551, 1
      %v5554 = vsel %vm5190, %v5549, %v5553
      %v5555 = vshrl.u32 %v5175, 16
      %v5557 = vor.u32 %v5555, %v5553
      %v5559 = vshll.u32 %v5176, 16
      %v5561 = vrot.slane %v5559, 1
      %v5562 = vsel %vm5190, %v5557, %v5561
      %v5563 = vshrl.u32 %v5176, 16
      %v5565 = vor.u32 %v5563, %v5561
      %v5567 = vshll.u32 %v5177, 16
      %v5569 = vrot.slane %v5567, 1
      %v5570 = vsel %vm5190, %v5565, %v5569
      %v5571 = vshrl.u32 %v5177, 16
      %v5573 = vor.u32 %v5571, %v5569
      %v5575 = vshll.u32 %v5178, 16
      %v5577 = vrot.slane %v5575, 1
      %v5578 = vsel %vm5190, %v5573, %v5577
      %v5579 = vshrl.u32 %v5178, 16
      %v5581 = vor.u32 %v5579, %v5577
      %v5583 = vshll.u32 %v5179, 16
      %v5585 = vrot.slane %v5583, 1
      %v5586 = vsel %vm5190, %v5581, %v5585
      %v5587 = vshrl.u32 %v5179, 16
      %v5589 = vor.u32 %v5587, %v5585
      %v5591 = vshll.u32 %v5180, 16
      %v5593 = vrot.slane %v5591, 1
      %v5594 = vsel %vm5190, %v5589, %v5593
      %v5595 = vshrl.u32 %v5180, 16
      %v5597 = vor.u32 %v5595, %v5593
      %v5599 = vshll.u32 %v5181, 16
      %v5601 = vrot.slane %v5599, 1
      %v5602 = vsel %vm5190, %v5597, %v5601
      %v5603 = vshrl.u32 %v5181, 16
      %v5605 = vor.u32 %v5603, %v5601
      %v5607 = vshll.u32 %v5182, 16
      %v5609 = vrot.slane %v5607, 1
      %v5610 = vsel %vm5190, %v5605, %v5609
      %v5611 = vshrl.u32 %v5182, 16
      %v5613 = vor.u32 %v5611, %v5609
      %v5615 = vshll.u32 %v5183, 16
      %v5617 = vrot.slane %v5615, 1
      %v5618 = vsel %vm5190, %v5613, %v5617
      %v5619 = vshrl.u32 %v5183, 16
      %v5621 = vor.u32 %v5619, %v5617
      %v5623 = vshll.u32 %v5184, 16
      %v5625 = vrot.slane %v5623, 1
      %v5626 = vsel %vm5190, %v5621, %v5625
      %v5627 = vshrl.u32 %v5184, 16
      %v5629 = vor.u32 %v5627, %v5625
      %v5631 = vshll.u32 %v5185, 16
      %v5633 = vrot.slane %v5631, 1
      %v5634 = vsel %vm5190, %v5629, %v5633
      %v5635 = vshrl.u32 %v5185, 16
      %v5637 = vor.u32 %v5635, %v5633
      %v5639 = vshll.u32 %v5186, 16
      %v5641 = vrot.slane %v5639, 1
      %v5642 = vsel %vm5190, %v5637, %v5641
      %v5643 = vshrl.u32 %v5186, 16
      %v5645 = vor.u32 %v5643, %v5641
      %v5647 = vshll.u32 %v5187, 16
      %v5649 = vrot.slane %v5647, 1
      %v5650 = vsel %vm5190, %v5645, %v5649
      %v5651 = vshrl.u32 %v5187, 16
      %v5653 = vor.u32 %v5651, %v5649
      %v5655 = vshll.u32 %v5188, 16
      %v5657 = vrot.slane %v5655, 1
      %v5658 = vsel %vm5190, %v5653, %v5657
      %v5659 = vshrl.u32 %v5188, 16
      %v5661 = vor.u32 %v5659, %v5657
      %v5663 = vshll.u32 %v5189, 16
      %v5665 = vrot.slane %v5663, 1
      %v5666 = vsel %vm5190, %v5661, %v5665
      %v5667 = vshrl.u32 %v5189, 16
      %v5669 = vor.u32 %v5667, %v5665
      %v5730 = vmax.bf16 %v5130, %v5202
      %v5731 = vmax.bf16 %v5131, %v5210
      %v5732 = vmax.bf16 %v5132, %v5218
      %v5733 = vmax.bf16 %v5133, %v5226
      %v5734 = vmax.bf16 %v5134, %v5234
      %v5735 = vmax.bf16 %v5135, %v5242
      %v5736 = vmax.bf16 %v5136, %v5250
      %v5737 = vmax.bf16 %v5137, %v5258
      %v5738 = vmax.bf16 %v5138, %v5266
      %v5739 = vmax.bf16 %v5139, %v5274
      %v5740 = vmax.bf16 %v5140, %v5282
      %v5741 = vmax.bf16 %v5141, %v5290
      %v5742 = vmax.bf16 %v5142, %v5298
      %v5743 = vmax.bf16 %v5143, %v5306
      %v5744 = vmax.bf16 %v5144, %v5314
      %v5745 = vmax.bf16 %v5145, %v5322
      %v5746 = vmax.bf16 %v5146, %v5330
      %v5747 = vmax.bf16 %v5147, %v5338
      %v5748 = vmax.bf16 %v5148, %v5346
      %v5749 = vmax.bf16 %v5149, %v5354
      %v5750 = vmax.bf16 %v5150, %v5362
      %v5751 = vmax.bf16 %v5151, %v5370
      %v5752 = vmax.bf16 %v5152, %v5378
      %v5753 = vmax.bf16 %v5153, %v5386
      %v5754 = vmax.bf16 %v5154, %v5394
      %v5755 = vmax.bf16 %v5155, %v5402
      %v5756 = vmax.bf16 %v5156, %v5410
      %v5757 = vmax.bf16 %v5157, %v5418
      %v5758 = vmax.bf16 %v5158, %v5426
      %v5759 = vmax.bf16 %v5159, %v5434
      %v5760 = vmax.bf16 %v5160, %v5442
      %v5761 = vmax.bf16 %v5161, %v5450
      %v5762 = vmax.bf16 %v5162, %v5458
      %v5763 = vmax.bf16 %v5163, %v5466
      %v5764 = vmax.bf16 %v5164, %v5474
      %v5765 = vmax.bf16 %v5165, %v5482
      %v5766 = vmax.bf16 %v5166, %v5490
      %v5767 = vmax.bf16 %v5167, %v5498
      %v5768 = vmax.bf16 %v5168, %v5506
      %v5769 = vmax.bf16 %v5169, %v5514
      %v5770 = vmax.bf16 %v5170, %v5522
      %v5771 = vmax.bf16 %v5171, %v5530
      %v5772 = vmax.bf16 %v5172, %v5538
      %v5773 = vmax.bf16 %v5173, %v5546
      %v5774 = vmax.bf16 %v5174, %v5554
      %v5775 = vmax.bf16 %v5175, %v5562
      %v5776 = vmax.bf16 %v5176, %v5570
      %v5777 = vmax.bf16 %v5177, %v5578
      %v5778 = vmax.bf16 %v5178, %v5586
      %v5779 = vmax.bf16 %v5179, %v5594
      %v5780 = vmax.bf16 %v5180, %v5602
      %v5781 = vmax.bf16 %v5181, %v5610
      %v5782 = vmax.bf16 %v5182, %v5618
      %v5783 = vmax.bf16 %v5183, %v5626
      %v5784 = vmax.bf16 %v5184, %v5634
      %v5785 = vmax.bf16 %v5185, %v5642
      %v5786 = vmax.bf16 %v5186, %v5650
      %v5787 = vmax.bf16 %v5187, %v5658
      %v5788 = vmax.bf16 %v5188, %v5666
      %v5789 = vmax.bf16 %v5189, %v5669
      %vm5850 = vcmask 1046528
      %v5851 = vrot.slane %v5130, 1
      %v5852 = vrot.slane %v5131, 1
      %v5853 = vsel %vm5850, %v5851, %v5852
      %v5854 = vrot.slane %v5132, 1
      %v5855 = vsel %vm5850, %v5852, %v5854
      %v5856 = vrot.slane %v5133, 1
      %v5857 = vsel %vm5850, %v5854, %v5856
      %v5858 = vrot.slane %v5134, 1
      %v5859 = vsel %vm5850, %v5856, %v5858
      %v5860 = vrot.slane %v5135, 1
      %v5861 = vsel %vm5850, %v5858, %v5860
      %v5862 = vrot.slane %v5136, 1
      %v5863 = vsel %vm5850, %v5860, %v5862
      %v5864 = vrot.slane %v5137, 1
      %v5865 = vsel %vm5850, %v5862, %v5864
      %v5866 = vrot.slane %v5138, 1
      %v5867 = vsel %vm5850, %v5864, %v5866
      %v5868 = vrot.slane %v5139, 1
      %v5869 = vsel %vm5850, %v5866, %v5868
      %v5870 = vrot.slane %v5140, 1
      %v5871 = vsel %vm5850, %v5868, %v5870
      %v5872 = vrot.slane %v5141, 1
      %v5873 = vsel %vm5850, %v5870, %v5872
      %v5874 = vrot.slane %v5142, 1
      %v5875 = vsel %vm5850, %v5872, %v5874
      %v5876 = vrot.slane %v5143, 1
      %v5877 = vsel %vm5850, %v5874, %v5876
      %v5878 = vrot.slane %v5144, 1
      %v5879 = vsel %vm5850, %v5876, %v5878
      %v5880 = vrot.slane %v5145, 1
      %v5881 = vsel %vm5850, %v5878, %v5880
      %v5882 = vrot.slane %v5146, 1
      %v5883 = vsel %vm5850, %v5880, %v5882
      %v5884 = vrot.slane %v5147, 1
      %v5885 = vsel %vm5850, %v5882, %v5884
      %v5886 = vrot.slane %v5148, 1
      %v5887 = vsel %vm5850, %v5884, %v5886
      %v5888 = vrot.slane %v5149, 1
      %v5889 = vsel %vm5850, %v5886, %v5888
      %v5890 = vrot.slane %v5150, 1
      %v5891 = vsel %vm5850, %v5888, %v5890
      %v5892 = vrot.slane %v5151, 1
      %v5893 = vsel %vm5850, %v5890, %v5892
      %v5894 = vrot.slane %v5152, 1
      %v5895 = vsel %vm5850, %v5892, %v5894
      %v5896 = vrot.slane %v5153, 1
      %v5897 = vsel %vm5850, %v5894, %v5896
      %v5898 = vrot.slane %v5154, 1
      %v5899 = vsel %vm5850, %v5896, %v5898
      %v5900 = vrot.slane %v5155, 1
      %v5901 = vsel %vm5850, %v5898, %v5900
      %v5902 = vrot.slane %v5156, 1
      %v5903 = vsel %vm5850, %v5900, %v5902
      %v5904 = vrot.slane %v5157, 1
      %v5905 = vsel %vm5850, %v5902, %v5904
      %v5906 = vrot.slane %v5158, 1
      %v5907 = vsel %vm5850, %v5904, %v5906
      %v5908 = vrot.slane %v5159, 1
      %v5909 = vsel %vm5850, %v5906, %v5908
      %v5910 = vrot.slane %v5160, 1
      %v5911 = vsel %vm5850, %v5908, %v5910
      %v5912 = vrot.slane %v5161, 1
      %v5913 = vsel %vm5850, %v5910, %v5912
      %v5914 = vrot.slane %v5162, 1
      %v5915 = vsel %vm5850, %v5912, %v5914
      %v5916 = vrot.slane %v5163, 1
      %v5917 = vsel %vm5850, %v5914, %v5916
      %v5918 = vrot.slane %v5164, 1
      %v5919 = vsel %vm5850, %v5916, %v5918
      %v5920 = vrot.slane %v5165, 1
      %v5921 = vsel %vm5850, %v5918, %v5920
      %v5922 = vrot.slane %v5166, 1
      %v5923 = vsel %vm5850, %v5920, %v5922
      %v5924 = vrot.slane %v5167, 1
      %v5925 = vsel %vm5850, %v5922, %v5924
      %v5926 = vrot.slane %v5168, 1
      %v5927 = vsel %vm5850, %v5924, %v5926
      %v5928 = vrot.slane %v5169, 1
      %v5929 = vsel %vm5850, %v5926, %v5928
      %v5930 = vrot.slane %v5170, 1
      %v5931 = vsel %vm5850, %v5928, %v5930
      %v5932 = vrot.slane %v5171, 1
      %v5933 = vsel %vm5850, %v5930, %v5932
      %v5934 = vrot.slane %v5172, 1
      %v5935 = vsel %vm5850, %v5932, %v5934
      %v5936 = vrot.slane %v5173, 1
      %v5937 = vsel %vm5850, %v5934, %v5936
      %v5938 = vrot.slane %v5174, 1
      %v5939 = vsel %vm5850, %v5936, %v5938
      %v5940 = vrot.slane %v5175, 1
      %v5941 = vsel %vm5850, %v5938, %v5940
      %v5942 = vrot.slane %v5176, 1
      %v5943 = vsel %vm5850, %v5940, %v5942
      %v5944 = vrot.slane %v5177, 1
      %v5945 = vsel %vm5850, %v5942, %v5944
      %v5946 = vrot.slane %v5178, 1
      %v5947 = vsel %vm5850, %v5944, %v5946
      %v5948 = vrot.slane %v5179, 1
      %v5949 = vsel %vm5850, %v5946, %v5948
      %v5950 = vrot.slane %v5180, 1
      %v5951 = vsel %vm5850, %v5948, %v5950
      %v5952 = vrot.slane %v5181, 1
      %v5953 = vsel %vm5850, %v5950, %v5952
      %v5954 = vrot.slane %v5182, 1
      %v5955 = vsel %vm5850, %v5952, %v5954
      %v5956 = vrot.slane %v5183, 1
      %v5957 = vsel %vm5850, %v5954, %v5956
      %v5958 = vrot.slane %v5184, 1
      %v5959 = vsel %vm5850, %v5956, %v5958
      %v5960 = vrot.slane %v5185, 1
      %v5961 = vsel %vm5850, %v5958, %v5960
      %v5962 = vrot.slane %v5186, 1
      %v5963 = vsel %vm5850, %v5960, %v5962
      %v5964 = vrot.slane %v5187, 1
      %v5965 = vsel %vm5850, %v5962, %v5964
      %v5966 = vrot.slane %v5188, 1
      %v5967 = vsel %vm5850, %v5964, %v5966
      %v5968 = vrot.slane %v5189, 1
      %v5969 = vsel %vm5850, %v5966, %v5968
      %v6030 = vmax.bf16 %v5730, %v5853
      %v6031 = vmax.bf16 %v5731, %v5855
      %v6032 = vmax.bf16 %v5732, %v5857
      %v6033 = vmax.bf16 %v5733, %v5859
      %v6034 = vmax.bf16 %v5734, %v5861
      %v6035 = vmax.bf16 %v5735, %v5863
      %v6036 = vmax.bf16 %v5736, %v5865
      %v6037 = vmax.bf16 %v5737, %v5867
      %v6038 = vmax.bf16 %v5738, %v5869
      %v6039 = vmax.bf16 %v5739, %v5871
      %v6040 = vmax.bf16 %v5740, %v5873
      %v6041 = vmax.bf16 %v5741, %v5875
      %v6042 = vmax.bf16 %v5742, %v5877
      %v6043 = vmax.bf16 %v5743, %v5879
      %v6044 = vmax.bf16 %v5744, %v5881
      %v6045 = vmax.bf16 %v5745, %v5883
      %v6046 = vmax.bf16 %v5746, %v5885
      %v6047 = vmax.bf16 %v5747, %v5887
      %v6048 = vmax.bf16 %v5748, %v5889
      %v6049 = vmax.bf16 %v5749, %v5891
      %v6050 = vmax.bf16 %v5750, %v5893
      %v6051 = vmax.bf16 %v5751, %v5895
      %v6052 = vmax.bf16 %v5752, %v5897
      %v6053 = vmax.bf16 %v5753, %v5899
      %v6054 = vmax.bf16 %v5754, %v5901
      %v6055 = vmax.bf16 %v5755, %v5903
      %v6056 = vmax.bf16 %v5756, %v5905
      %v6057 = vmax.bf16 %v5757, %v5907
      %v6058 = vmax.bf16 %v5758, %v5909
      %v6059 = vmax.bf16 %v5759, %v5911
      %v6060 = vmax.bf16 %v5760, %v5913
      %v6061 = vmax.bf16 %v5761, %v5915
      %v6062 = vmax.bf16 %v5762, %v5917
      %v6063 = vmax.bf16 %v5763, %v5919
      %v6064 = vmax.bf16 %v5764, %v5921
      %v6065 = vmax.bf16 %v5765, %v5923
      %v6066 = vmax.bf16 %v5766, %v5925
      %v6067 = vmax.bf16 %v5767, %v5927
      %v6068 = vmax.bf16 %v5768, %v5929
      %v6069 = vmax.bf16 %v5769, %v5931
      %v6070 = vmax.bf16 %v5770, %v5933
      %v6071 = vmax.bf16 %v5771, %v5935
      %v6072 = vmax.bf16 %v5772, %v5937
      %v6073 = vmax.bf16 %v5773, %v5939
      %v6074 = vmax.bf16 %v5774, %v5941
      %v6075 = vmax.bf16 %v5775, %v5943
      %v6076 = vmax.bf16 %v5776, %v5945
      %v6077 = vmax.bf16 %v5777, %v5947
      %v6078 = vmax.bf16 %v5778, %v5949
      %v6079 = vmax.bf16 %v5779, %v5951
      %v6080 = vmax.bf16 %v5780, %v5953
      %v6081 = vmax.bf16 %v5781, %v5955
      %v6082 = vmax.bf16 %v5782, %v5957
      %v6083 = vmax.bf16 %v5783, %v5959
      %v6084 = vmax.bf16 %v5784, %v5961
      %v6085 = vmax.bf16 %v5785, %v5963
      %v6086 = vmax.bf16 %v5786, %v5965
      %v6087 = vmax.bf16 %v5787, %v5967
      %v6088 = vmax.bf16 %v5788, %v5969
      %v6089 = vmax.bf16 %v5789, %v5968
      %v6090 = vmax.bf16 %v6030, %v6032
      %v6091 = vmax.bf16 %v6031, %v6033
      %v6092 = vmax.bf16 %v6032, %v6034
      %v6093 = vmax.bf16 %v6033, %v6035
      %v6094 = vmax.bf16 %v6034, %v6036
      %v6095 = vmax.bf16 %v6035, %v6037
      %v6096 = vmax.bf16 %v6036, %v6038
      %v6097 = vmax.bf16 %v6037, %v6039
      %v6098 = vmax.bf16 %v6038, %v6040
      %v6099 = vmax.bf16 %v6039, %v6041
      %v6100 = vmax.bf16 %v6040, %v6042
      %v6101 = vmax.bf16 %v6041, %v6043
      %v6102 = vmax.bf16 %v6042, %v6044
      %v6103 = vmax.bf16 %v6043, %v6045
      %v6104 = vmax.bf16 %v6044, %v6046
      %v6105 = vmax.bf16 %v6045, %v6047
      %v6106 = vmax.bf16 %v6046, %v6048
      %v6107 = vmax.bf16 %v6047, %v6049
      %v6108 = vmax.bf16 %v6048, %v6050
      %v6109 = vmax.bf16 %v6049, %v6051
      %v6110 = vmax.bf16 %v6050, %v6052
      %v6111 = vmax.bf16 %v6051, %v6053
      %v6112 = vmax.bf16 %v6052, %v6054
      %v6113 = vmax.bf16 %v6053, %v6055
      %v6114 = vmax.bf16 %v6054, %v6056
      %v6115 = vmax.bf16 %v6055, %v6057
      %v6116 = vmax.bf16 %v6056, %v6058
      %v6117 = vmax.bf16 %v6057, %v6059
      %v6118 = vmax.bf16 %v6058, %v6060
      %v6119 = vmax.bf16 %v6059, %v6061
      %v6120 = vmax.bf16 %v6060, %v6062
      %v6121 = vmax.bf16 %v6061, %v6063
      %v6122 = vmax.bf16 %v6062, %v6064
      %v6123 = vmax.bf16 %v6063, %v6065
      %v6124 = vmax.bf16 %v6064, %v6066
      %v6125 = vmax.bf16 %v6065, %v6067
      %v6126 = vmax.bf16 %v6066, %v6068
      %v6127 = vmax.bf16 %v6067, %v6069
      %v6128 = vmax.bf16 %v6068, %v6070
      %v6129 = vmax.bf16 %v6069, %v6071
      %v6130 = vmax.bf16 %v6070, %v6072
      %v6131 = vmax.bf16 %v6071, %v6073
      %v6132 = vmax.bf16 %v6072, %v6074
      %v6133 = vmax.bf16 %v6073, %v6075
      %v6134 = vmax.bf16 %v6074, %v6076
      %v6135 = vmax.bf16 %v6075, %v6077
      %v6136 = vmax.bf16 %v6076, %v6078
      %v6137 = vmax.bf16 %v6077, %v6079
      %v6138 = vmax.bf16 %v6078, %v6080
      %v6139 = vmax.bf16 %v6079, %v6081
      %v6140 = vmax.bf16 %v6080, %v6082
      %v6141 = vmax.bf16 %v6081, %v6083
      %v6142 = vmax.bf16 %v6082, %v6084
      %v6143 = vmax.bf16 %v6083, %v6085
      %v6144 = vmax.bf16 %v6084, %v6086
      %v6145 = vmax.bf16 %v6085, %v6087
      %v6146 = vmax.bf16 %v6090, %v6034
      %v6147 = vmax.bf16 %v6091, %v6035
      %v6148 = vmax.bf16 %v6092, %v6036
      %v6149 = vmax.bf16 %v6093, %v6037
      %v6150 = vmax.bf16 %v6094, %v6038
      %v6151 = vmax.bf16 %v6095, %v6039
      %v6152 = vmax.bf16 %v6096, %v6040
      %v6153 = vmax.bf16 %v6097, %v6041
      %v6154 = vmax.bf16 %v6098, %v6042
      %v6155 = vmax.bf16 %v6099, %v6043
      %v6156 = vmax.bf16 %v6100, %v6044
      %v6157 = vmax.bf16 %v6101, %v6045
      %v6158 = vmax.bf16 %v6102, %v6046
      %v6159 = vmax.bf16 %v6103, %v6047
      %v6160 = vmax.bf16 %v6104, %v6048
      %v6161 = vmax.bf16 %v6105, %v6049
      %v6162 = vmax.bf16 %v6106, %v6050
      %v6163 = vmax.bf16 %v6107, %v6051
      %v6164 = vmax.bf16 %v6108, %v6052
      %v6165 = vmax.bf16 %v6109, %v6053
      %v6166 = vmax.bf16 %v6110, %v6054
      %v6167 = vmax.bf16 %v6111, %v6055
      %v6168 = vmax.bf16 %v6112, %v6056
      %v6169 = vmax.bf16 %v6113, %v6057
      %v6170 = vmax.bf16 %v6114, %v6058
      %v6171 = vmax.bf16 %v6115, %v6059
      %v6172 = vmax.bf16 %v6116, %v6060
      %v6173 = vmax.bf16 %v6117, %v6061
      %v6174 = vmax.bf16 %v6118, %v6062
      %v6175 = vmax.bf16 %v6119, %v6063
      %v6176 = vmax.bf16 %v6120, %v6064
      %v6177 = vmax.bf16 %v6121, %v6065
      %v6178 = vmax.bf16 %v6122, %v6066
      %v6179 = vmax.bf16 %v6123, %v6067
      %v6180 = vmax.bf16 %v6124, %v6068
      %v6181 = vmax.bf16 %v6125, %v6069
      %v6182 = vmax.bf16 %v6126, %v6070
      %v6183 = vmax.bf16 %v6127, %v6071
      %v6184 = vmax.bf16 %v6128, %v6072
      %v6185 = vmax.bf16 %v6129, %v6073
      %v6186 = vmax.bf16 %v6130, %v6074
      %v6187 = vmax.bf16 %v6131, %v6075
      %v6188 = vmax.bf16 %v6132, %v6076
      %v6189 = vmax.bf16 %v6133, %v6077
      %v6190 = vmax.bf16 %v6134, %v6078
      %v6191 = vmax.bf16 %v6135, %v6079
      %v6192 = vmax.bf16 %v6136, %v6080
      %v6193 = vmax.bf16 %v6137, %v6081
      %v6194 = vmax.bf16 %v6138, %v6082
      %v6195 = vmax.bf16 %v6139, %v6083
      %v6196 = vmax.bf16 %v6140, %v6084
      %v6197 = vmax.bf16 %v6141, %v6085
      %v6198 = vmax.bf16 %v6142, %v6086
      %v6199 = vmax.bf16 %v6143, %v6087
      %v6200 = vmax.bf16 %v6144, %v6088
      %v6201 = vmax.bf16 %v6145, %v6089
      %v6258 = vunpack.c.l.b16 %v6146
      %v6259 = vunpack.c.h.b16 %v6146
      %v6260 = vunpack.c.l.b16 %v6147
      %v6261 = vunpack.c.h.b16 %v6147
      %v6262 = vunpack.c.l.b16 %v6148
      %v6263 = vunpack.c.h.b16 %v6148
      %v6264 = vunpack.c.l.b16 %v6149
      %v6265 = vunpack.c.h.b16 %v6149
      %v6266 = vunpack.c.l.b16 %v6150
      %v6267 = vunpack.c.h.b16 %v6150
      %v6268 = vunpack.c.l.b16 %v6151
      %v6269 = vunpack.c.h.b16 %v6151
      %v6270 = vunpack.c.l.b16 %v6152
      %v6271 = vunpack.c.h.b16 %v6152
      %v6272 = vunpack.c.l.b16 %v6153
      %v6273 = vunpack.c.h.b16 %v6153
      %v6274 = vunpack.c.l.b16 %v6154
      %v6275 = vunpack.c.h.b16 %v6154
      %v6276 = vunpack.c.l.b16 %v6155
      %v6277 = vunpack.c.h.b16 %v6155
      %v6278 = vunpack.c.l.b16 %v6156
      %v6279 = vunpack.c.h.b16 %v6156
      %v6280 = vunpack.c.l.b16 %v6157
      %v6281 = vunpack.c.h.b16 %v6157
      %v6282 = vunpack.c.l.b16 %v6158
      %v6283 = vunpack.c.h.b16 %v6158
      %v6284 = vunpack.c.l.b16 %v6159
      %v6285 = vunpack.c.h.b16 %v6159
      %v6286 = vunpack.c.l.b16 %v6160
      %v6287 = vunpack.c.h.b16 %v6160
      %v6288 = vunpack.c.l.b16 %v6161
      %v6289 = vunpack.c.h.b16 %v6161
      %v6290 = vunpack.c.l.b16 %v6162
      %v6291 = vunpack.c.h.b16 %v6162
      %v6292 = vunpack.c.l.b16 %v6163
      %v6293 = vunpack.c.h.b16 %v6163
      %v6294 = vunpack.c.l.b16 %v6164
      %v6295 = vunpack.c.h.b16 %v6164
      %v6296 = vunpack.c.l.b16 %v6165
      %v6297 = vunpack.c.h.b16 %v6165
      %v6298 = vunpack.c.l.b16 %v6166
      %v6299 = vunpack.c.h.b16 %v6166
      %v6300 = vunpack.c.l.b16 %v6167
      %v6301 = vunpack.c.h.b16 %v6167
      %v6302 = vunpack.c.l.b16 %v6168
      %v6303 = vunpack.c.h.b16 %v6168
      %v6304 = vunpack.c.l.b16 %v6169
      %v6305 = vunpack.c.h.b16 %v6169
      %v6306 = vunpack.c.l.b16 %v6170
      %v6307 = vunpack.c.h.b16 %v6170
      %v6308 = vunpack.c.l.b16 %v6171
      %v6309 = vunpack.c.h.b16 %v6171
      %v6310 = vunpack.c.l.b16 %v6172
      %v6311 = vunpack.c.h.b16 %v6172
      %v6312 = vunpack.c.l.b16 %v6173
      %v6313 = vunpack.c.h.b16 %v6173
      %v6314 = vunpack.c.l.b16 %v6174
      %v6315 = vunpack.c.h.b16 %v6174
      %v6316 = vunpack.c.l.b16 %v6175
      %v6317 = vunpack.c.h.b16 %v6175
      %v6318 = vunpack.c.l.b16 %v6176
      %v6319 = vunpack.c.h.b16 %v6176
      %v6320 = vunpack.c.l.b16 %v6177
      %v6321 = vunpack.c.h.b16 %v6177
      %v6322 = vunpack.c.l.b16 %v6178
      %v6323 = vunpack.c.h.b16 %v6178
      %v6324 = vunpack.c.l.b16 %v6179
      %v6325 = vunpack.c.h.b16 %v6179
      %v6326 = vunpack.c.l.b16 %v6180
      %v6327 = vunpack.c.h.b16 %v6180
      %v6328 = vunpack.c.l.b16 %v6181
      %v6329 = vunpack.c.h.b16 %v6181
      %v6330 = vunpack.c.l.b16 %v6182
      %v6331 = vunpack.c.h.b16 %v6182
      %v6332 = vunpack.c.l.b16 %v6183
      %v6333 = vunpack.c.h.b16 %v6183
      %v6334 = vunpack.c.l.b16 %v6184
      %v6335 = vunpack.c.h.b16 %v6184
      %v6336 = vunpack.c.l.b16 %v6185
      %v6337 = vunpack.c.h.b16 %v6185
      %v6338 = vunpack.c.l.b16 %v6186
      %v6339 = vunpack.c.h.b16 %v6186
      %v6340 = vunpack.c.l.b16 %v6187
      %v6341 = vunpack.c.h.b16 %v6187
      %v6342 = vunpack.c.l.b16 %v6188
      %v6343 = vunpack.c.h.b16 %v6188
      %v6344 = vunpack.c.l.b16 %v6189
      %v6345 = vunpack.c.h.b16 %v6189
      %v6346 = vunpack.c.l.b16 %v6190
      %v6347 = vunpack.c.h.b16 %v6190
      %v6348 = vunpack.c.l.b16 %v6191
      %v6349 = vunpack.c.h.b16 %v6191
      %v6350 = vunpack.c.l.b16 %v6192
      %v6351 = vunpack.c.h.b16 %v6192
      %v6352 = vunpack.c.l.b16 %v6193
      %v6353 = vunpack.c.h.b16 %v6193
      %v6354 = vunpack.c.l.b16 %v6194
      %v6355 = vunpack.c.h.b16 %v6194
      %v6356 = vunpack.c.l.b16 %v6195
      %v6357 = vunpack.c.h.b16 %v6195
      %v6358 = vunpack.c.l.b16 %v6196
      %v6359 = vunpack.c.h.b16 %v6196
      %v6360 = vunpack.c.l.b16 %v6197
      %v6361 = vunpack.c.h.b16 %v6197
      %v6362 = vunpack.c.l.b16 %v6198
      %v6363 = vunpack.c.h.b16 %v6198
      %v6364 = vunpack.c.l.b16 %v6199
      %v6365 = vunpack.c.h.b16 %v6199
      %v6366 = vunpack.c.l.b16 %v6200
      %v6367 = vunpack.c.h.b16 %v6200
      %v6368 = vunpack.c.l.b16 %v6201
      %v6369 = vunpack.c.h.b16 %v6201
      %v6370 = vpack.c.b16 %v6258, %v6258
      %v6371 = vpack.c.b16 %v6259, %v6259
      %v6372 = vpack.c.b16 %v6260, %v6260
      %v6373 = vpack.c.b16 %v6261, %v6261
      %v6374 = vpack.c.b16 %v6262, %v6262
      %v6375 = vpack.c.b16 %v6263, %v6263
      %v6376 = vpack.c.b16 %v6264, %v6264
      %v6377 = vpack.c.b16 %v6265, %v6265
      %v6378 = vpack.c.b16 %v6266, %v6266
      %v6379 = vpack.c.b16 %v6267, %v6267
      %v6380 = vpack.c.b16 %v6268, %v6268
      %v6381 = vpack.c.b16 %v6269, %v6269
      %v6382 = vpack.c.b16 %v6270, %v6270
      %v6383 = vpack.c.b16 %v6271, %v6271
      %v6384 = vpack.c.b16 %v6272, %v6272
      %v6385 = vpack.c.b16 %v6273, %v6273
      %v6386 = vpack.c.b16 %v6274, %v6274
      %v6387 = vpack.c.b16 %v6275, %v6275
      %v6388 = vpack.c.b16 %v6276, %v6276
      %v6389 = vpack.c.b16 %v6277, %v6277
      %v6390 = vpack.c.b16 %v6278, %v6278
      %v6391 = vpack.c.b16 %v6279, %v6279
      %v6392 = vpack.c.b16 %v6280, %v6280
      %v6393 = vpack.c.b16 %v6281, %v6281
      %v6394 = vpack.c.b16 %v6282, %v6282
      %v6395 = vpack.c.b16 %v6283, %v6283
      %v6396 = vpack.c.b16 %v6284, %v6284
      %v6397 = vpack.c.b16 %v6285, %v6285
      %v6398 = vpack.c.b16 %v6286, %v6286
      %v6399 = vpack.c.b16 %v6287, %v6287
      %v6400 = vpack.c.b16 %v6288, %v6288
      %v6401 = vpack.c.b16 %v6289, %v6289
      %v6402 = vpack.c.b16 %v6290, %v6290
      %v6403 = vpack.c.b16 %v6291, %v6291
      %v6404 = vpack.c.b16 %v6292, %v6292
      %v6405 = vpack.c.b16 %v6293, %v6293
      %v6406 = vpack.c.b16 %v6294, %v6294
      %v6407 = vpack.c.b16 %v6295, %v6295
      %v6408 = vpack.c.b16 %v6296, %v6296
      %v6409 = vpack.c.b16 %v6297, %v6297
      %v6410 = vpack.c.b16 %v6298, %v6298
      %v6411 = vpack.c.b16 %v6299, %v6299
      %v6412 = vpack.c.b16 %v6300, %v6300
      %v6413 = vpack.c.b16 %v6301, %v6301
      %v6414 = vpack.c.b16 %v6302, %v6302
      %v6415 = vpack.c.b16 %v6303, %v6303
      %v6416 = vpack.c.b16 %v6304, %v6304
      %v6417 = vpack.c.b16 %v6305, %v6305
      %v6418 = vpack.c.b16 %v6306, %v6306
      %v6419 = vpack.c.b16 %v6307, %v6307
      %v6420 = vpack.c.b16 %v6308, %v6308
      %v6421 = vpack.c.b16 %v6309, %v6309
      %v6422 = vpack.c.b16 %v6310, %v6310
      %v6423 = vpack.c.b16 %v6311, %v6311
      %v6424 = vpack.c.b16 %v6312, %v6312
      %v6425 = vpack.c.b16 %v6313, %v6313
      %v6426 = vpack.c.b16 %v6314, %v6314
      %v6427 = vpack.c.b16 %v6315, %v6315
      %v6428 = vpack.c.b16 %v6316, %v6316
      %v6429 = vpack.c.b16 %v6317, %v6317
      %v6430 = vpack.c.b16 %v6318, %v6318
      %v6431 = vpack.c.b16 %v6319, %v6319
      %v6432 = vpack.c.b16 %v6320, %v6320
      %v6433 = vpack.c.b16 %v6321, %v6321
      %v6434 = vpack.c.b16 %v6322, %v6322
      %v6435 = vpack.c.b16 %v6323, %v6323
      %v6436 = vpack.c.b16 %v6324, %v6324
      %v6437 = vpack.c.b16 %v6325, %v6325
      %v6438 = vpack.c.b16 %v6326, %v6326
      %v6439 = vpack.c.b16 %v6327, %v6327
      %v6440 = vpack.c.b16 %v6328, %v6328
      %v6441 = vpack.c.b16 %v6329, %v6329
      %v6442 = vpack.c.b16 %v6330, %v6330
      %v6443 = vpack.c.b16 %v6331, %v6331
      %v6444 = vpack.c.b16 %v6332, %v6332
      %v6445 = vpack.c.b16 %v6333, %v6333
      %v6446 = vpack.c.b16 %v6334, %v6334
      %v6447 = vpack.c.b16 %v6335, %v6335
      %v6448 = vpack.c.b16 %v6336, %v6336
      %v6449 = vpack.c.b16 %v6337, %v6337
      %v6450 = vpack.c.b16 %v6338, %v6338
      %v6451 = vpack.c.b16 %v6339, %v6339
      %v6452 = vpack.c.b16 %v6340, %v6340
      %v6453 = vpack.c.b16 %v6341, %v6341
      %v6454 = vpack.c.b16 %v6342, %v6342
      %v6455 = vpack.c.b16 %v6343, %v6343
      %v6456 = vpack.c.b16 %v6344, %v6344
      %v6457 = vpack.c.b16 %v6345, %v6345
      %v6458 = vpack.c.b16 %v6346, %v6346
      %v6459 = vpack.c.b16 %v6347, %v6347
      %v6460 = vpack.c.b16 %v6348, %v6348
      %v6461 = vpack.c.b16 %v6349, %v6349
      %v6462 = vpack.c.b16 %v6350, %v6350
      %v6463 = vpack.c.b16 %v6351, %v6351
      %v6464 = vpack.c.b16 %v6352, %v6352
      %v6465 = vpack.c.b16 %v6353, %v6353
      %v6466 = vpack.c.b16 %v6354, %v6354
      %v6467 = vpack.c.b16 %v6355, %v6355
      %v6468 = vpack.c.b16 %v6356, %v6356
      %v6469 = vpack.c.b16 %v6357, %v6357
      %v6470 = vpack.c.b16 %v6358, %v6358
      %v6471 = vpack.c.b16 %v6359, %v6359
      %v6472 = vpack.c.b16 %v6360, %v6360
      %v6473 = vpack.c.b16 %v6361, %v6361
      %v6474 = vpack.c.b16 %v6362, %v6362
      %v6475 = vpack.c.b16 %v6363, %v6363
      %v6476 = vpack.c.b16 %v6364, %v6364
      %v6477 = vpack.c.b16 %v6365, %v6365
      %v6478 = vpack.c.b16 %v6366, %v6366
      %v6479 = vpack.c.b16 %v6367, %v6367
      %v6480 = vpack.c.b16 %v6368, %v6368
      %v6481 = vpack.c.b16 %v6369, %v6369
      %vm6594 = vcmask 519168
      %6595 = vst.msk [vmem:[%s197] sm:$0xf] %vm6594, %v6370
      %6596 = vst.msk [vmem:[%s197 + $0x4] sm:$0xf] %vm6594, %v6371
      %6597 = vst.msk [vmem:[%s197 + $0x8] sm:$0xf] %vm6594, %v6372
      %6598 = vst.msk [vmem:[%s197 + $0xc] sm:$0xf] %vm6594, %v6373
      %6599 = vst.msk [vmem:[%s197 + $0x10] sm:$0xf] %vm6594, %v6374
      %6600 = vst.msk [vmem:[%s197 + $0x14] sm:$0xf] %vm6594, %v6375
      %6601 = vst.msk [vmem:[%s197 + $0x18] sm:$0xf] %vm6594, %v6376
      %6602 = vst.msk [vmem:[%s197 + $0x1c] sm:$0xf] %vm6594, %v6377
      %6603 = vst.msk [vmem:[%s197 + $0x20] sm:$0xf] %vm6594, %v6378
      %6604 = vst.msk [vmem:[%s197 + $0x24] sm:$0xf] %vm6594, %v6379
      %6605 = vst.msk [vmem:[%s197 + $0x28] sm:$0xf] %vm6594, %v6380
      %6606 = vst.msk [vmem:[%s197 + $0x2c] sm:$0xf] %vm6594, %v6381
      %6607 = vst.msk [vmem:[%s197 + $0x30] sm:$0xf] %vm6594, %v6382
      %6608 = vst.msk [vmem:[%s197 + $0x34] sm:$0xf] %vm6594, %v6383
      %6609 = vst.msk [vmem:[%s197 + $0x38] sm:$0xf] %vm6594, %v6384
      %6610 = vst.msk [vmem:[%s197 + $0x3c] sm:$0xf] %vm6594, %v6385
      %6611 = vst.msk [vmem:[%s197 + $0x40] sm:$0xf] %vm6594, %v6386
      %6612 = vst.msk [vmem:[%s197 + $0x44] sm:$0xf] %vm6594, %v6387
      %6613 = vst.msk [vmem:[%s197 + $0x48] sm:$0xf] %vm6594, %v6388
      %6614 = vst.msk [vmem:[%s197 + $0x4c] sm:$0xf] %vm6594, %v6389
      %6615 = vst.msk [vmem:[%s197 + $0x50] sm:$0xf] %vm6594, %v6390
      %6616 = vst.msk [vmem:[%s197 + $0x54] sm:$0xf] %vm6594, %v6391
      %6617 = vst.msk [vmem:[%s197 + $0x58] sm:$0xf] %vm6594, %v6392
      %6618 = vst.msk [vmem:[%s197 + $0x5c] sm:$0xf] %vm6594, %v6393
      %6619 = vst.msk [vmem:[%s197 + $0x60] sm:$0xf] %vm6594, %v6394
      %6620 = vst.msk [vmem:[%s197 + $0x64] sm:$0xf] %vm6594, %v6395
      %6621 = vst.msk [vmem:[%s197 + $0x68] sm:$0xf] %vm6594, %v6396
      %6622 = vst.msk [vmem:[%s197 + $0x6c] sm:$0xf] %vm6594, %v6397
      %6623 = vst.msk [vmem:[%s197 + $0x70] sm:$0xf] %vm6594, %v6398
      %6624 = vst.msk [vmem:[%s197 + $0x74] sm:$0xf] %vm6594, %v6399
      %6625 = vst.msk [vmem:[%s197 + $0x78] sm:$0xf] %vm6594, %v6400
      %6626 = vst.msk [vmem:[%s197 + $0x7c] sm:$0xf] %vm6594, %v6401
      %6627 = vst.msk [vmem:[%s197 + $0x80] sm:$0xf] %vm6594, %v6402
      %6628 = vst.msk [vmem:[%s197 + $0x84] sm:$0xf] %vm6594, %v6403
      %6629 = vst.msk [vmem:[%s197 + $0x88] sm:$0xf] %vm6594, %v6404
      %6630 = vst.msk [vmem:[%s197 + $0x8c] sm:$0xf] %vm6594, %v6405
      %6631 = vst.msk [vmem:[%s197 + $0x90] sm:$0xf] %vm6594, %v6406
      %6632 = vst.msk [vmem:[%s197 + $0x94] sm:$0xf] %vm6594, %v6407
      %6633 = vst.msk [vmem:[%s197 + $0x98] sm:$0xf] %vm6594, %v6408
      %6634 = vst.msk [vmem:[%s197 + $0x9c] sm:$0xf] %vm6594, %v6409
      %6635 = vst.msk [vmem:[%s197 + $0xa0] sm:$0xf] %vm6594, %v6410
      %6636 = vst.msk [vmem:[%s197 + $0xa4] sm:$0xf] %vm6594, %v6411
      %6637 = vst.msk [vmem:[%s197 + $0xa8] sm:$0xf] %vm6594, %v6412
      %6638 = vst.msk [vmem:[%s197 + $0xac] sm:$0xf] %vm6594, %v6413
      %6639 = vst.msk [vmem:[%s197 + $0xb0] sm:$0xf] %vm6594, %v6414
      %6640 = vst.msk [vmem:[%s197 + $0xb4] sm:$0xf] %vm6594, %v6415
      %6641 = vst.msk [vmem:[%s197 + $0xb8] sm:$0xf] %vm6594, %v6416
      %6642 = vst.msk [vmem:[%s197 + $0xbc] sm:$0xf] %vm6594, %v6417
      %6643 = vst.msk [vmem:[%s197 + $0xc0] sm:$0xf] %vm6594, %v6418
      %6644 = vst.msk [vmem:[%s197 + $0xc4] sm:$0xf] %vm6594, %v6419
      %6645 = vst.msk [vmem:[%s197 + $0xc8] sm:$0xf] %vm6594, %v6420
      %6646 = vst.msk [vmem:[%s197 + $0xcc] sm:$0xf] %vm6594, %v6421
      %6647 = vst.msk [vmem:[%s197 + $0xd0] sm:$0xf] %vm6594, %v6422
      %6648 = vst.msk [vmem:[%s197 + $0xd4] sm:$0xf] %vm6594, %v6423
      %6649 = vst.msk [vmem:[%s197 + $0xd8] sm:$0xf] %vm6594, %v6424
      %6650 = vst.msk [vmem:[%s197 + $0xdc] sm:$0xf] %vm6594, %v6425
      %6651 = vst.msk [vmem:[%s197 + $0xe0] sm:$0xf] %vm6594, %v6426
      %6652 = vst.msk [vmem:[%s197 + $0xe4] sm:$0xf] %vm6594, %v6427
      %6653 = vst.msk [vmem:[%s197 + $0xe8] sm:$0xf] %vm6594, %v6428
      %6654 = vst.msk [vmem:[%s197 + $0xec] sm:$0xf] %vm6594, %v6429
      %6655 = vst.msk [vmem:[%s197 + $0xf0] sm:$0xf] %vm6594, %v6430
      %6656 = vst.msk [vmem:[%s197 + $0xf4] sm:$0xf] %vm6594, %v6431
      %6657 = vst.msk [vmem:[%s197 + $0xf8] sm:$0xf] %vm6594, %v6432
      %6658 = vst.msk [vmem:[%s197 + $0xfc] sm:$0xf] %vm6594, %v6433
      %6659 = vst.msk [vmem:[%s197 + $0x100] sm:$0xf] %vm6594, %v6434
      %6660 = vst.msk [vmem:[%s197 + $0x104] sm:$0xf] %vm6594, %v6435
      %6661 = vst.msk [vmem:[%s197 + $0x108] sm:$0xf] %vm6594, %v6436
      %6662 = vst.msk [vmem:[%s197 + $0x10c] sm:$0xf] %vm6594, %v6437
      %6663 = vst.msk [vmem:[%s197 + $0x110] sm:$0xf] %vm6594, %v6438
      %6664 = vst.msk [vmem:[%s197 + $0x114] sm:$0xf] %vm6594, %v6439
      %6665 = vst.msk [vmem:[%s197 + $0x118] sm:$0xf] %vm6594, %v6440
      %6666 = vst.msk [vmem:[%s197 + $0x11c] sm:$0xf] %vm6594, %v6441
      %6667 = vst.msk [vmem:[%s197 + $0x120] sm:$0xf] %vm6594, %v6442
      %6668 = vst.msk [vmem:[%s197 + $0x124] sm:$0xf] %vm6594, %v6443
      %6669 = vst.msk [vmem:[%s197 + $0x128] sm:$0xf] %vm6594, %v6444
      %6670 = vst.msk [vmem:[%s197 + $0x12c] sm:$0xf] %vm6594, %v6445
      %6671 = vst.msk [vmem:[%s197 + $0x130] sm:$0xf] %vm6594, %v6446
      %6672 = vst.msk [vmem:[%s197 + $0x134] sm:$0xf] %vm6594, %v6447
      %6673 = vst.msk [vmem:[%s197 + $0x138] sm:$0xf] %vm6594, %v6448
      %6674 = vst.msk [vmem:[%s197 + $0x13c] sm:$0xf] %vm6594, %v6449
      %6675 = vst.msk [vmem:[%s197 + $0x140] sm:$0xf] %vm6594, %v6450
      %6676 = vst.msk [vmem:[%s197 + $0x144] sm:$0xf] %vm6594, %v6451
      %6677 = vst.msk [vmem:[%s197 + $0x148] sm:$0xf] %vm6594, %v6452
      %6678 = vst.msk [vmem:[%s197 + $0x14c] sm:$0xf] %vm6594, %v6453
      %6679 = vst.msk [vmem:[%s197 + $0x150] sm:$0xf] %vm6594, %v6454
      %6680 = vst.msk [vmem:[%s197 + $0x154] sm:$0xf] %vm6594, %v6455
      %6681 = vst.msk [vmem:[%s197 + $0x158] sm:$0xf] %vm6594, %v6456
      %6682 = vst.msk [vmem:[%s197 + $0x15c] sm:$0xf] %vm6594, %v6457
      %6683 = vst.msk [vmem:[%s197 + $0x160] sm:$0xf] %vm6594, %v6458
      %6684 = vst.msk [vmem:[%s197 + $0x164] sm:$0xf] %vm6594, %v6459
      %6685 = vst.msk [vmem:[%s197 + $0x168] sm:$0xf] %vm6594, %v6460
      %6686 = vst.msk [vmem:[%s197 + $0x16c] sm:$0xf] %vm6594, %v6461
      %6687 = vst.msk [vmem:[%s197 + $0x170] sm:$0xf] %vm6594, %v6462
      %6688 = vst.msk [vmem:[%s197 + $0x174] sm:$0xf] %vm6594, %v6463
      %6689 = vst.msk [vmem:[%s197 + $0x178] sm:$0xf] %vm6594, %v6464
      %6690 = vst.msk [vmem:[%s197 + $0x17c] sm:$0xf] %vm6594, %v6465
      %6691 = vst.msk [vmem:[%s197 + $0x180] sm:$0xf] %vm6594, %v6466
      %6692 = vst.msk [vmem:[%s197 + $0x184] sm:$0xf] %vm6594, %v6467
      %6693 = vst.msk [vmem:[%s197 + $0x188] sm:$0xf] %vm6594, %v6468
      %6694 = vst.msk [vmem:[%s197 + $0x18c] sm:$0xf] %vm6594, %v6469
      %6695 = vst.msk [vmem:[%s197 + $0x190] sm:$0xf] %vm6594, %v6470
      %6696 = vst.msk [vmem:[%s197 + $0x194] sm:$0xf] %vm6594, %v6471
      %6697 = vst.msk [vmem:[%s197 + $0x198] sm:$0xf] %vm6594, %v6472
      %6698 = vst.msk [vmem:[%s197 + $0x19c] sm:$0xf] %vm6594, %v6473
      %6699 = vst.msk [vmem:[%s197 + $0x1a0] sm:$0xf] %vm6594, %v6474
      %6700 = vst.msk [vmem:[%s197 + $0x1a4] sm:$0xf] %vm6594, %v6475
      %6701 = vst.msk [vmem:[%s197 + $0x1a8] sm:$0xf] %vm6594, %v6476
      %6702 = vst.msk [vmem:[%s197 + $0x1ac] sm:$0xf] %vm6594, %v6477
      %6703 = vst.msk [vmem:[%s197 + $0x1b0] sm:$0xf] %vm6594, %v6478
      %6704 = vst.msk [vmem:[%s197 + $0x1b4] sm:$0xf] %vm6594, %v6479
      %6705 = vst.msk [vmem:[%s197 + $0x1b8] sm:$0xf] %vm6594, %v6480
      %vm6706 = vcmask 517120
      %6707 = vst.msk [vmem:[%s197 + $0x1bc] sm:$0x3] %vm6706, %v6481
      %p6708 = scmp.lt.s32.totalorder %s15, 1
      %s6709 = scalar_select %p6708, %s15, 1
      %s6710 = smul.addr %s6709, 112
      %s6711 = smul.addr %s6710, 4
      %s6712 = scalar_lea.vmem %s4, %s6711
      // Predicated region
      $region44: #{tpu_custom_call.1} parent=35 // pred_check
        %p6713 = pneg %p122
      $region45: #{tpu_custom_call.1} parent=35 // pred_check_branch
        %6715 = sbr.rel (%p6713) target = $region47
      $region46: #{tpu_custom_call.1} parent=35 // pred_region
        _
      $region47: #{tpu_custom_call.1} parent=35 // pred_fallthru
        _
    $region36: #{tpu_custom_call.1} parent=5 // pred_fallthru
      _
    %p6716 = scmp.le.s32.totalorder 2, %s10
    // Predicated region
    $region48: #{tpu_custom_call.1} parent=5 // pred_check
      %p6717 = pneg %p6716
    $region49: #{tpu_custom_call.1} parent=5 // pred_check_branch
      %6719 = sbr.rel (%p6717) target = $region51
    $region50: #{tpu_custom_call.1} parent=5 // pred_region
      %s6720 = ssub.s32 %s10, 2
      // Predicated region
      $region52: #{tpu_custom_call.1} parent=50 // pred_check
        %p6721 = pneg %p128
      $region53: #{tpu_custom_call.1} parent=50 // pred_check_branch
        %6723 = sbr.rel (%p6721) target = $region55
      $region54: #{tpu_custom_call.1} parent=50 // pred_region
        %p6724 = scmp.lt.s32.totalorder %s16, 1
        %s6725 = scalar_select %p6724, %s16, 1
        %s6726 = smul.addr %s6725, 112
        %s6727 = smul.addr %s6726, 4
        %s6728 = scalar_lea.vmem %s4, %s6727
      $region55: #{tpu_custom_call.1} parent=50 // pred_fallthru
        _
    $region51: #{tpu_custom_call.1} parent=5 // pred_fallthru
      _
  $region6: #{tpu_custom_call.1} parent=0 // loop_footer
    %s14 = sadd.s32 1, %s10
  $region7: #{tpu_custom_call.1} parent=0 // loop_footer_branch
    %9 = sbr.rel target = $region3
  $region8: #{tpu_custom_call.1} parent=0 // loop_exit
    _

</llo_original>
